<compile_context>
chip_gen: v6e
topology: v6e:2x2x1
jax: 0.10.0
libtpu: 0.0.40
codegen_flags: <defaults>
</compile_context>

<pallas_src>
import jax
import jax.numpy as jnp
from jax import lax
from jax.experimental import pallas as pl
from jax.experimental.pallas import tpu as pltpu


# ----------------------- fused GNN + pool + FC kernel ------------------------
def fused_gnn_fc_kernel(a_pl_ref, a_ll_ref, x_p_ref, x_l_ref,
                        w_pl_ref, w_ll_ref, b_pl_ref, b_ll_ref,
                        w_fc_ref, b_fc_ref, o_ref):
    # a_*_ref : [G, Ndst, Nsrc]   with G = C * B graphs (channel-major)
    # x_*_ref : [G, Nsrc, F]
    # w_*_ref : [C, F, H], b_*_ref : [C, 1, H]
    # w_fc_ref: [C, H, O], b_fc_ref: [1, O],  o_ref: [B, O]
    G, Nl, _ = a_pl_ref.shape
    C = w_pl_ref.shape[0]
    B = G // C
    inv_nl = 1.0 / Nl

    def pooled_messages(adj, x_src):
        # mean over dst nodes of  D_dst^-1/2 A D_src^-1/2 X   -> [G, F]
        deg_src = jnp.maximum(jnp.sum(adj, axis=1), 1.0)              # [G, Nsrc]
        deg_dst = jnp.maximum(jnp.sum(adj, axis=2), 1.0)              # [G, Ndst]
        xs = x_src * lax.rsqrt(deg_src)[:, :, None]                   # [G, Nsrc, F]
        coef = jnp.sum(adj * lax.rsqrt(deg_dst)[:, :, None],
                       axis=1) * inv_nl                               # [G, Nsrc]
        return jnp.sum(coef[:, :, None] * xs, axis=1)                 # [G, F]

    m_pl = pooled_messages(a_pl_ref[...], x_p_ref[...])   # protein -> ligand
    m_ll = pooled_messages(a_ll_ref[...], x_l_ref[...])   # ligand  -> ligand

    # Fused classifier head.  Mean pool commutes with X @ W and the bias, so
    #   pooled_c = m_pl_c @ W_pl_c + m_ll_c @ W_ll_c + b_pl_c + b_ll_c
    #   out      = sigmoid( sum_c pooled_c @ W_fc[c] + b_fc )
    O = o_ref.shape[-1]
    acc = jnp.zeros((B, O), dtype=jnp.float32)
    for c in range(C):                         # static, fully unrolled (C == 8)
        pooled_c = (
            jnp.dot(m_pl[c * B:(c + 1) * B, :], w_pl_ref[c],
                    preferred_element_type=jnp.float32)
            + jnp.dot(m_ll[c * B:(c + 1) * B, :], w_ll_ref[c],
                      preferred_element_type=jnp.float32)
            + b_pl_ref[c] + b_ll_ref[c])                              # [B, H]
        acc = acc + jnp.dot(pooled_c, w_fc_ref[c],
                            preferred_element_type=jnp.float32)       # [B, O]

    y = acc + b_fc_ref[...]
    # sigmoid = 1 / (1 + exp(-y)); exp + approx reciprocal both run on the EUP
    o_ref[...] = pl.reciprocal(1.0 + jnp.exp(-y), approx=True)


# --------------------------------- wrapper -----------------------------------
def hetero_graph_classifier(a_pl, a_ll, x_p, x_l, params):
    C, B, Nl, Np = a_pl.shape
    Fdim = x_l.shape[-1]
    H = params['w_pl'].shape[-1]
    O = params['w_fc'].shape[-1]
    G = C * B

    # Free leading-dim reshapes (no data movement under jit): merge
    # (channel, graph) -> one graph axis; view fc weight per channel block.
    a_pl_g = a_pl.reshape(G, Nl, Np)
    a_ll_g = a_ll.reshape(G, Nl, Nl)
    x_p_g = x_p.reshape(G, Np, Fdim)
    x_l_g = x_l.reshape(G, Nl, Fdim)
    w_fc_c = params['w_fc'].reshape(C, H, O)

    vmem = pl.BlockSpec(memory_space=pltpu.MemorySpace.VMEM)
    return pl.pallas_call(
        fused_gnn_fc_kernel,
        out_shape=jax.ShapeDtypeStruct((B, O), jnp.float32),
        in_specs=[vmem] * 10,
        out_specs=vmem,
    )(a_pl_g, a_ll_g, x_p_g, x_l_g,
      params['w_pl'], params['w_ll'], params['b_pl'], params['b_ll'],
      w_fc_c, params['b_fc'])


# ------------------------- pure-JAX reference (check) -------------------------
def reference_forward(a_pl, a_ll, x_p, x_l, params):
    C, B, Nl, Np = a_pl.shape
    H = params['w_pl'].shape[-1]

    def graph_conv(adj, x_src, w, b):
        deg_src = jnp.maximum(jnp.sum(adj, axis=2), 1.0)              # [C,B,Nsrc]
        deg_dst = jnp.maximum(jnp.sum(adj, axis=3), 1.0)              # [C,B,Ndst]
        xs = x_src * lax.rsqrt(deg_src)[..., None]
        msg = jnp.einsum('cbds,cbsf->cbdf', adj, xs)
        msg = msg * lax.rsqrt(deg_dst)[..., None]
        return jnp.einsum('cbdf,cfh->cbdh', msg, w) + b[:, None, :, :]

    h_lig = (graph_conv(a_pl, x_p, params['w_pl'], params['b_pl'])
             + graph_conv(a_ll, x_l, params['w_ll'], params['b_ll']))  # [C,B,Nl,H]
    pooled = jnp.mean(h_lig, axis=2)                                   # [C,B,H]
    combined = jnp.transpose(pooled, (1, 0, 2)).reshape(B, C * H)
    return jax.nn.sigmoid(combined @ params['w_fc'] + params['b_fc'])


# ----------------------------------- main -------------------------------------
if __name__ == "__main__":
    C = 8          # number of hetero-graph channels (len(gnn_layers))
    B = 2          # graphs per batch
    Nl = 8         # ligand nodes per graph
    Np = 16        # protein nodes per graph
    F = 16         # in_feats
    H = 32         # hidden_size
    O = 2          # out_feats

    key = jax.random.PRNGKey(0)
    ks = jax.random.split(key, 10)

    # synthetic graph data (dense binary adjacencies stand in for DGL graphs)
    x_l = jax.random.normal(ks[0], (C, B, Nl, F), jnp.float32)
    x_p = jax.random.normal(ks[1], (C, B, Np, F), jnp.float32)
    a_pl = jax.random.bernoulli(ks[2], 0.3, (C, B, Nl, Np)).astype(jnp.float32)
    a_ll = jax.random.bernoulli(ks[3], 0.3, (C, B, Nl, Nl)).astype(jnp.float32)

    params = {
        'w_pl': 0.1 * jax.random.normal(ks[4], (C, F, H), jnp.float32),
        'w_ll': 0.1 * jax.random.normal(ks[5], (C, F, H), jnp.float32),
        'b_pl': 0.1 * jax.random.normal(ks[6], (C, 1, H), jnp.float32),
        'b_ll': 0.1 * jax.random.normal(ks[7], (C, 1, H), jnp.float32),
        'w_fc': 0.1 * jax.random.normal(ks[8], (C * H, O), jnp.float32),
        'b_fc': 0.1 * jax.random.normal(ks[9], (1, O), jnp.float32),
    }

    out = jax.jit(hetero_graph_classifier)(a_pl, a_ll, x_p, x_l, params)
    jax.block_until_ready(out)
    assert out.shape == (B, O)

    ref = reference_forward(a_pl, a_ll, x_p, x_l, params)
    assert bool(jnp.allclose(out, ref, atol=1e-2, rtol=1e-2)), "mismatch vs reference"

    print("KERNEL_OK")
</pallas_src>

<mosaic_0001>
module attributes {stable_mosaic.version = 11 : i64} {
  func.func @fused_gnn_fc_kernel(%arg0: memref<16x8x16xf32, #tpu.memory_space<vmem>>, %arg1: memref<16x8x8xf32, #tpu.memory_space<vmem>>, %arg2: memref<16x16x16xf32, #tpu.memory_space<vmem>>, %arg3: memref<16x8x16xf32, #tpu.memory_space<vmem>>, %arg4: memref<8x16x32xf32, #tpu.memory_space<vmem>>, %arg5: memref<8x16x32xf32, #tpu.memory_space<vmem>>, %arg6: memref<8x1x32xf32, #tpu.memory_space<vmem>>, %arg7: memref<8x1x32xf32, #tpu.memory_space<vmem>>, %arg8: memref<8x32x2xf32, #tpu.memory_space<vmem>>, %arg9: memref<1x2xf32, #tpu.memory_space<vmem>>, %arg10: memref<2x2xf32, #tpu.memory_space<vmem>>) attributes {dimension_semantics = [], scalar_prefetch = 0 : i64, scratch_operands = 0 : i64, tpu.core_type = #tpu.core_type<tc>} {
    %c0 = arith.constant 0 : index
    %c0_0 = arith.constant 0 : index
    %c0_1 = arith.constant 0 : index
    %0 = vector.load %arg0[%c0, %c0_0, %c0_1] : memref<16x8x16xf32, #tpu.memory_space<vmem>>, vector<16x8x16xf32>
    %c0_2 = arith.constant 0 : index
    %c0_3 = arith.constant 0 : index
    %c0_4 = arith.constant 0 : index
    %1 = vector.load %arg2[%c0_2, %c0_3, %c0_4] : memref<16x16x16xf32, #tpu.memory_space<vmem>>, vector<16x16x16xf32>
    %cst = arith.constant dense<0.000000e+00> : vector<16x16xf32>
    %2 = vector.multi_reduction <add>, %0, %cst [1] : vector<16x8x16xf32> to vector<16x16xf32>
    %cst_5 = arith.constant 1.000000e+00 : f32
    %3 = vector.broadcast %cst_5 : f32 to vector<16x16xf32>
    %4 = arith.maximumf %2, %3 : vector<16x16xf32>
    %cst_6 = arith.constant dense<0.000000e+00> : vector<16x8xf32>
    %5 = vector.multi_reduction <add>, %0, %cst_6 [2] : vector<16x8x16xf32> to vector<16x8xf32>
    %cst_7 = arith.constant 1.000000e+00 : f32
    %6 = vector.broadcast %cst_7 : f32 to vector<16x8xf32>
    %7 = arith.maximumf %5, %6 : vector<16x8xf32>
    %8 = math.rsqrt %4 : vector<16x16xf32>
    %9 = vector.shape_cast %8 : vector<16x16xf32> to vector<16x16x1xf32>
    %10 = vector.broadcast %9 : vector<16x16x1xf32> to vector<16x16x16xf32>
    %11 = arith.mulf %1, %10 : vector<16x16x16xf32>
    %12 = math.rsqrt %7 : vector<16x8xf32>
    %13 = vector.shape_cast %12 : vector<16x8xf32> to vector<16x8x1xf32>
    %14 = vector.broadcast %13 : vector<16x8x1xf32> to vector<16x8x16xf32>
    %15 = arith.mulf %0, %14 : vector<16x8x16xf32>
    %cst_8 = arith.constant dense<0.000000e+00> : vector<16x16xf32>
    %16 = vector.multi_reduction <add>, %15, %cst_8 [1] : vector<16x8x16xf32> to vector<16x16xf32>
    %cst_9 = arith.constant 1.250000e-01 : f32
    %17 = vector.broadcast %cst_9 : f32 to vector<16x16xf32>
    %18 = arith.mulf %16, %17 : vector<16x16xf32>
    %19 = vector.shape_cast %18 : vector<16x16xf32> to vector<16x16x1xf32>
    %20 = vector.broadcast %19 : vector<16x16x1xf32> to vector<16x16x16xf32>
    %21 = arith.mulf %20, %11 : vector<16x16x16xf32>
    %cst_10 = arith.constant dense<0.000000e+00> : vector<16x16xf32>
    %22 = vector.multi_reduction <add>, %21, %cst_10 [1] : vector<16x16x16xf32> to vector<16x16xf32>
    %c0_11 = arith.constant 0 : index
    %c0_12 = arith.constant 0 : index
    %c0_13 = arith.constant 0 : index
    %23 = vector.load %arg1[%c0_11, %c0_12, %c0_13] : memref<16x8x8xf32, #tpu.memory_space<vmem>>, vector<16x8x8xf32>
    %c0_14 = arith.constant 0 : index
    %c0_15 = arith.constant 0 : index
    %c0_16 = arith.constant 0 : index
    %24 = vector.load %arg3[%c0_14, %c0_15, %c0_16] : memref<16x8x16xf32, #tpu.memory_space<vmem>>, vector<16x8x16xf32>
    %cst_17 = arith.constant dense<0.000000e+00> : vector<16x8xf32>
    %25 = vector.multi_reduction <add>, %23, %cst_17 [1] : vector<16x8x8xf32> to vector<16x8xf32>
    %cst_18 = arith.constant 1.000000e+00 : f32
    %26 = vector.broadcast %cst_18 : f32 to vector<16x8xf32>
    %27 = arith.maximumf %25, %26 : vector<16x8xf32>
    %cst_19 = arith.constant dense<0.000000e+00> : vector<16x8xf32>
    %28 = vector.multi_reduction <add>, %23, %cst_19 [2] : vector<16x8x8xf32> to vector<16x8xf32>
    %cst_20 = arith.constant 1.000000e+00 : f32
    %29 = vector.broadcast %cst_20 : f32 to vector<16x8xf32>
    %30 = arith.maximumf %28, %29 : vector<16x8xf32>
    %31 = math.rsqrt %27 : vector<16x8xf32>
    %32 = vector.shape_cast %31 : vector<16x8xf32> to vector<16x8x1xf32>
    %33 = vector.broadcast %32 : vector<16x8x1xf32> to vector<16x8x16xf32>
    %34 = arith.mulf %24, %33 : vector<16x8x16xf32>
    %35 = math.rsqrt %30 : vector<16x8xf32>
    %36 = vector.shape_cast %35 : vector<16x8xf32> to vector<16x8x1xf32>
    %37 = vector.broadcast %36 : vector<16x8x1xf32> to vector<16x8x8xf32>
    %38 = arith.mulf %23, %37 : vector<16x8x8xf32>
    %cst_21 = arith.constant dense<0.000000e+00> : vector<16x8xf32>
    %39 = vector.multi_reduction <add>, %38, %cst_21 [1] : vector<16x8x8xf32> to vector<16x8xf32>
    %cst_22 = arith.constant 1.250000e-01 : f32
    %40 = vector.broadcast %cst_22 : f32 to vector<16x8xf32>
    %41 = arith.mulf %39, %40 : vector<16x8xf32>
    %42 = vector.shape_cast %41 : vector<16x8xf32> to vector<16x8x1xf32>
    %43 = vector.broadcast %42 : vector<16x8x1xf32> to vector<16x8x16xf32>
    %44 = arith.mulf %43, %34 : vector<16x8x16xf32>
    %cst_23 = arith.constant dense<0.000000e+00> : vector<16x16xf32>
    %45 = vector.multi_reduction <add>, %44, %cst_23 [1] : vector<16x8x16xf32> to vector<16x16xf32>
    %cst_24 = arith.constant 0.000000e+00 : f32
    %46 = vector.broadcast %cst_24 : f32 to vector<2x2xf32>
    %47 = vector.extract_strided_slice %22 {offsets = [0, 0], sizes = [2, 16], strides = [1, 1]} : vector<16x16xf32> to vector<2x16xf32>
    %c0_25 = arith.constant 0 : index
    %c0_26 = arith.constant 0 : index
    %c0_27 = arith.constant 0 : index
    %48 = vector.load %arg4[%c0_25, %c0_26, %c0_27] : memref<8x16x32xf32, #tpu.memory_space<vmem>>, vector<1x16x32xf32>
    %49 = vector.shape_cast %48 : vector<1x16x32xf32> to vector<16x32xf32>
    %cst_28 = arith.constant dense<0.000000e+00> : vector<2x32xf32>
    %50 = tpu.matmul %47, %49, %cst_28 {dimension_numbers = #tpu.dot_dimension_numbers<[1], [0], [0], [1], [0, 0, 1, 1], [], []>} : vector<2x16xf32>, vector<16x32xf32>, vector<2x32xf32> -> vector<2x32xf32>
    %51 = vector.extract_strided_slice %45 {offsets = [0, 0], sizes = [2, 16], strides = [1, 1]} : vector<16x16xf32> to vector<2x16xf32>
    %c0_29 = arith.constant 0 : index
    %c0_30 = arith.constant 0 : index
    %c0_31 = arith.constant 0 : index
    %52 = vector.load %arg5[%c0_29, %c0_30, %c0_31] : memref<8x16x32xf32, #tpu.memory_space<vmem>>, vector<1x16x32xf32>
    %53 = vector.shape_cast %52 : vector<1x16x32xf32> to vector<16x32xf32>
    %cst_32 = arith.constant dense<0.000000e+00> : vector<2x32xf32>
    %54 = tpu.matmul %51, %53, %cst_32 {dimension_numbers = #tpu.dot_dimension_numbers<[1], [0], [0], [1], [0, 0, 1, 1], [], []>} : vector<2x16xf32>, vector<16x32xf32>, vector<2x32xf32> -> vector<2x32xf32>
    %55 = arith.addf %50, %54 : vector<2x32xf32>
    %c0_33 = arith.constant 0 : index
    %c0_34 = arith.constant 0 : index
    %c0_35 = arith.constant 0 : index
    %56 = vector.load %arg6[%c0_33, %c0_34, %c0_35] : memref<8x1x32xf32, #tpu.memory_space<vmem>>, vector<1x1x32xf32>
    %57 = vector.shape_cast %56 : vector<1x1x32xf32> to vector<1x32xf32>
    %58 = vector.broadcast %57 : vector<1x32xf32> to vector<2x32xf32>
    %59 = arith.addf %55, %58 : vector<2x32xf32>
    %c0_36 = arith.constant 0 : index
    %c0_37 = arith.constant 0 : index
    %c0_38 = arith.constant 0 : index
    %60 = vector.load %arg7[%c0_36, %c0_37, %c0_38] : memref<8x1x32xf32, #tpu.memory_space<vmem>>, vector<1x1x32xf32>
    %61 = vector.shape_cast %60 : vector<1x1x32xf32> to vector<1x32xf32>
    %62 = vector.broadcast %61 : vector<1x32xf32> to vector<2x32xf32>
    %63 = arith.addf %59, %62 : vector<2x32xf32>
    %c0_39 = arith.constant 0 : index
    %c0_40 = arith.constant 0 : index
    %c0_41 = arith.constant 0 : index
    %64 = vector.load %arg8[%c0_39, %c0_40, %c0_41] : memref<8x32x2xf32, #tpu.memory_space<vmem>>, vector<1x32x2xf32>
    %65 = vector.shape_cast %64 : vector<1x32x2xf32> to vector<32x2xf32>
    %cst_42 = arith.constant dense<0.000000e+00> : vector<2x2xf32>
    %66 = tpu.matmul %63, %65, %cst_42 {dimension_numbers = #tpu.dot_dimension_numbers<[1], [0], [0], [1], [0, 0, 1, 1], [], []>} : vector<2x32xf32>, vector<32x2xf32>, vector<2x2xf32> -> vector<2x2xf32>
    %67 = arith.addf %46, %66 : vector<2x2xf32>
    %68 = vector.extract_strided_slice %22 {offsets = [2, 0], sizes = [2, 16], strides = [1, 1]} : vector<16x16xf32> to vector<2x16xf32>
    %c1 = arith.constant 1 : index
    %c0_43 = arith.constant 0 : index
    %c0_44 = arith.constant 0 : index
    %69 = vector.load %arg4[%c1, %c0_43, %c0_44] : memref<8x16x32xf32, #tpu.memory_space<vmem>>, vector<1x16x32xf32>
    %70 = vector.shape_cast %69 : vector<1x16x32xf32> to vector<16x32xf32>
    %cst_45 = arith.constant dense<0.000000e+00> : vector<2x32xf32>
    %71 = tpu.matmul %68, %70, %cst_45 {dimension_numbers = #tpu.dot_dimension_numbers<[1], [0], [0], [1], [0, 0, 1, 1], [], []>} : vector<2x16xf32>, vector<16x32xf32>, vector<2x32xf32> -> vector<2x32xf32>
    %72 = vector.extract_strided_slice %45 {offsets = [2, 0], sizes = [2, 16], strides = [1, 1]} : vector<16x16xf32> to vector<2x16xf32>
    %c1_46 = arith.constant 1 : index
    %c0_47 = arith.constant 0 : index
    %c0_48 = arith.constant 0 : index
    %73 = vector.load %arg5[%c1_46, %c0_47, %c0_48] : memref<8x16x32xf32, #tpu.memory_space<vmem>>, vector<1x16x32xf32>
    %74 = vector.shape_cast %73 : vector<1x16x32xf32> to vector<16x32xf32>
    %cst_49 = arith.constant dense<0.000000e+00> : vector<2x32xf32>
    %75 = tpu.matmul %72, %74, %cst_49 {dimension_numbers = #tpu.dot_dimension_numbers<[1], [0], [0], [1], [0, 0, 1, 1], [], []>} : vector<2x16xf32>, vector<16x32xf32>, vector<2x32xf32> -> vector<2x32xf32>
    %76 = arith.addf %71, %75 : vector<2x32xf32>
    %c1_50 = arith.constant 1 : index
    %c0_51 = arith.constant 0 : index
    %c0_52 = arith.constant 0 : index
    %77 = vector.load %arg6[%c1_50, %c0_51, %c0_52] : memref<8x1x32xf32, #tpu.memory_space<vmem>>, vector<1x1x32xf32>
    %78 = vector.shape_cast %77 : vector<1x1x32xf32> to vector<1x32xf32>
    %79 = vector.broadcast %78 : vector<1x32xf32> to vector<2x32xf32>
    %80 = arith.addf %76, %79 : vector<2x32xf32>
    %c1_53 = arith.constant 1 : index
    %c0_54 = arith.constant 0 : index
    %c0_55 = arith.constant 0 : index
    %81 = vector.load %arg7[%c1_53, %c0_54, %c0_55] : memref<8x1x32xf32, #tpu.memory_space<vmem>>, vector<1x1x32xf32>
    %82 = vector.shape_cast %81 : vector<1x1x32xf32> to vector<1x32xf32>
    %83 = vector.broadcast %82 : vector<1x32xf32> to vector<2x32xf32>
    %84 = arith.addf %80, %83 : vector<2x32xf32>
    %c1_56 = arith.constant 1 : index
    %c0_57 = arith.constant 0 : index
    %c0_58 = arith.constant 0 : index
    %85 = vector.load %arg8[%c1_56, %c0_57, %c0_58] : memref<8x32x2xf32, #tpu.memory_space<vmem>>, vector<1x32x2xf32>
    %86 = vector.shape_cast %85 : vector<1x32x2xf32> to vector<32x2xf32>
    %cst_59 = arith.constant dense<0.000000e+00> : vector<2x2xf32>
    %87 = tpu.matmul %84, %86, %cst_59 {dimension_numbers = #tpu.dot_dimension_numbers<[1], [0], [0], [1], [0, 0, 1, 1], [], []>} : vector<2x32xf32>, vector<32x2xf32>, vector<2x2xf32> -> vector<2x2xf32>
    %88 = arith.addf %67, %87 : vector<2x2xf32>
    %89 = vector.extract_strided_slice %22 {offsets = [4, 0], sizes = [2, 16], strides = [1, 1]} : vector<16x16xf32> to vector<2x16xf32>
    %c2 = arith.constant 2 : index
    %c0_60 = arith.constant 0 : index
    %c0_61 = arith.constant 0 : index
    %90 = vector.load %arg4[%c2, %c0_60, %c0_61] : memref<8x16x32xf32, #tpu.memory_space<vmem>>, vector<1x16x32xf32>
    %91 = vector.shape_cast %90 : vector<1x16x32xf32> to vector<16x32xf32>
    %cst_62 = arith.constant dense<0.000000e+00> : vector<2x32xf32>
    %92 = tpu.matmul %89, %91, %cst_62 {dimension_numbers = #tpu.dot_dimension_numbers<[1], [0], [0], [1], [0, 0, 1, 1], [], []>} : vector<2x16xf32>, vector<16x32xf32>, vector<2x32xf32> -> vector<2x32xf32>
    %93 = vector.extract_strided_slice %45 {offsets = [4, 0], sizes = [2, 16], strides = [1, 1]} : vector<16x16xf32> to vector<2x16xf32>
    %c2_63 = arith.constant 2 : index
    %c0_64 = arith.constant 0 : index
    %c0_65 = arith.constant 0 : index
    %94 = vector.load %arg5[%c2_63, %c0_64, %c0_65] : memref<8x16x32xf32, #tpu.memory_space<vmem>>, vector<1x16x32xf32>
    %95 = vector.shape_cast %94 : vector<1x16x32xf32> to vector<16x32xf32>
    %cst_66 = arith.constant dense<0.000000e+00> : vector<2x32xf32>
    %96 = tpu.matmul %93, %95, %cst_66 {dimension_numbers = #tpu.dot_dimension_numbers<[1], [0], [0], [1], [0, 0, 1, 1], [], []>} : vector<2x16xf32>, vector<16x32xf32>, vector<2x32xf32> -> vector<2x32xf32>
    %97 = arith.addf %92, %96 : vector<2x32xf32>
    %c2_67 = arith.constant 2 : index
    %c0_68 = arith.constant 0 : index
    %c0_69 = arith.constant 0 : index
    %98 = vector.load %arg6[%c2_67, %c0_68, %c0_69] : memref<8x1x32xf32, #tpu.memory_space<vmem>>, vector<1x1x32xf32>
    %99 = vector.shape_cast %98 : vector<1x1x32xf32> to vector<1x32xf32>
    %100 = vector.broadcast %99 : vector<1x32xf32> to vector<2x32xf32>
    %101 = arith.addf %97, %100 : vector<2x32xf32>
    %c2_70 = arith.constant 2 : index
    %c0_71 = arith.constant 0 : index
    %c0_72 = arith.constant 0 : index
    %102 = vector.load %arg7[%c2_70, %c0_71, %c0_72] : memref<8x1x32xf32, #tpu.memory_space<vmem>>, vector<1x1x32xf32>
    %103 = vector.shape_cast %102 : vector<1x1x32xf32> to vector<1x32xf32>
    %104 = vector.broadcast %103 : vector<1x32xf32> to vector<2x32xf32>
    %105 = arith.addf %101, %104 : vector<2x32xf32>
    %c2_73 = arith.constant 2 : index
    %c0_74 = arith.constant 0 : index
    %c0_75 = arith.constant 0 : index
    %106 = vector.load %arg8[%c2_73, %c0_74, %c0_75] : memref<8x32x2xf32, #tpu.memory_space<vmem>>, vector<1x32x2xf32>
    %107 = vector.shape_cast %106 : vector<1x32x2xf32> to vector<32x2xf32>
    %cst_76 = arith.constant dense<0.000000e+00> : vector<2x2xf32>
    %108 = tpu.matmul %105, %107, %cst_76 {dimension_numbers = #tpu.dot_dimension_numbers<[1], [0], [0], [1], [0, 0, 1, 1], [], []>} : vector<2x32xf32>, vector<32x2xf32>, vector<2x2xf32> -> vector<2x2xf32>
    %109 = arith.addf %88, %108 : vector<2x2xf32>
    %110 = vector.extract_strided_slice %22 {offsets = [6, 0], sizes = [2, 16], strides = [1, 1]} : vector<16x16xf32> to vector<2x16xf32>
    %c3 = arith.constant 3 : index
    %c0_77 = arith.constant 0 : index
    %c0_78 = arith.constant 0 : index
    %111 = vector.load %arg4[%c3, %c0_77, %c0_78] : memref<8x16x32xf32, #tpu.memory_space<vmem>>, vector<1x16x32xf32>
    %112 = vector.shape_cast %111 : vector<1x16x32xf32> to vector<16x32xf32>
    %cst_79 = arith.constant dense<0.000000e+00> : vector<2x32xf32>
    %113 = tpu.matmul %110, %112, %cst_79 {dimension_numbers = #tpu.dot_dimension_numbers<[1], [0], [0], [1], [0, 0, 1, 1], [], []>} : vector<2x16xf32>, vector<16x32xf32>, vector<2x32xf32> -> vector<2x32xf32>
    %114 = vector.extract_strided_slice %45 {offsets = [6, 0], sizes = [2, 16], strides = [1, 1]} : vector<16x16xf32> to vector<2x16xf32>
    %c3_80 = arith.constant 3 : index
    %c0_81 = arith.constant 0 : index
    %c0_82 = arith.constant 0 : index
    %115 = vector.load %arg5[%c3_80, %c0_81, %c0_82] : memref<8x16x32xf32, #tpu.memory_space<vmem>>, vector<1x16x32xf32>
    %116 = vector.shape_cast %115 : vector<1x16x32xf32> to vector<16x32xf32>
    %cst_83 = arith.constant dense<0.000000e+00> : vector<2x32xf32>
    %117 = tpu.matmul %114, %116, %cst_83 {dimension_numbers = #tpu.dot_dimension_numbers<[1], [0], [0], [1], [0, 0, 1, 1], [], []>} : vector<2x16xf32>, vector<16x32xf32>, vector<2x32xf32> -> vector<2x32xf32>
    %118 = arith.addf %113, %117 : vector<2x32xf32>
    %c3_84 = arith.constant 3 : index
    %c0_85 = arith.constant 0 : index
    %c0_86 = arith.constant 0 : index
    %119 = vector.load %arg6[%c3_84, %c0_85, %c0_86] : memref<8x1x32xf32, #tpu.memory_space<vmem>>, vector<1x1x32xf32>
    %120 = vector.shape_cast %119 : vector<1x1x32xf32> to vector<1x32xf32>
    %121 = vector.broadcast %120 : vector<1x32xf32> to vector<2x32xf32>
    %122 = arith.addf %118, %121 : vector<2x32xf32>
    %c3_87 = arith.constant 3 : index
    %c0_88 = arith.constant 0 : index
    %c0_89 = arith.constant 0 : index
    %123 = vector.load %arg7[%c3_87, %c0_88, %c0_89] : memref<8x1x32xf32, #tpu.memory_space<vmem>>, vector<1x1x32xf32>
    %124 = vector.shape_cast %123 : vector<1x1x32xf32> to vector<1x32xf32>
    %125 = vector.broadcast %124 : vector<1x32xf32> to vector<2x32xf32>
    %126 = arith.addf %122, %125 : vector<2x32xf32>
    %c3_90 = arith.constant 3 : index
    %c0_91 = arith.constant 0 : index
    %c0_92 = arith.constant 0 : index
    %127 = vector.load %arg8[%c3_90, %c0_91, %c0_92] : memref<8x32x2xf32, #tpu.memory_space<vmem>>, vector<1x32x2xf32>
    %128 = vector.shape_cast %127 : vector<1x32x2xf32> to vector<32x2xf32>
    %cst_93 = arith.constant dense<0.000000e+00> : vector<2x2xf32>
    %129 = tpu.matmul %126, %128, %cst_93 {dimension_numbers = #tpu.dot_dimension_numbers<[1], [0], [0], [1], [0, 0, 1, 1], [], []>} : vector<2x32xf32>, vector<32x2xf32>, vector<2x2xf32> -> vector<2x2xf32>
    %130 = arith.addf %109, %129 : vector<2x2xf32>
    %131 = vector.extract_strided_slice %22 {offsets = [8, 0], sizes = [2, 16], strides = [1, 1]} : vector<16x16xf32> to vector<2x16xf32>
    %c4 = arith.constant 4 : index
    %c0_94 = arith.constant 0 : index
    %c0_95 = arith.constant 0 : index
    %132 = vector.load %arg4[%c4, %c0_94, %c0_95] : memref<8x16x32xf32, #tpu.memory_space<vmem>>, vector<1x16x32xf32>
    %133 = vector.shape_cast %132 : vector<1x16x32xf32> to vector<16x32xf32>
    %cst_96 = arith.constant dense<0.000000e+00> : vector<2x32xf32>
    %134 = tpu.matmul %131, %133, %cst_96 {dimension_numbers = #tpu.dot_dimension_numbers<[1], [0], [0], [1], [0, 0, 1, 1], [], []>} : vector<2x16xf32>, vector<16x32xf32>, vector<2x32xf32> -> vector<2x32xf32>
    %135 = vector.extract_strided_slice %45 {offsets = [8, 0], sizes = [2, 16], strides = [1, 1]} : vector<16x16xf32> to vector<2x16xf32>
    %c4_97 = arith.constant 4 : index
    %c0_98 = arith.constant 0 : index
    %c0_99 = arith.constant 0 : index
    %136 = vector.load %arg5[%c4_97, %c0_98, %c0_99] : memref<8x16x32xf32, #tpu.memory_space<vmem>>, vector<1x16x32xf32>
    %137 = vector.shape_cast %136 : vector<1x16x32xf32> to vector<16x32xf32>
    %cst_100 = arith.constant dense<0.000000e+00> : vector<2x32xf32>
    %138 = tpu.matmul %135, %137, %cst_100 {dimension_numbers = #tpu.dot_dimension_numbers<[1], [0], [0], [1], [0, 0, 1, 1], [], []>} : vector<2x16xf32>, vector<16x32xf32>, vector<2x32xf32> -> vector<2x32xf32>
    %139 = arith.addf %134, %138 : vector<2x32xf32>
    %c4_101 = arith.constant 4 : index
    %c0_102 = arith.constant 0 : index
    %c0_103 = arith.constant 0 : index
    %140 = vector.load %arg6[%c4_101, %c0_102, %c0_103] : memref<8x1x32xf32, #tpu.memory_space<vmem>>, vector<1x1x32xf32>
    %141 = vector.shape_cast %140 : vector<1x1x32xf32> to vector<1x32xf32>
    %142 = vector.broadcast %141 : vector<1x32xf32> to vector<2x32xf32>
    %143 = arith.addf %139, %142 : vector<2x32xf32>
    %c4_104 = arith.constant 4 : index
    %c0_105 = arith.constant 0 : index
    %c0_106 = arith.constant 0 : index
    %144 = vector.load %arg7[%c4_104, %c0_105, %c0_106] : memref<8x1x32xf32, #tpu.memory_space<vmem>>, vector<1x1x32xf32>
    %145 = vector.shape_cast %144 : vector<1x1x32xf32> to vector<1x32xf32>
    %146 = vector.broadcast %145 : vector<1x32xf32> to vector<2x32xf32>
    %147 = arith.addf %143, %146 : vector<2x32xf32>
    %c4_107 = arith.constant 4 : index
    %c0_108 = arith.constant 0 : index
    %c0_109 = arith.constant 0 : index
    %148 = vector.load %arg8[%c4_107, %c0_108, %c0_109] : memref<8x32x2xf32, #tpu.memory_space<vmem>>, vector<1x32x2xf32>
    %149 = vector.shape_cast %148 : vector<1x32x2xf32> to vector<32x2xf32>
    %cst_110 = arith.constant dense<0.000000e+00> : vector<2x2xf32>
    %150 = tpu.matmul %147, %149, %cst_110 {dimension_numbers = #tpu.dot_dimension_numbers<[1], [0], [0], [1], [0, 0, 1, 1], [], []>} : vector<2x32xf32>, vector<32x2xf32>, vector<2x2xf32> -> vector<2x2xf32>
    %151 = arith.addf %130, %150 : vector<2x2xf32>
    %152 = vector.extract_strided_slice %22 {offsets = [10, 0], sizes = [2, 16], strides = [1, 1]} : vector<16x16xf32> to vector<2x16xf32>
    %c5 = arith.constant 5 : index
    %c0_111 = arith.constant 0 : index
    %c0_112 = arith.constant 0 : index
    %153 = vector.load %arg4[%c5, %c0_111, %c0_112] : memref<8x16x32xf32, #tpu.memory_space<vmem>>, vector<1x16x32xf32>
    %154 = vector.shape_cast %153 : vector<1x16x32xf32> to vector<16x32xf32>
    %cst_113 = arith.constant dense<0.000000e+00> : vector<2x32xf32>
    %155 = tpu.matmul %152, %154, %cst_113 {dimension_numbers = #tpu.dot_dimension_numbers<[1], [0], [0], [1], [0, 0, 1, 1], [], []>} : vector<2x16xf32>, vector<16x32xf32>, vector<2x32xf32> -> vector<2x32xf32>
    %156 = vector.extract_strided_slice %45 {offsets = [10, 0], sizes = [2, 16], strides = [1, 1]} : vector<16x16xf32> to vector<2x16xf32>
    %c5_114 = arith.constant 5 : index
    %c0_115 = arith.constant 0 : index
    %c0_116 = arith.constant 0 : index
    %157 = vector.load %arg5[%c5_114, %c0_115, %c0_116] : memref<8x16x32xf32, #tpu.memory_space<vmem>>, vector<1x16x32xf32>
    %158 = vector.shape_cast %157 : vector<1x16x32xf32> to vector<16x32xf32>
    %cst_117 = arith.constant dense<0.000000e+00> : vector<2x32xf32>
    %159 = tpu.matmul %156, %158, %cst_117 {dimension_numbers = #tpu.dot_dimension_numbers<[1], [0], [0], [1], [0, 0, 1, 1], [], []>} : vector<2x16xf32>, vector<16x32xf32>, vector<2x32xf32> -> vector<2x32xf32>
    %160 = arith.addf %155, %159 : vector<2x32xf32>
    %c5_118 = arith.constant 5 : index
    %c0_119 = arith.constant 0 : index
    %c0_120 = arith.constant 0 : index
    %161 = vector.load %arg6[%c5_118, %c0_119, %c0_120] : memref<8x1x32xf32, #tpu.memory_space<vmem>>, vector<1x1x32xf32>
    %162 = vector.shape_cast %161 : vector<1x1x32xf32> to vector<1x32xf32>
    %163 = vector.broadcast %162 : vector<1x32xf32> to vector<2x32xf32>
    %164 = arith.addf %160, %163 : vector<2x32xf32>
    %c5_121 = arith.constant 5 : index
    %c0_122 = arith.constant 0 : index
    %c0_123 = arith.constant 0 : index
    %165 = vector.load %arg7[%c5_121, %c0_122, %c0_123] : memref<8x1x32xf32, #tpu.memory_space<vmem>>, vector<1x1x32xf32>
    %166 = vector.shape_cast %165 : vector<1x1x32xf32> to vector<1x32xf32>
    %167 = vector.broadcast %166 : vector<1x32xf32> to vector<2x32xf32>
    %168 = arith.addf %164, %167 : vector<2x32xf32>
    %c5_124 = arith.constant 5 : index
    %c0_125 = arith.constant 0 : index
    %c0_126 = arith.constant 0 : index
    %169 = vector.load %arg8[%c5_124, %c0_125, %c0_126] : memref<8x32x2xf32, #tpu.memory_space<vmem>>, vector<1x32x2xf32>
    %170 = vector.shape_cast %169 : vector<1x32x2xf32> to vector<32x2xf32>
    %cst_127 = arith.constant dense<0.000000e+00> : vector<2x2xf32>
    %171 = tpu.matmul %168, %170, %cst_127 {dimension_numbers = #tpu.dot_dimension_numbers<[1], [0], [0], [1], [0, 0, 1, 1], [], []>} : vector<2x32xf32>, vector<32x2xf32>, vector<2x2xf32> -> vector<2x2xf32>
    %172 = arith.addf %151, %171 : vector<2x2xf32>
    %173 = vector.extract_strided_slice %22 {offsets = [12, 0], sizes = [2, 16], strides = [1, 1]} : vector<16x16xf32> to vector<2x16xf32>
    %c6 = arith.constant 6 : index
    %c0_128 = arith.constant 0 : index
    %c0_129 = arith.constant 0 : index
    %174 = vector.load %arg4[%c6, %c0_128, %c0_129] : memref<8x16x32xf32, #tpu.memory_space<vmem>>, vector<1x16x32xf32>
    %175 = vector.shape_cast %174 : vector<1x16x32xf32> to vector<16x32xf32>
    %cst_130 = arith.constant dense<0.000000e+00> : vector<2x32xf32>
    %176 = tpu.matmul %173, %175, %cst_130 {dimension_numbers = #tpu.dot_dimension_numbers<[1], [0], [0], [1], [0, 0, 1, 1], [], []>} : vector<2x16xf32>, vector<16x32xf32>, vector<2x32xf32> -> vector<2x32xf32>
    %177 = vector.extract_strided_slice %45 {offsets = [12, 0], sizes = [2, 16], strides = [1, 1]} : vector<16x16xf32> to vector<2x16xf32>
    %c6_131 = arith.constant 6 : index
    %c0_132 = arith.constant 0 : index
    %c0_133 = arith.constant 0 : index
    %178 = vector.load %arg5[%c6_131, %c0_132, %c0_133] : memref<8x16x32xf32, #tpu.memory_space<vmem>>, vector<1x16x32xf32>
    %179 = vector.shape_cast %178 : vector<1x16x32xf32> to vector<16x32xf32>
    %cst_134 = arith.constant dense<0.000000e+00> : vector<2x32xf32>
    %180 = tpu.matmul %177, %179, %cst_134 {dimension_numbers = #tpu.dot_dimension_numbers<[1], [0], [0], [1], [0, 0, 1, 1], [], []>} : vector<2x16xf32>, vector<16x32xf32>, vector<2x32xf32> -> vector<2x32xf32>
    %181 = arith.addf %176, %180 : vector<2x32xf32>
    %c6_135 = arith.constant 6 : index
    %c0_136 = arith.constant 0 : index
    %c0_137 = arith.constant 0 : index
    %182 = vector.load %arg6[%c6_135, %c0_136, %c0_137] : memref<8x1x32xf32, #tpu.memory_space<vmem>>, vector<1x1x32xf32>
    %183 = vector.shape_cast %182 : vector<1x1x32xf32> to vector<1x32xf32>
    %184 = vector.broadcast %183 : vector<1x32xf32> to vector<2x32xf32>
    %185 = arith.addf %181, %184 : vector<2x32xf32>
    %c6_138 = arith.constant 6 : index
    %c0_139 = arith.constant 0 : index
    %c0_140 = arith.constant 0 : index
    %186 = vector.load %arg7[%c6_138, %c0_139, %c0_140] : memref<8x1x32xf32, #tpu.memory_space<vmem>>, vector<1x1x32xf32>
    %187 = vector.shape_cast %186 : vector<1x1x32xf32> to vector<1x32xf32>
    %188 = vector.broadcast %187 : vector<1x32xf32> to vector<2x32xf32>
    %189 = arith.addf %185, %188 : vector<2x32xf32>
    %c6_141 = arith.constant 6 : index
    %c0_142 = arith.constant 0 : index
    %c0_143 = arith.constant 0 : index
    %190 = vector.load %arg8[%c6_141, %c0_142, %c0_143] : memref<8x32x2xf32, #tpu.memory_space<vmem>>, vector<1x32x2xf32>
    %191 = vector.shape_cast %190 : vector<1x32x2xf32> to vector<32x2xf32>
    %cst_144 = arith.constant dense<0.000000e+00> : vector<2x2xf32>
    %192 = tpu.matmul %189, %191, %cst_144 {dimension_numbers = #tpu.dot_dimension_numbers<[1], [0], [0], [1], [0, 0, 1, 1], [], []>} : vector<2x32xf32>, vector<32x2xf32>, vector<2x2xf32> -> vector<2x2xf32>
    %193 = arith.addf %172, %192 : vector<2x2xf32>
    %194 = vector.extract_strided_slice %22 {offsets = [14, 0], sizes = [2, 16], strides = [1, 1]} : vector<16x16xf32> to vector<2x16xf32>
    %c7 = arith.constant 7 : index
    %c0_145 = arith.constant 0 : index
    %c0_146 = arith.constant 0 : index
    %195 = vector.load %arg4[%c7, %c0_145, %c0_146] : memref<8x16x32xf32, #tpu.memory_space<vmem>>, vector<1x16x32xf32>
    %196 = vector.shape_cast %195 : vector<1x16x32xf32> to vector<16x32xf32>
    %cst_147 = arith.constant dense<0.000000e+00> : vector<2x32xf32>
    %197 = tpu.matmul %194, %196, %cst_147 {dimension_numbers = #tpu.dot_dimension_numbers<[1], [0], [0], [1], [0, 0, 1, 1], [], []>} : vector<2x16xf32>, vector<16x32xf32>, vector<2x32xf32> -> vector<2x32xf32>
    %198 = vector.extract_strided_slice %45 {offsets = [14, 0], sizes = [2, 16], strides = [1, 1]} : vector<16x16xf32> to vector<2x16xf32>
    %c7_148 = arith.constant 7 : index
    %c0_149 = arith.constant 0 : index
    %c0_150 = arith.constant 0 : index
    %199 = vector.load %arg5[%c7_148, %c0_149, %c0_150] : memref<8x16x32xf32, #tpu.memory_space<vmem>>, vector<1x16x32xf32>
    %200 = vector.shape_cast %199 : vector<1x16x32xf32> to vector<16x32xf32>
    %cst_151 = arith.constant dense<0.000000e+00> : vector<2x32xf32>
    %201 = tpu.matmul %198, %200, %cst_151 {dimension_numbers = #tpu.dot_dimension_numbers<[1], [0], [0], [1], [0, 0, 1, 1], [], []>} : vector<2x16xf32>, vector<16x32xf32>, vector<2x32xf32> -> vector<2x32xf32>
    %202 = arith.addf %197, %201 : vector<2x32xf32>
    %c7_152 = arith.constant 7 : index
    %c0_153 = arith.constant 0 : index
    %c0_154 = arith.constant 0 : index
    %203 = vector.load %arg6[%c7_152, %c0_153, %c0_154] : memref<8x1x32xf32, #tpu.memory_space<vmem>>, vector<1x1x32xf32>
    %204 = vector.shape_cast %203 : vector<1x1x32xf32> to vector<1x32xf32>
    %205 = vector.broadcast %204 : vector<1x32xf32> to vector<2x32xf32>
    %206 = arith.addf %202, %205 : vector<2x32xf32>
    %c7_155 = arith.constant 7 : index
    %c0_156 = arith.constant 0 : index
    %c0_157 = arith.constant 0 : index
    %207 = vector.load %arg7[%c7_155, %c0_156, %c0_157] : memref<8x1x32xf32, #tpu.memory_space<vmem>>, vector<1x1x32xf32>
    %208 = vector.shape_cast %207 : vector<1x1x32xf32> to vector<1x32xf32>
    %209 = vector.broadcast %208 : vector<1x32xf32> to vector<2x32xf32>
    %210 = arith.addf %206, %209 : vector<2x32xf32>
    %c7_158 = arith.constant 7 : index
    %c0_159 = arith.constant 0 : index
    %c0_160 = arith.constant 0 : index
    %211 = vector.load %arg8[%c7_158, %c0_159, %c0_160] : memref<8x32x2xf32, #tpu.memory_space<vmem>>, vector<1x32x2xf32>
    %212 = vector.shape_cast %211 : vector<1x32x2xf32> to vector<32x2xf32>
    %cst_161 = arith.constant dense<0.000000e+00> : vector<2x2xf32>
    %213 = tpu.matmul %210, %212, %cst_161 {dimension_numbers = #tpu.dot_dimension_numbers<[1], [0], [0], [1], [0, 0, 1, 1], [], []>} : vector<2x32xf32>, vector<32x2xf32>, vector<2x2xf32> -> vector<2x2xf32>
    %214 = arith.addf %193, %213 : vector<2x2xf32>
    %c0_162 = arith.constant 0 : index
    %c0_163 = arith.constant 0 : index
    %215 = vector.load %arg9[%c0_162, %c0_163] : memref<1x2xf32, #tpu.memory_space<vmem>>, vector<1x2xf32>
    %216 = vector.broadcast %215 : vector<1x2xf32> to vector<2x2xf32>
    %217 = arith.addf %214, %216 : vector<2x2xf32>
    %cst_164 = arith.constant 0.000000e+00 : f32
    %218 = vector.broadcast %cst_164 : f32 to vector<2x2xf32>
    %219 = arith.subf %218, %217 : vector<2x2xf32>
    %220 = math.exp %219 : vector<2x2xf32>
    %cst_165 = arith.constant 1.000000e+00 : f32
    %221 = vector.broadcast %cst_165 : f32 to vector<2x2xf32>
    %222 = arith.addf %221, %220 : vector<2x2xf32>
    %223 = tpu.reciprocal %222 {approx = true} : vector<2x2xf32> -> vector<2x2xf32>
    %c0_166 = arith.constant 0 : index
    %c0_167 = arith.constant 0 : index
    %224 = vector.load %arg10[%c0_166, %c0_167] : memref<2x2xf32, #tpu.memory_space<vmem>>, vector<2x2xf32>
    tpu.vector_store %arg10[%c0_166, %c0_167], %223 {strides = array<i32>} : memref<2x2xf32, #tpu.memory_space<vmem>>, vector<2x2xf32>,
    return
  }
}

</mosaic_0001>

<llo_original>
// kernel: hetero_graph_classifier.1
$region0: #{hetero_graph_classifier.1}
  #allocation0 [shape = 'u32[]', space=smem, size = 0x4, offset = 0x4, fixed_abs, tag = 'smem constant byte address 0x4 - core index']
  #allocation1 [shape = 'u32[144,128]{1,0:T(1,128)}', space=vmem, size = 0x12000, scoped, tag = 'internal scratch']
  %s0 = inlined_call_operand.hbm [shape: f32[16,8,16], index: 0, kind: input, shape index: {}]
  %s1 = inlined_call_operand.hbm [shape: f32[16,8,8], index: 1, kind: input, shape index: {}]
  %s2 = inlined_call_operand.vmem [shape: f32[16,16,16], index: 2, kind: input, shape index: {}]
  %s3 = inlined_call_operand.hbm [shape: f32[16,8,16], index: 3, kind: input, shape index: {}]
  %s4 = inlined_call_operand.hbm [shape: f32[8,16,32], index: 4, kind: input, shape index: {}]
  %s5 = inlined_call_operand.hbm [shape: f32[8,16,32], index: 5, kind: input, shape index: {}]
  %s6 = inlined_call_operand.vmem [shape: f32[8,1,32], index: 6, kind: input, shape index: {}]
  %s7 = inlined_call_operand.vmem [shape: f32[8,1,32], index: 7, kind: input, shape index: {}]
  %s8 = inlined_call_operand.vmem [shape: f32[8,32,2], index: 8, kind: input, shape index: {}]
  %s9 = inlined_call_operand.hbm [shape: f32[1,2], index: 9, kind: input, shape index: {}]
  %s10 = inlined_call_operand.hbm [shape: f32[2,2], index: 10, kind: output, shape index: {}]
  %s11 = sld [smem:[#allocation0]]
  $region74: #{hetero_graph_classifier.1} parent=0
    _
  %s13 = ssub.s32 1, %s11
  %s14 = scalar_select 0, %s13, %s11
  $region1: #{hetero_graph_classifier.1} parent=0
    #allocation2 [shape = 'u8[65536]{0}', space=vmem, size = 0x10000, scoped, tag = 'input window, operand 0, single buffered']
    #allocation3 [shape = 's32[1]{0}', space=sflag, size = 0x4, scoped, tag = 'scoped memory for hetero_graph_classifier.1']
    #allocation4 [shape = 's32[1]{0}', space=sflag, size = 0x4, scoped, tag = 'scoped memory for hetero_graph_classifier.1']
    #allocation5 [shape = 'u8[65536]{0}', space=vmem, size = 0x10000, scoped, tag = 'input window, operand 1, single buffered']
    #allocation6 [shape = 's32[1]{0}', space=sflag, size = 0x4, scoped, tag = 'scoped memory for hetero_graph_classifier.1']
    #allocation7 [shape = 'u8[65536]{0}', space=vmem, size = 0x10000, scoped, tag = 'input window, operand 3, single buffered']
    #allocation8 [shape = 'u8[65536]{0}', space=vmem, size = 0x10000, scoped, tag = 'input window, operand 4, single buffered']
    #allocation9 [shape = 's32[1]{0}', space=sflag, size = 0x4, scoped, tag = 'scoped memory for hetero_graph_classifier.1']
    #allocation10 [shape = 'u8[65536]{0}', space=vmem, size = 0x10000, scoped, tag = 'input window, operand 5, single buffered']
    #allocation11 [shape = 'u8[512]{0}', space=vmem, size = 0x400, scoped, tag = 'input window, operand 9, single buffered']
    #allocation12 [shape = 's32[1]{0}', space=sflag, size = 0x4, scoped, tag = 'scoped memory for hetero_graph_classifier.1']
    #allocation13 [shape = 'u8[1024]{0}', space=vmem, size = 0x400, scoped, tag = 'output window, operand 0, single buffered']
    %15 = vsyncpa [#allocation3], 0
    %16 = vsyncpa [#allocation6], 0
    %17 = vsyncpa [#allocation9], 0
    %18 = vsyncpa [#allocation12], 0
    %19 = vsyncpa [#allocation4], 0
    // Predicated region
    $region2: #{hetero_graph_classifier.1} parent=1 // pred_check
      _
    $region3: #{hetero_graph_classifier.1} parent=1 // pred_check_branch
      %21 = sbr.rel (0) target = $region5
    $region4: #{hetero_graph_classifier.1} parent=1 // pred_region
      %s23 = ssub.s32 2048, 2048
      %24 = vsyncadd [#allocation3], %s23
      %s25 = sshll.u32 [#allocation2], 4
      %s26 = int_to_ptr.vmem [resolvable:$true] %s25
      %31 = dma.hbm_to_vmem [thread:$0]  %s0, 2048, %s26, [#allocation3], 128, 128, 8
    $region5: #{hetero_graph_classifier.1} parent=1 // pred_fallthru
      _
    // Predicated region
    $region6: #{hetero_graph_classifier.1} parent=1 // pred_check
      _
    $region7: #{hetero_graph_classifier.1} parent=1 // pred_check_branch
      %33 = sbr.rel (0) target = $region9
    $region8: #{hetero_graph_classifier.1} parent=1 // pred_region
      %s35 = ssub.s32 2048, 2048
      %36 = vsyncadd [#allocation6], %s35
      %s37 = sshll.u32 [#allocation5], 4
      %s38 = int_to_ptr.vmem [resolvable:$true] %s37
      %43 = dma.hbm_to_vmem [thread:$0]  %s1, 2048, %s38, [#allocation6], 128, 128, 8
    $region9: #{hetero_graph_classifier.1} parent=1 // pred_fallthru
      _
    // Predicated region
    $region10: #{hetero_graph_classifier.1} parent=1 // pred_check
      _
    $region11: #{hetero_graph_classifier.1} parent=1 // pred_check_branch
      %45 = sbr.rel (0) target = $region13
    $region12: #{hetero_graph_classifier.1} parent=1 // pred_region
      _
    $region13: #{hetero_graph_classifier.1} parent=1 // pred_fallthru
      _
    // Predicated region
    $region14: #{hetero_graph_classifier.1} parent=1 // pred_check
      _
    $region15: #{hetero_graph_classifier.1} parent=1 // pred_check_branch
      %47 = sbr.rel (0) target = $region17
    $region16: #{hetero_graph_classifier.1} parent=1 // pred_region
      %s49 = ssub.s32 2048, 2048
      %50 = vsyncadd [#allocation6], %s49
      %s51 = sshll.u32 [#allocation7], 4
      %s52 = int_to_ptr.vmem [resolvable:$true] %s51
      %57 = dma.hbm_to_vmem [thread:$0]  %s3, 2048, %s52, [#allocation6], 128, 128, 8
    $region17: #{hetero_graph_classifier.1} parent=1 // pred_fallthru
      _
    // Predicated region
    $region18: #{hetero_graph_classifier.1} parent=1 // pred_check
      _
    $region19: #{hetero_graph_classifier.1} parent=1 // pred_check_branch
      %59 = sbr.rel (0) target = $region21
    $region20: #{hetero_graph_classifier.1} parent=1 // pred_region
      %s61 = ssub.s32 2048, 2048
      %62 = vsyncadd [#allocation9], %s61
      %s63 = sshll.u32 [#allocation8], 4
      %s64 = int_to_ptr.vmem [resolvable:$true] %s63
      %69 = dma.hbm_to_vmem [thread:$0]  %s4, 2048, %s64, [#allocation9], 128, 128, 8
    $region21: #{hetero_graph_classifier.1} parent=1 // pred_fallthru
      _
    // Predicated region
    $region22: #{hetero_graph_classifier.1} parent=1 // pred_check
      _
    $region23: #{hetero_graph_classifier.1} parent=1 // pred_check_branch
      %71 = sbr.rel (0) target = $region25
    $region24: #{hetero_graph_classifier.1} parent=1 // pred_region
      %s73 = ssub.s32 2048, 2048
      %74 = vsyncadd [#allocation9], %s73
      %s75 = sshll.u32 [#allocation10], 4
      %s76 = int_to_ptr.vmem [resolvable:$true] %s75
      %81 = dma.hbm_to_vmem [thread:$0]  %s5, 2048, %s76, [#allocation9], 128, 128, 8
    $region25: #{hetero_graph_classifier.1} parent=1 // pred_fallthru
      _
    // Predicated region
    $region26: #{hetero_graph_classifier.1} parent=1 // pred_check
      _
    $region27: #{hetero_graph_classifier.1} parent=1 // pred_check_branch
      %83 = sbr.rel (0) target = $region29
    $region28: #{hetero_graph_classifier.1} parent=1 // pred_region
      _
    $region29: #{hetero_graph_classifier.1} parent=1 // pred_fallthru
      _
    // Predicated region
    $region30: #{hetero_graph_classifier.1} parent=1 // pred_check
      _
    $region31: #{hetero_graph_classifier.1} parent=1 // pred_check_branch
      %85 = sbr.rel (0) target = $region33
    $region32: #{hetero_graph_classifier.1} parent=1 // pred_region
      _
    $region33: #{hetero_graph_classifier.1} parent=1 // pred_fallthru
      _
    // Predicated region
    $region34: #{hetero_graph_classifier.1} parent=1 // pred_check
      _
    $region35: #{hetero_graph_classifier.1} parent=1 // pred_check_branch
      %87 = sbr.rel (0) target = $region37
    $region36: #{hetero_graph_classifier.1} parent=1 // pred_region
      _
    $region37: #{hetero_graph_classifier.1} parent=1 // pred_fallthru
      _
    // Predicated region
    $region38: #{hetero_graph_classifier.1} parent=1 // pred_check
      _
    $region39: #{hetero_graph_classifier.1} parent=1 // pred_check_branch
      %89 = sbr.rel (0) target = $region41
    $region40: #{hetero_graph_classifier.1} parent=1 // pred_region
      %s91 = ssub.s32 16, 16
      %92 = vsyncadd [#allocation12], %s91
      %s94 = sshll.u32 [#allocation11], 4
      %s95 = int_to_ptr.vmem [resolvable:$true] %s94
      %97 = dma.hbm_to_vmem [thread:$0]  %s9, 16, %s95, [#allocation12]
    $region41: #{hetero_graph_classifier.1} parent=1 // pred_fallthru
      _
    // Predicated region
    $region42: #{hetero_graph_classifier.1} parent=1 // pred_check
      _
    $region43: #{hetero_graph_classifier.1} parent=1 // pred_check_branch
      %99 = sbr.rel (0) target = $region45
    $region44: #{hetero_graph_classifier.1} parent=1 // pred_region
      %100 = dma.done [#allocation3], 2048
    $region45: #{hetero_graph_classifier.1} parent=1 // pred_fallthru
      _
    // Predicated region
    $region46: #{hetero_graph_classifier.1} parent=1 // pred_check
      _
    $region47: #{hetero_graph_classifier.1} parent=1 // pred_check_branch
      %102 = sbr.rel (0) target = $region49
    $region48: #{hetero_graph_classifier.1} parent=1 // pred_region
      %103 = dma.done [#allocation6], 2048
    $region49: #{hetero_graph_classifier.1} parent=1 // pred_fallthru
      _
    // Predicated region
    $region50: #{hetero_graph_classifier.1} parent=1 // pred_check
      _
    $region51: #{hetero_graph_classifier.1} parent=1 // pred_check_branch
      %105 = sbr.rel (0) target = $region53
    $region52: #{hetero_graph_classifier.1} parent=1 // pred_region
      %106 = dma.done [#allocation6], 2048
    $region53: #{hetero_graph_classifier.1} parent=1 // pred_fallthru
      _
    // Predicated region
    $region54: #{hetero_graph_classifier.1} parent=1 // pred_check
      _
    $region55: #{hetero_graph_classifier.1} parent=1 // pred_check_branch
      %108 = sbr.rel (0) target = $region57
    $region56: #{hetero_graph_classifier.1} parent=1 // pred_region
      %109 = dma.done [#allocation9], 2048
    $region57: #{hetero_graph_classifier.1} parent=1 // pred_fallthru
      _
    // Predicated region
    $region58: #{hetero_graph_classifier.1} parent=1 // pred_check
      _
    $region59: #{hetero_graph_classifier.1} parent=1 // pred_check_branch
      %111 = sbr.rel (0) target = $region61
    $region60: #{hetero_graph_classifier.1} parent=1 // pred_region
      %112 = dma.done [#allocation9], 2048
    $region61: #{hetero_graph_classifier.1} parent=1 // pred_fallthru
      _
    // Predicated region
    $region62: #{hetero_graph_classifier.1} parent=1 // pred_check
      _
    $region63: #{hetero_graph_classifier.1} parent=1 // pred_check_branch
      %114 = sbr.rel (0) target = $region65
    $region64: #{hetero_graph_classifier.1} parent=1 // pred_region
      %115 = dma.done [#allocation12], 16
    $region65: #{hetero_graph_classifier.1} parent=1 // pred_fallthru
      _
    %v116 = vld [vmem:[#allocation2] sm:$0xff]
    %v117 = vld [vmem:[#allocation2 + $0x8] sm:$0xff]
    %v118 = vld [vmem:[#allocation2 + $0x10] sm:$0xff]
    %v119 = vld [vmem:[#allocation2 + $0x18] sm:$0xff]
    %v120 = vld [vmem:[#allocation2 + $0x20] sm:$0xff]
    %v121 = vld [vmem:[#allocation2 + $0x28] sm:$0xff]
    %v122 = vld [vmem:[#allocation2 + $0x30] sm:$0xff]
    %v123 = vld [vmem:[#allocation2 + $0x38] sm:$0xff]
    %v124 = vld [vmem:[#allocation2 + $0x40] sm:$0xff]
    %v125 = vld [vmem:[#allocation2 + $0x48] sm:$0xff]
    %v126 = vld [vmem:[#allocation2 + $0x50] sm:$0xff]
    %v127 = vld [vmem:[#allocation2 + $0x58] sm:$0xff]
    %v128 = vld [vmem:[#allocation2 + $0x60] sm:$0xff]
    %v129 = vld [vmem:[#allocation2 + $0x68] sm:$0xff]
    %v130 = vld [vmem:[#allocation2 + $0x70] sm:$0xff]
    %v131 = vld [vmem:[#allocation2 + $0x78] sm:$0xff]
    %v132 = vld [vmem:[%s2] sm:$0xff]
    %v133 = vld [vmem:[%s2 + $0x8] sm:$0xff]
    %v134 = vld [vmem:[%s2 + $0x10] sm:$0xff]
    %v135 = vld [vmem:[%s2 + $0x18] sm:$0xff]
    %v136 = vld [vmem:[%s2 + $0x20] sm:$0xff]
    %v137 = vld [vmem:[%s2 + $0x28] sm:$0xff]
    %v138 = vld [vmem:[%s2 + $0x30] sm:$0xff]
    %v139 = vld [vmem:[%s2 + $0x38] sm:$0xff]
    %v140 = vld [vmem:[%s2 + $0x40] sm:$0xff]
    %v141 = vld [vmem:[%s2 + $0x48] sm:$0xff]
    %v142 = vld [vmem:[%s2 + $0x50] sm:$0xff]
    %v143 = vld [vmem:[%s2 + $0x58] sm:$0xff]
    %v144 = vld [vmem:[%s2 + $0x60] sm:$0xff]
    %v145 = vld [vmem:[%s2 + $0x68] sm:$0xff]
    %v146 = vld [vmem:[%s2 + $0x70] sm:$0xff]
    %v147 = vld [vmem:[%s2 + $0x78] sm:$0xff]
    %v148 = vld [vmem:[%s2 + $0x80] sm:$0xff]
    %v149 = vld [vmem:[%s2 + $0x88] sm:$0xff]
    %v150 = vld [vmem:[%s2 + $0x90] sm:$0xff]
    %v151 = vld [vmem:[%s2 + $0x98] sm:$0xff]
    %v152 = vld [vmem:[%s2 + $0xa0] sm:$0xff]
    %v153 = vld [vmem:[%s2 + $0xa8] sm:$0xff]
    %v154 = vld [vmem:[%s2 + $0xb0] sm:$0xff]
    %v155 = vld [vmem:[%s2 + $0xb8] sm:$0xff]
    %v156 = vld [vmem:[%s2 + $0xc0] sm:$0xff]
    %v157 = vld [vmem:[%s2 + $0xc8] sm:$0xff]
    %v158 = vld [vmem:[%s2 + $0xd0] sm:$0xff]
    %v159 = vld [vmem:[%s2 + $0xd8] sm:$0xff]
    %v160 = vld [vmem:[%s2 + $0xe0] sm:$0xff]
    %v161 = vld [vmem:[%s2 + $0xe8] sm:$0xff]
    %v162 = vld [vmem:[%s2 + $0xf0] sm:$0xff]
    %v163 = vld [vmem:[%s2 + $0xf8] sm:$0xff]
    %vm164 = vcmask 130048
    %v165 = vsel %vm164, %v116, 0.0
    %v166 = vrot.slane %v165, 4
    %v167 = vadd.f32 %v165, %v166
    %v168 = vrot.slane %v167, 2
    %v169 = vadd.f32 %v167, %v168
    %v170 = vrot.slane %v169, 1
    %v171 = vadd.f32 %v169, %v170
    %v172 = vsel %vm164, %v117, 0.0
    %v173 = vrot.slane %v172, 4
    %v174 = vadd.f32 %v172, %v173
    %v175 = vrot.slane %v174, 2
    %v176 = vadd.f32 %v174, %v175
    %v177 = vrot.slane %v176, 1
    %v178 = vadd.f32 %v176, %v177
    %v179 = vsel %vm164, %v118, 0.0
    %v180 = vrot.slane %v179, 4
    %v181 = vadd.f32 %v179, %v180
    %v182 = vrot.slane %v181, 2
    %v183 = vadd.f32 %v181, %v182
    %v184 = vrot.slane %v183, 1
    %v185 = vadd.f32 %v183, %v184
    %v186 = vsel %vm164, %v119, 0.0
    %v187 = vrot.slane %v186, 4
    %v188 = vadd.f32 %v186, %v187
    %v189 = vrot.slane %v188, 2
    %v190 = vadd.f32 %v188, %v189
    %v191 = vrot.slane %v190, 1
    %v192 = vadd.f32 %v190, %v191
    %v193 = vsel %vm164, %v120, 0.0
    %v194 = vrot.slane %v193, 4
    %v195 = vadd.f32 %v193, %v194
    %v196 = vrot.slane %v195, 2
    %v197 = vadd.f32 %v195, %v196
    %v198 = vrot.slane %v197, 1
    %v199 = vadd.f32 %v197, %v198
    %v200 = vsel %vm164, %v121, 0.0
    %v201 = vrot.slane %v200, 4
    %v202 = vadd.f32 %v200, %v201
    %v203 = vrot.slane %v202, 2
    %v204 = vadd.f32 %v202, %v203
    %v205 = vrot.slane %v204, 1
    %v206 = vadd.f32 %v204, %v205
    %v207 = vsel %vm164, %v122, 0.0
    %v208 = vrot.slane %v207, 4
    %v209 = vadd.f32 %v207, %v208
    %v210 = vrot.slane %v209, 2
    %v211 = vadd.f32 %v209, %v210
    %v212 = vrot.slane %v211, 1
    %v213 = vadd.f32 %v211, %v212
    %v214 = vsel %vm164, %v123, 0.0
    %v215 = vrot.slane %v214, 4
    %v216 = vadd.f32 %v214, %v215
    %v217 = vrot.slane %v216, 2
    %v218 = vadd.f32 %v216, %v217
    %v219 = vrot.slane %v218, 1
    %v220 = vadd.f32 %v218, %v219
    %v221 = vsel %vm164, %v124, 0.0
    %v222 = vrot.slane %v221, 4
    %v223 = vadd.f32 %v221, %v222
    %v224 = vrot.slane %v223, 2
    %v225 = vadd.f32 %v223, %v224
    %v226 = vrot.slane %v225, 1
    %v227 = vadd.f32 %v225, %v226
    %v228 = vsel %vm164, %v125, 0.0
    %v229 = vrot.slane %v228, 4
    %v230 = vadd.f32 %v228, %v229
    %v231 = vrot.slane %v230, 2
    %v232 = vadd.f32 %v230, %v231
    %v233 = vrot.slane %v232, 1
    %v234 = vadd.f32 %v232, %v233
    %v235 = vsel %vm164, %v126, 0.0
    %v236 = vrot.slane %v235, 4
    %v237 = vadd.f32 %v235, %v236
    %v238 = vrot.slane %v237, 2
    %v239 = vadd.f32 %v237, %v238
    %v240 = vrot.slane %v239, 1
    %v241 = vadd.f32 %v239, %v240
    %v242 = vsel %vm164, %v127, 0.0
    %v243 = vrot.slane %v242, 4
    %v244 = vadd.f32 %v242, %v243
    %v245 = vrot.slane %v244, 2
    %v246 = vadd.f32 %v244, %v245
    %v247 = vrot.slane %v246, 1
    %v248 = vadd.f32 %v246, %v247
    %v249 = vsel %vm164, %v128, 0.0
    %v250 = vrot.slane %v249, 4
    %v251 = vadd.f32 %v249, %v250
    %v252 = vrot.slane %v251, 2
    %v253 = vadd.f32 %v251, %v252
    %v254 = vrot.slane %v253, 1
    %v255 = vadd.f32 %v253, %v254
    %v256 = vsel %vm164, %v129, 0.0
    %v257 = vrot.slane %v256, 4
    %v258 = vadd.f32 %v256, %v257
    %v259 = vrot.slane %v258, 2
    %v260 = vadd.f32 %v258, %v259
    %v261 = vrot.slane %v260, 1
    %v262 = vadd.f32 %v260, %v261
    %v263 = vsel %vm164, %v130, 0.0
    %v264 = vrot.slane %v263, 4
    %v265 = vadd.f32 %v263, %v264
    %v266 = vrot.slane %v265, 2
    %v267 = vadd.f32 %v265, %v266
    %v268 = vrot.slane %v267, 1
    %v269 = vadd.f32 %v267, %v268
    %v270 = vsel %vm164, %v131, 0.0
    %v271 = vrot.slane %v270, 4
    %v272 = vadd.f32 %v270, %v271
    %v273 = vrot.slane %v272, 2
    %v274 = vadd.f32 %v272, %v273
    %v275 = vrot.slane %v274, 1
    %v276 = vadd.f32 %v274, %v275
    %v277 = vmax.f32 %v171, 1.0
    %v278 = vmax.f32 %v178, 1.0
    %v279 = vmax.f32 %v185, 1.0
    %v280 = vmax.f32 %v192, 1.0
    %v281 = vmax.f32 %v199, 1.0
    %v282 = vmax.f32 %v206, 1.0
    %v283 = vmax.f32 %v213, 1.0
    %v284 = vmax.f32 %v220, 1.0
    %v285 = vmax.f32 %v227, 1.0
    %v286 = vmax.f32 %v234, 1.0
    %v287 = vmax.f32 %v241, 1.0
    %v288 = vmax.f32 %v248, 1.0
    %v289 = vmax.f32 %v255, 1.0
    %v290 = vmax.f32 %v262, 1.0
    %v291 = vmax.f32 %v269, 1.0
    %v292 = vmax.f32 %v276, 1.0
    %293 = vadd.xlane.f32.xlu0 %v165
    %v294 = vpop.xlane.xlu0 %293
    %295 = vadd.xlane.f32.xlu0 %v172
    %v296 = vpop.xlane.xlu0 %295
    %297 = vadd.xlane.f32.xlu0 %v179
    %v298 = vpop.xlane.xlu0 %297
    %299 = vadd.xlane.f32.xlu0 %v186
    %v300 = vpop.xlane.xlu0 %299
    %301 = vadd.xlane.f32.xlu0 %v193
    %v302 = vpop.xlane.xlu0 %301
    %303 = vadd.xlane.f32.xlu0 %v200
    %v304 = vpop.xlane.xlu0 %303
    %305 = vadd.xlane.f32.xlu0 %v207
    %v306 = vpop.xlane.xlu0 %305
    %307 = vadd.xlane.f32.xlu0 %v214
    %v308 = vpop.xlane.xlu0 %307
    %309 = vadd.xlane.f32.xlu0 %v221
    %v310 = vpop.xlane.xlu0 %309
    %311 = vadd.xlane.f32.xlu0 %v228
    %v312 = vpop.xlane.xlu0 %311
    %313 = vadd.xlane.f32.xlu0 %v235
    %v314 = vpop.xlane.xlu0 %313
    %315 = vadd.xlane.f32.xlu0 %v242
    %v316 = vpop.xlane.xlu0 %315
    %317 = vadd.xlane.f32.xlu0 %v249
    %v318 = vpop.xlane.xlu0 %317
    %319 = vadd.xlane.f32.xlu0 %v256
    %v320 = vpop.xlane.xlu0 %319
    %321 = vadd.xlane.f32.xlu0 %v263
    %v322 = vpop.xlane.xlu0 %321
    %323 = vadd.xlane.f32.xlu0 %v270
    %v324 = vpop.xlane.xlu0 %323
    %v325 = vmax.f32 %v294, 1.0
    %v326 = vmax.f32 %v296, 1.0
    %v327 = vmax.f32 %v298, 1.0
    %v328 = vmax.f32 %v300, 1.0
    %v329 = vmax.f32 %v302, 1.0
    %v330 = vmax.f32 %v304, 1.0
    %v331 = vmax.f32 %v306, 1.0
    %v332 = vmax.f32 %v308, 1.0
    %v333 = vmax.f32 %v310, 1.0
    %v334 = vmax.f32 %v312, 1.0
    %v335 = vmax.f32 %v314, 1.0
    %v336 = vmax.f32 %v316, 1.0
    %v337 = vmax.f32 %v318, 1.0
    %v338 = vmax.f32 %v320, 1.0
    %v339 = vmax.f32 %v322, 1.0
    %v340 = vmax.f32 %v324, 1.0
    %v341 = vrsqrt.pop %v277
    %v342 = vrsqrt.pop %v278
    %v343 = vrsqrt.pop %v279
    %v344 = vrsqrt.pop %v280
    %v345 = vrsqrt.pop %v281
    %v346 = vrsqrt.pop %v282
    %v347 = vrsqrt.pop %v283
    %v348 = vrsqrt.pop %v284
    %v349 = vrsqrt.pop %v285
    %v350 = vrsqrt.pop %v286
    %v351 = vrsqrt.pop %v287
    %v352 = vrsqrt.pop %v288
    %v353 = vrsqrt.pop %v289
    %v354 = vrsqrt.pop %v290
    %v355 = vrsqrt.pop %v291
    %v356 = vrsqrt.pop %v292
    %358 = vbcast.lane.b32.xlu0 %v341, 256
    %v359 = vpop.permute.xlu0 %358
    %s361 = sor.u32 256, 8
    %362 = vbcast.lane.b32.xlu0 %v341, %s361
    %v363 = vpop.permute.xlu0 %362
    %365 = vbcast.lane.b32.xlu0 %v342, 256
    %v366 = vpop.permute.xlu0 %365
    %s368 = sor.u32 256, 8
    %369 = vbcast.lane.b32.xlu0 %v342, %s368
    %v370 = vpop.permute.xlu0 %369
    %372 = vbcast.lane.b32.xlu0 %v343, 256
    %v373 = vpop.permute.xlu0 %372
    %s375 = sor.u32 256, 8
    %376 = vbcast.lane.b32.xlu0 %v343, %s375
    %v377 = vpop.permute.xlu0 %376
    %379 = vbcast.lane.b32.xlu0 %v344, 256
    %v380 = vpop.permute.xlu0 %379
    %s382 = sor.u32 256, 8
    %383 = vbcast.lane.b32.xlu0 %v344, %s382
    %v384 = vpop.permute.xlu0 %383
    %386 = vbcast.lane.b32.xlu0 %v345, 256
    %v387 = vpop.permute.xlu0 %386
    %s389 = sor.u32 256, 8
    %390 = vbcast.lane.b32.xlu0 %v345, %s389
    %v391 = vpop.permute.xlu0 %390
    %393 = vbcast.lane.b32.xlu0 %v346, 256
    %v394 = vpop.permute.xlu0 %393
    %s396 = sor.u32 256, 8
    %397 = vbcast.lane.b32.xlu0 %v346, %s396
    %v398 = vpop.permute.xlu0 %397
    %400 = vbcast.lane.b32.xlu0 %v347, 256
    %v401 = vpop.permute.xlu0 %400
    %s403 = sor.u32 256, 8
    %404 = vbcast.lane.b32.xlu0 %v347, %s403
    %v405 = vpop.permute.xlu0 %404
    %407 = vbcast.lane.b32.xlu0 %v348, 256
    %v408 = vpop.permute.xlu0 %407
    %s410 = sor.u32 256, 8
    %411 = vbcast.lane.b32.xlu0 %v348, %s410
    %v412 = vpop.permute.xlu0 %411
    %414 = vbcast.lane.b32.xlu0 %v349, 256
    %v415 = vpop.permute.xlu0 %414
    %s417 = sor.u32 256, 8
    %418 = vbcast.lane.b32.xlu0 %v349, %s417
    %v419 = vpop.permute.xlu0 %418
    %421 = vbcast.lane.b32.xlu0 %v350, 256
    %v422 = vpop.permute.xlu0 %421
    %s424 = sor.u32 256, 8
    %425 = vbcast.lane.b32.xlu0 %v350, %s424
    %v426 = vpop.permute.xlu0 %425
    %428 = vbcast.lane.b32.xlu0 %v351, 256
    %v429 = vpop.permute.xlu0 %428
    %s431 = sor.u32 256, 8
    %432 = vbcast.lane.b32.xlu0 %v351, %s431
    %v433 = vpop.permute.xlu0 %432
    %435 = vbcast.lane.b32.xlu0 %v352, 256
    %v436 = vpop.permute.xlu0 %435
    %s438 = sor.u32 256, 8
    %439 = vbcast.lane.b32.xlu0 %v352, %s438
    %v440 = vpop.permute.xlu0 %439
    %442 = vbcast.lane.b32.xlu0 %v353, 256
    %v443 = vpop.permute.xlu0 %442
    %s445 = sor.u32 256, 8
    %446 = vbcast.lane.b32.xlu0 %v353, %s445
    %v447 = vpop.permute.xlu0 %446
    %449 = vbcast.lane.b32.xlu0 %v354, 256
    %v450 = vpop.permute.xlu0 %449
    %s452 = sor.u32 256, 8
    %453 = vbcast.lane.b32.xlu0 %v354, %s452
    %v454 = vpop.permute.xlu0 %453
    %456 = vbcast.lane.b32.xlu0 %v355, 256
    %v457 = vpop.permute.xlu0 %456
    %s459 = sor.u32 256, 8
    %460 = vbcast.lane.b32.xlu0 %v355, %s459
    %v461 = vpop.permute.xlu0 %460
    %463 = vbcast.lane.b32.xlu0 %v356, 256
    %v464 = vpop.permute.xlu0 %463
    %s466 = sor.u32 256, 8
    %467 = vbcast.lane.b32.xlu0 %v356, %s466
    %v468 = vpop.permute.xlu0 %467
    %v469 = vmul.f32 %v132, %v359
    %v470 = vmul.f32 %v133, %v363
    %v471 = vmul.f32 %v134, %v366
    %v472 = vmul.f32 %v135, %v370
    %v473 = vmul.f32 %v136, %v373
    %v474 = vmul.f32 %v137, %v377
    %v475 = vmul.f32 %v138, %v380
    %v476 = vmul.f32 %v139, %v384
    %v477 = vmul.f32 %v140, %v387
    %v478 = vmul.f32 %v141, %v391
    %v479 = vmul.f32 %v142, %v394
    %v480 = vmul.f32 %v143, %v398
    %v481 = vmul.f32 %v144, %v401
    %v482 = vmul.f32 %v145, %v405
    %v483 = vmul.f32 %v146, %v408
    %v484 = vmul.f32 %v147, %v412
    %v485 = vmul.f32 %v148, %v415
    %v486 = vmul.f32 %v149, %v419
    %v487 = vmul.f32 %v150, %v422
    %v488 = vmul.f32 %v151, %v426
    %v489 = vmul.f32 %v152, %v429
    %v490 = vmul.f32 %v153, %v433
    %v491 = vmul.f32 %v154, %v436
    %v492 = vmul.f32 %v155, %v440
    %v493 = vmul.f32 %v156, %v443
    %v494 = vmul.f32 %v157, %v447
    %v495 = vmul.f32 %v158, %v450
    %v496 = vmul.f32 %v159, %v454
    %v497 = vmul.f32 %v160, %v457
    %v498 = vmul.f32 %v161, %v461
    %v499 = vmul.f32 %v162, %v464
    %v500 = vmul.f32 %v163, %v468
    %v501 = vrsqrt.pop %v325
    %v502 = vrsqrt.pop %v326
    %v503 = vrsqrt.pop %v327
    %v504 = vrsqrt.pop %v328
    %v505 = vrsqrt.pop %v329
    %v506 = vrsqrt.pop %v330
    %v507 = vrsqrt.pop %v331
    %v508 = vrsqrt.pop %v332
    %v509 = vrsqrt.pop %v333
    %v510 = vrsqrt.pop %v334
    %v511 = vrsqrt.pop %v335
    %v512 = vrsqrt.pop %v336
    %v513 = vrsqrt.pop %v337
    %v514 = vrsqrt.pop %v338
    %v515 = vrsqrt.pop %v339
    %v516 = vrsqrt.pop %v340
    %v517 = vmul.f32 %v116, %v501
    %v518 = vmul.f32 %v117, %v502
    %v519 = vmul.f32 %v118, %v503
    %v520 = vmul.f32 %v119, %v504
    %v521 = vmul.f32 %v120, %v505
    %v522 = vmul.f32 %v121, %v506
    %v523 = vmul.f32 %v122, %v507
    %v524 = vmul.f32 %v123, %v508
    %v525 = vmul.f32 %v124, %v509
    %v526 = vmul.f32 %v125, %v510
    %v527 = vmul.f32 %v126, %v511
    %v528 = vmul.f32 %v127, %v512
    %v529 = vmul.f32 %v128, %v513
    %v530 = vmul.f32 %v129, %v514
    %v531 = vmul.f32 %v130, %v515
    %v532 = vmul.f32 %v131, %v516
    %v533 = vsel %vm164, %v517, 0.0
    %v534 = vrot.slane %v533, 4
    %v535 = vadd.f32 %v533, %v534
    %v536 = vrot.slane %v535, 2
    %v537 = vadd.f32 %v535, %v536
    %v538 = vrot.slane %v537, 1
    %v539 = vadd.f32 %v537, %v538
    %v540 = vsel %vm164, %v518, 0.0
    %v541 = vrot.slane %v540, 4
    %v542 = vadd.f32 %v540, %v541
    %v543 = vrot.slane %v542, 2
    %v544 = vadd.f32 %v542, %v543
    %v545 = vrot.slane %v544, 1
    %v546 = vadd.f32 %v544, %v545
    %v547 = vsel %vm164, %v519, 0.0
    %v548 = vrot.slane %v547, 4
    %v549 = vadd.f32 %v547, %v548
    %v550 = vrot.slane %v549, 2
    %v551 = vadd.f32 %v549, %v550
    %v552 = vrot.slane %v551, 1
    %v553 = vadd.f32 %v551, %v552
    %v554 = vsel %vm164, %v520, 0.0
    %v555 = vrot.slane %v554, 4
    %v556 = vadd.f32 %v554, %v555
    %v557 = vrot.slane %v556, 2
    %v558 = vadd.f32 %v556, %v557
    %v559 = vrot.slane %v558, 1
    %v560 = vadd.f32 %v558, %v559
    %v561 = vsel %vm164, %v521, 0.0
    %v562 = vrot.slane %v561, 4
    %v563 = vadd.f32 %v561, %v562
    %v564 = vrot.slane %v563, 2
    %v565 = vadd.f32 %v563, %v564
    %v566 = vrot.slane %v565, 1
    %v567 = vadd.f32 %v565, %v566
    %v568 = vsel %vm164, %v522, 0.0
    %v569 = vrot.slane %v568, 4
    %v570 = vadd.f32 %v568, %v569
    %v571 = vrot.slane %v570, 2
    %v572 = vadd.f32 %v570, %v571
    %v573 = vrot.slane %v572, 1
    %v574 = vadd.f32 %v572, %v573
    %v575 = vsel %vm164, %v523, 0.0
    %v576 = vrot.slane %v575, 4
    %v577 = vadd.f32 %v575, %v576
    %v578 = vrot.slane %v577, 2
    %v579 = vadd.f32 %v577, %v578
    %v580 = vrot.slane %v579, 1
    %v581 = vadd.f32 %v579, %v580
    %v582 = vsel %vm164, %v524, 0.0
    %v583 = vrot.slane %v582, 4
    %v584 = vadd.f32 %v582, %v583
    %v585 = vrot.slane %v584, 2
    %v586 = vadd.f32 %v584, %v585
    %v587 = vrot.slane %v586, 1
    %v588 = vadd.f32 %v586, %v587
    %v589 = vsel %vm164, %v525, 0.0
    %v590 = vrot.slane %v589, 4
    %v591 = vadd.f32 %v589, %v590
    %v592 = vrot.slane %v591, 2
    %v593 = vadd.f32 %v591, %v592
    %v594 = vrot.slane %v593, 1
    %v595 = vadd.f32 %v593, %v594
    %v596 = vsel %vm164, %v526, 0.0
    %v597 = vrot.slane %v596, 4
    %v598 = vadd.f32 %v596, %v597
    %v599 = vrot.slane %v598, 2
    %v600 = vadd.f32 %v598, %v599
    %v601 = vrot.slane %v600, 1
    %v602 = vadd.f32 %v600, %v601
    %v603 = vsel %vm164, %v527, 0.0
    %v604 = vrot.slane %v603, 4
    %v605 = vadd.f32 %v603, %v604
    %v606 = vrot.slane %v605, 2
    %v607 = vadd.f32 %v605, %v606
    %v608 = vrot.slane %v607, 1
    %v609 = vadd.f32 %v607, %v608
    %v610 = vsel %vm164, %v528, 0.0
    %v611 = vrot.slane %v610, 4
    %v612 = vadd.f32 %v610, %v611
    %v613 = vrot.slane %v612, 2
    %v614 = vadd.f32 %v612, %v613
    %v615 = vrot.slane %v614, 1
    %v616 = vadd.f32 %v614, %v615
    %v617 = vsel %vm164, %v529, 0.0
    %v618 = vrot.slane %v617, 4
    %v619 = vadd.f32 %v617, %v618
    %v620 = vrot.slane %v619, 2
    %v621 = vadd.f32 %v619, %v620
    %v622 = vrot.slane %v621, 1
    %v623 = vadd.f32 %v621, %v622
    %v624 = vsel %vm164, %v530, 0.0
    %v625 = vrot.slane %v624, 4
    %v626 = vadd.f32 %v624, %v625
    %v627 = vrot.slane %v626, 2
    %v628 = vadd.f32 %v626, %v627
    %v629 = vrot.slane %v628, 1
    %v630 = vadd.f32 %v628, %v629
    %v631 = vsel %vm164, %v531, 0.0
    %v632 = vrot.slane %v631, 4
    %v633 = vadd.f32 %v631, %v632
    %v634 = vrot.slane %v633, 2
    %v635 = vadd.f32 %v633, %v634
    %v636 = vrot.slane %v635, 1
    %v637 = vadd.f32 %v635, %v636
    %v638 = vsel %vm164, %v532, 0.0
    %v639 = vrot.slane %v638, 4
    %v640 = vadd.f32 %v638, %v639
    %v641 = vrot.slane %v640, 2
    %v642 = vadd.f32 %v640, %v641
    %v643 = vrot.slane %v642, 1
    %v644 = vadd.f32 %v642, %v643
    %v645 = vmul.f32 %v539, 0.125
    %v646 = vmul.f32 %v546, 0.125
    %v647 = vmul.f32 %v553, 0.125
    %v648 = vmul.f32 %v560, 0.125
    %v649 = vmul.f32 %v567, 0.125
    %v650 = vmul.f32 %v574, 0.125
    %v651 = vmul.f32 %v581, 0.125
    %v652 = vmul.f32 %v588, 0.125
    %v653 = vmul.f32 %v595, 0.125
    %v654 = vmul.f32 %v602, 0.125
    %v655 = vmul.f32 %v609, 0.125
    %v656 = vmul.f32 %v616, 0.125
    %v657 = vmul.f32 %v623, 0.125
    %v658 = vmul.f32 %v630, 0.125
    %v659 = vmul.f32 %v637, 0.125
    %v660 = vmul.f32 %v644, 0.125
    %662 = vbcast.lane.b32.xlu0 %v645, 256
    %v663 = vpop.permute.xlu0 %662
    %s665 = sor.u32 256, 8
    %666 = vbcast.lane.b32.xlu0 %v645, %s665
    %v667 = vpop.permute.xlu0 %666
    %669 = vbcast.lane.b32.xlu0 %v646, 256
    %v670 = vpop.permute.xlu0 %669
    %s672 = sor.u32 256, 8
    %673 = vbcast.lane.b32.xlu0 %v646, %s672
    %v674 = vpop.permute.xlu0 %673
    %676 = vbcast.lane.b32.xlu0 %v647, 256
    %v677 = vpop.permute.xlu0 %676
    %s679 = sor.u32 256, 8
    %680 = vbcast.lane.b32.xlu0 %v647, %s679
    %v681 = vpop.permute.xlu0 %680
    %683 = vbcast.lane.b32.xlu0 %v648, 256
    %v684 = vpop.permute.xlu0 %683
    %s686 = sor.u32 256, 8
    %687 = vbcast.lane.b32.xlu0 %v648, %s686
    %v688 = vpop.permute.xlu0 %687
    %690 = vbcast.lane.b32.xlu0 %v649, 256
    %v691 = vpop.permute.xlu0 %690
    %s693 = sor.u32 256, 8
    %694 = vbcast.lane.b32.xlu0 %v649, %s693
    %v695 = vpop.permute.xlu0 %694
    %697 = vbcast.lane.b32.xlu0 %v650, 256
    %v698 = vpop.permute.xlu0 %697
    %s700 = sor.u32 256, 8
    %701 = vbcast.lane.b32.xlu0 %v650, %s700
    %v702 = vpop.permute.xlu0 %701
    %704 = vbcast.lane.b32.xlu0 %v651, 256
    %v705 = vpop.permute.xlu0 %704
    %s707 = sor.u32 256, 8
    %708 = vbcast.lane.b32.xlu0 %v651, %s707
    %v709 = vpop.permute.xlu0 %708
    %711 = vbcast.lane.b32.xlu0 %v652, 256
    %v712 = vpop.permute.xlu0 %711
    %s714 = sor.u32 256, 8
    %715 = vbcast.lane.b32.xlu0 %v652, %s714
    %v716 = vpop.permute.xlu0 %715
    %718 = vbcast.lane.b32.xlu0 %v653, 256
    %v719 = vpop.permute.xlu0 %718
    %s721 = sor.u32 256, 8
    %722 = vbcast.lane.b32.xlu0 %v653, %s721
    %v723 = vpop.permute.xlu0 %722
    %725 = vbcast.lane.b32.xlu0 %v654, 256
    %v726 = vpop.permute.xlu0 %725
    %s728 = sor.u32 256, 8
    %729 = vbcast.lane.b32.xlu0 %v654, %s728
    %v730 = vpop.permute.xlu0 %729
    %732 = vbcast.lane.b32.xlu0 %v655, 256
    %v733 = vpop.permute.xlu0 %732
    %s735 = sor.u32 256, 8
    %736 = vbcast.lane.b32.xlu0 %v655, %s735
    %v737 = vpop.permute.xlu0 %736
    %739 = vbcast.lane.b32.xlu0 %v656, 256
    %v740 = vpop.permute.xlu0 %739
    %s742 = sor.u32 256, 8
    %743 = vbcast.lane.b32.xlu0 %v656, %s742
    %v744 = vpop.permute.xlu0 %743
    %746 = vbcast.lane.b32.xlu0 %v657, 256
    %v747 = vpop.permute.xlu0 %746
    %s749 = sor.u32 256, 8
    %750 = vbcast.lane.b32.xlu0 %v657, %s749
    %v751 = vpop.permute.xlu0 %750
    %753 = vbcast.lane.b32.xlu0 %v658, 256
    %v754 = vpop.permute.xlu0 %753
    %s756 = sor.u32 256, 8
    %757 = vbcast.lane.b32.xlu0 %v658, %s756
    %v758 = vpop.permute.xlu0 %757
    %760 = vbcast.lane.b32.xlu0 %v659, 256
    %v761 = vpop.permute.xlu0 %760
    %s763 = sor.u32 256, 8
    %764 = vbcast.lane.b32.xlu0 %v659, %s763
    %v765 = vpop.permute.xlu0 %764
    %767 = vbcast.lane.b32.xlu0 %v660, 256
    %v768 = vpop.permute.xlu0 %767
    %s770 = sor.u32 256, 8
    %771 = vbcast.lane.b32.xlu0 %v660, %s770
    %v772 = vpop.permute.xlu0 %771
    %v773 = vmul.f32 %v663, %v469
    %v774 = vmul.f32 %v667, %v470
    %v775 = vmul.f32 %v670, %v471
    %v776 = vmul.f32 %v674, %v472
    %v777 = vmul.f32 %v677, %v473
    %v778 = vmul.f32 %v681, %v474
    %v779 = vmul.f32 %v684, %v475
    %v780 = vmul.f32 %v688, %v476
    %v781 = vmul.f32 %v691, %v477
    %v782 = vmul.f32 %v695, %v478
    %v783 = vmul.f32 %v698, %v479
    %v784 = vmul.f32 %v702, %v480
    %v785 = vmul.f32 %v705, %v481
    %v786 = vmul.f32 %v709, %v482
    %v787 = vmul.f32 %v712, %v483
    %v788 = vmul.f32 %v716, %v484
    %v789 = vmul.f32 %v719, %v485
    %v790 = vmul.f32 %v723, %v486
    %v791 = vmul.f32 %v726, %v487
    %v792 = vmul.f32 %v730, %v488
    %v793 = vmul.f32 %v733, %v489
    %v794 = vmul.f32 %v737, %v490
    %v795 = vmul.f32 %v740, %v491
    %v796 = vmul.f32 %v744, %v492
    %v797 = vmul.f32 %v747, %v493
    %v798 = vmul.f32 %v751, %v494
    %v799 = vmul.f32 %v754, %v495
    %v800 = vmul.f32 %v758, %v496
    %v801 = vmul.f32 %v761, %v497
    %v802 = vmul.f32 %v765, %v498
    %v803 = vmul.f32 %v768, %v499
    %v804 = vmul.f32 %v772, %v500
    %v805 = vsel %vm164, %v773, 0.0
    %v806 = vsel %vm164, %v774, 0.0
    %v807 = vadd.f32 %v805, %v806
    %v808 = vrot.slane %v807, 4
    %v809 = vadd.f32 %v807, %v808
    %v810 = vrot.slane %v809, 2
    %v811 = vadd.f32 %v809, %v810
    %v812 = vrot.slane %v811, 1
    %v813 = vadd.f32 %v811, %v812
    %v814 = vsel %vm164, %v775, 0.0
    %v815 = vsel %vm164, %v776, 0.0
    %v816 = vadd.f32 %v814, %v815
    %v817 = vrot.slane %v816, 4
    %v818 = vadd.f32 %v816, %v817
    %v819 = vrot.slane %v818, 2
    %v820 = vadd.f32 %v818, %v819
    %v821 = vrot.slane %v820, 1
    %v822 = vadd.f32 %v820, %v821
    %v823 = vsel %vm164, %v777, 0.0
    %v824 = vsel %vm164, %v778, 0.0
    %v825 = vadd.f32 %v823, %v824
    %v826 = vrot.slane %v825, 4
    %v827 = vadd.f32 %v825, %v826
    %v828 = vrot.slane %v827, 2
    %v829 = vadd.f32 %v827, %v828
    %v830 = vrot.slane %v829, 1
    %v831 = vadd.f32 %v829, %v830
    %v832 = vsel %vm164, %v779, 0.0
    %v833 = vsel %vm164, %v780, 0.0
    %v834 = vadd.f32 %v832, %v833
    %v835 = vrot.slane %v834, 4
    %v836 = vadd.f32 %v834, %v835
    %v837 = vrot.slane %v836, 2
    %v838 = vadd.f32 %v836, %v837
    %v839 = vrot.slane %v838, 1
    %v840 = vadd.f32 %v838, %v839
    %v841 = vsel %vm164, %v781, 0.0
    %v842 = vsel %vm164, %v782, 0.0
    %v843 = vadd.f32 %v841, %v842
    %v844 = vrot.slane %v843, 4
    %v845 = vadd.f32 %v843, %v844
    %v846 = vrot.slane %v845, 2
    %v847 = vadd.f32 %v845, %v846
    %v848 = vrot.slane %v847, 1
    %v849 = vadd.f32 %v847, %v848
    %v850 = vsel %vm164, %v783, 0.0
    %v851 = vsel %vm164, %v784, 0.0
    %v852 = vadd.f32 %v850, %v851
    %v853 = vrot.slane %v852, 4
    %v854 = vadd.f32 %v852, %v853
    %v855 = vrot.slane %v854, 2
    %v856 = vadd.f32 %v854, %v855
    %v857 = vrot.slane %v856, 1
    %v858 = vadd.f32 %v856, %v857
    %v859 = vsel %vm164, %v785, 0.0
    %v860 = vsel %vm164, %v786, 0.0
    %v861 = vadd.f32 %v859, %v860
    %v862 = vrot.slane %v861, 4
    %v863 = vadd.f32 %v861, %v862
    %v864 = vrot.slane %v863, 2
    %v865 = vadd.f32 %v863, %v864
    %v866 = vrot.slane %v865, 1
    %v867 = vadd.f32 %v865, %v866
    %v868 = vsel %vm164, %v787, 0.0
    %v869 = vsel %vm164, %v788, 0.0
    %v870 = vadd.f32 %v868, %v869
    %v871 = vrot.slane %v870, 4
    %v872 = vadd.f32 %v870, %v871
    %v873 = vrot.slane %v872, 2
    %v874 = vadd.f32 %v872, %v873
    %v875 = vrot.slane %v874, 1
    %v876 = vadd.f32 %v874, %v875
    %v877 = vsel %vm164, %v789, 0.0
    %v878 = vsel %vm164, %v790, 0.0
    %v879 = vadd.f32 %v877, %v878
    %v880 = vrot.slane %v879, 4
    %v881 = vadd.f32 %v879, %v880
    %v882 = vrot.slane %v881, 2
    %v883 = vadd.f32 %v881, %v882
    %v884 = vrot.slane %v883, 1
    %v885 = vadd.f32 %v883, %v884
    %v886 = vsel %vm164, %v791, 0.0
    %v887 = vsel %vm164, %v792, 0.0
    %v888 = vadd.f32 %v886, %v887
    %v889 = vrot.slane %v888, 4
    %v890 = vadd.f32 %v888, %v889
    %v891 = vrot.slane %v890, 2
    %v892 = vadd.f32 %v890, %v891
    %v893 = vrot.slane %v892, 1
    %v894 = vadd.f32 %v892, %v893
    %v895 = vsel %vm164, %v793, 0.0
    %v896 = vsel %vm164, %v794, 0.0
    %v897 = vadd.f32 %v895, %v896
    %v898 = vrot.slane %v897, 4
    %v899 = vadd.f32 %v897, %v898
    %v900 = vrot.slane %v899, 2
    %v901 = vadd.f32 %v899, %v900
    %v902 = vrot.slane %v901, 1
    %v903 = vadd.f32 %v901, %v902
    %v904 = vsel %vm164, %v795, 0.0
    %v905 = vsel %vm164, %v796, 0.0
    %v906 = vadd.f32 %v904, %v905
    %v907 = vrot.slane %v906, 4
    %v908 = vadd.f32 %v906, %v907
    %v909 = vrot.slane %v908, 2
    %v910 = vadd.f32 %v908, %v909
    %v911 = vrot.slane %v910, 1
    %v912 = vadd.f32 %v910, %v911
    %v913 = vsel %vm164, %v797, 0.0
    %v914 = vsel %vm164, %v798, 0.0
    %v915 = vadd.f32 %v913, %v914
    %v916 = vrot.slane %v915, 4
    %v917 = vadd.f32 %v915, %v916
    %v918 = vrot.slane %v917, 2
    %v919 = vadd.f32 %v917, %v918
    %v920 = vrot.slane %v919, 1
    %v921 = vadd.f32 %v919, %v920
    %v922 = vsel %vm164, %v799, 0.0
    %v923 = vsel %vm164, %v800, 0.0
    %v924 = vadd.f32 %v922, %v923
    %v925 = vrot.slane %v924, 4
    %v926 = vadd.f32 %v924, %v925
    %v927 = vrot.slane %v926, 2
    %v928 = vadd.f32 %v926, %v927
    %v929 = vrot.slane %v928, 1
    %v930 = vadd.f32 %v928, %v929
    %v931 = vsel %vm164, %v801, 0.0
    %v932 = vsel %vm164, %v802, 0.0
    %v933 = vadd.f32 %v931, %v932
    %v934 = vrot.slane %v933, 4
    %v935 = vadd.f32 %v933, %v934
    %v936 = vrot.slane %v935, 2
    %v937 = vadd.f32 %v935, %v936
    %v938 = vrot.slane %v937, 1
    %v939 = vadd.f32 %v937, %v938
    %v940 = vsel %vm164, %v803, 0.0
    %v941 = vsel %vm164, %v804, 0.0
    %v942 = vadd.f32 %v940, %v941
    %v943 = vrot.slane %v942, 4
    %v944 = vadd.f32 %v942, %v943
    %v945 = vrot.slane %v944, 2
    %v946 = vadd.f32 %v944, %v945
    %v947 = vrot.slane %v946, 1
    %v948 = vadd.f32 %v946, %v947
    %v949 = vld [vmem:[#allocation5] sm:$0xff]
    %v950 = vld [vmem:[#allocation5 + $0x8] sm:$0xff]
    %v951 = vld [vmem:[#allocation5 + $0x10] sm:$0xff]
    %v952 = vld [vmem:[#allocation5 + $0x18] sm:$0xff]
    %v953 = vld [vmem:[#allocation5 + $0x20] sm:$0xff]
    %v954 = vld [vmem:[#allocation5 + $0x28] sm:$0xff]
    %v955 = vld [vmem:[#allocation5 + $0x30] sm:$0xff]
    %v956 = vld [vmem:[#allocation5 + $0x38] sm:$0xff]
    %v957 = vld [vmem:[#allocation5 + $0x40] sm:$0xff]
    %v958 = vld [vmem:[#allocation5 + $0x48] sm:$0xff]
    %v959 = vld [vmem:[#allocation5 + $0x50] sm:$0xff]
    %v960 = vld [vmem:[#allocation5 + $0x58] sm:$0xff]
    %v961 = vld [vmem:[#allocation5 + $0x60] sm:$0xff]
    %v962 = vld [vmem:[#allocation5 + $0x68] sm:$0xff]
    %v963 = vld [vmem:[#allocation5 + $0x70] sm:$0xff]
    %v964 = vld [vmem:[#allocation5 + $0x78] sm:$0xff]
    %v965 = vld [vmem:[#allocation7] sm:$0xff]
    %v966 = vld [vmem:[#allocation7 + $0x8] sm:$0xff]
    %v967 = vld [vmem:[#allocation7 + $0x10] sm:$0xff]
    %v968 = vld [vmem:[#allocation7 + $0x18] sm:$0xff]
    %v969 = vld [vmem:[#allocation7 + $0x20] sm:$0xff]
    %v970 = vld [vmem:[#allocation7 + $0x28] sm:$0xff]
    %v971 = vld [vmem:[#allocation7 + $0x30] sm:$0xff]
    %v972 = vld [vmem:[#allocation7 + $0x38] sm:$0xff]
    %v973 = vld [vmem:[#allocation7 + $0x40] sm:$0xff]
    %v974 = vld [vmem:[#allocation7 + $0x48] sm:$0xff]
    %v975 = vld [vmem:[#allocation7 + $0x50] sm:$0xff]
    %v976 = vld [vmem:[#allocation7 + $0x58] sm:$0xff]
    %v977 = vld [vmem:[#allocation7 + $0x60] sm:$0xff]
    %v978 = vld [vmem:[#allocation7 + $0x68] sm:$0xff]
    %v979 = vld [vmem:[#allocation7 + $0x70] sm:$0xff]
    %v980 = vld [vmem:[#allocation7 + $0x78] sm:$0xff]
    %vm981 = vcmask 64512
    %v982 = vsel %vm981, %v949, 0.0
    %v983 = vrot.slane %v982, 4
    %v984 = vadd.f32 %v982, %v983
    %v985 = vrot.slane %v984, 2
    %v986 = vadd.f32 %v984, %v985
    %v987 = vrot.slane %v986, 1
    %v988 = vadd.f32 %v986, %v987
    %v989 = vsel %vm981, %v950, 0.0
    %v990 = vrot.slane %v989, 4
    %v991 = vadd.f32 %v989, %v990
    %v992 = vrot.slane %v991, 2
    %v993 = vadd.f32 %v991, %v992
    %v994 = vrot.slane %v993, 1
    %v995 = vadd.f32 %v993, %v994
    %v996 = vsel %vm981, %v951, 0.0
    %v997 = vrot.slane %v996, 4
    %v998 = vadd.f32 %v996, %v997
    %v999 = vrot.slane %v998, 2
    %v1000 = vadd.f32 %v998, %v999
    %v1001 = vrot.slane %v1000, 1
    %v1002 = vadd.f32 %v1000, %v1001
    %v1003 = vsel %vm981, %v952, 0.0
    %v1004 = vrot.slane %v1003, 4
    %v1005 = vadd.f32 %v1003, %v1004
    %v1006 = vrot.slane %v1005, 2
    %v1007 = vadd.f32 %v1005, %v1006
    %v1008 = vrot.slane %v1007, 1
    %v1009 = vadd.f32 %v1007, %v1008
    %v1010 = vsel %vm981, %v953, 0.0
    %v1011 = vrot.slane %v1010, 4
    %v1012 = vadd.f32 %v1010, %v1011
    %v1013 = vrot.slane %v1012, 2
    %v1014 = vadd.f32 %v1012, %v1013
    %v1015 = vrot.slane %v1014, 1
    %v1016 = vadd.f32 %v1014, %v1015
    %v1017 = vsel %vm981, %v954, 0.0
    %v1018 = vrot.slane %v1017, 4
    %v1019 = vadd.f32 %v1017, %v1018
    %v1020 = vrot.slane %v1019, 2
    %v1021 = vadd.f32 %v1019, %v1020
    %v1022 = vrot.slane %v1021, 1
    %v1023 = vadd.f32 %v1021, %v1022
    %v1024 = vsel %vm981, %v955, 0.0
    %v1025 = vrot.slane %v1024, 4
    %v1026 = vadd.f32 %v1024, %v1025
    %v1027 = vrot.slane %v1026, 2
    %v1028 = vadd.f32 %v1026, %v1027
    %v1029 = vrot.slane %v1028, 1
    %v1030 = vadd.f32 %v1028, %v1029
    %v1031 = vsel %vm981, %v956, 0.0
    %v1032 = vrot.slane %v1031, 4
    %v1033 = vadd.f32 %v1031, %v1032
    %v1034 = vrot.slane %v1033, 2
    %v1035 = vadd.f32 %v1033, %v1034
    %v1036 = vrot.slane %v1035, 1
    %v1037 = vadd.f32 %v1035, %v1036
    %v1038 = vsel %vm981, %v957, 0.0
    %v1039 = vrot.slane %v1038, 4
    %v1040 = vadd.f32 %v1038, %v1039
    %v1041 = vrot.slane %v1040, 2
    %v1042 = vadd.f32 %v1040, %v1041
    %v1043 = vrot.slane %v1042, 1
    %v1044 = vadd.f32 %v1042, %v1043
    %v1045 = vsel %vm981, %v958, 0.0
    %v1046 = vrot.slane %v1045, 4
    %v1047 = vadd.f32 %v1045, %v1046
    %v1048 = vrot.slane %v1047, 2
    %v1049 = vadd.f32 %v1047, %v1048
    %v1050 = vrot.slane %v1049, 1
    %v1051 = vadd.f32 %v1049, %v1050
    %v1052 = vsel %vm981, %v959, 0.0
    %v1053 = vrot.slane %v1052, 4
    %v1054 = vadd.f32 %v1052, %v1053
    %v1055 = vrot.slane %v1054, 2
    %v1056 = vadd.f32 %v1054, %v1055
    %v1057 = vrot.slane %v1056, 1
    %v1058 = vadd.f32 %v1056, %v1057
    %v1059 = vsel %vm981, %v960, 0.0
    %v1060 = vrot.slane %v1059, 4
    %v1061 = vadd.f32 %v1059, %v1060
    %v1062 = vrot.slane %v1061, 2
    %v1063 = vadd.f32 %v1061, %v1062
    %v1064 = vrot.slane %v1063, 1
    %v1065 = vadd.f32 %v1063, %v1064
    %v1066 = vsel %vm981, %v961, 0.0
    %v1067 = vrot.slane %v1066, 4
    %v1068 = vadd.f32 %v1066, %v1067
    %v1069 = vrot.slane %v1068, 2
    %v1070 = vadd.f32 %v1068, %v1069
    %v1071 = vrot.slane %v1070, 1
    %v1072 = vadd.f32 %v1070, %v1071
    %v1073 = vsel %vm981, %v962, 0.0
    %v1074 = vrot.slane %v1073, 4
    %v1075 = vadd.f32 %v1073, %v1074
    %v1076 = vrot.slane %v1075, 2
    %v1077 = vadd.f32 %v1075, %v1076
    %v1078 = vrot.slane %v1077, 1
    %v1079 = vadd.f32 %v1077, %v1078
    %v1080 = vsel %vm981, %v963, 0.0
    %v1081 = vrot.slane %v1080, 4
    %v1082 = vadd.f32 %v1080, %v1081
    %v1083 = vrot.slane %v1082, 2
    %v1084 = vadd.f32 %v1082, %v1083
    %v1085 = vrot.slane %v1084, 1
    %v1086 = vadd.f32 %v1084, %v1085
    %v1087 = vsel %vm981, %v964, 0.0
    %v1088 = vrot.slane %v1087, 4
    %v1089 = vadd.f32 %v1087, %v1088
    %v1090 = vrot.slane %v1089, 2
    %v1091 = vadd.f32 %v1089, %v1090
    %v1092 = vrot.slane %v1091, 1
    %v1093 = vadd.f32 %v1091, %v1092
    %v1094 = vmax.f32 %v988, 1.0
    %v1095 = vmax.f32 %v995, 1.0
    %v1096 = vmax.f32 %v1002, 1.0
    %v1097 = vmax.f32 %v1009, 1.0
    %v1098 = vmax.f32 %v1016, 1.0
    %v1099 = vmax.f32 %v1023, 1.0
    %v1100 = vmax.f32 %v1030, 1.0
    %v1101 = vmax.f32 %v1037, 1.0
    %v1102 = vmax.f32 %v1044, 1.0
    %v1103 = vmax.f32 %v1051, 1.0
    %v1104 = vmax.f32 %v1058, 1.0
    %v1105 = vmax.f32 %v1065, 1.0
    %v1106 = vmax.f32 %v1072, 1.0
    %v1107 = vmax.f32 %v1079, 1.0
    %v1108 = vmax.f32 %v1086, 1.0
    %v1109 = vmax.f32 %v1093, 1.0
    %1110 = vadd.xlane.f32.xlu0 %v982
    %v1111 = vpop.xlane.xlu0 %1110
    %1112 = vadd.xlane.f32.xlu0 %v989
    %v1113 = vpop.xlane.xlu0 %1112
    %1114 = vadd.xlane.f32.xlu0 %v996
    %v1115 = vpop.xlane.xlu0 %1114
    %1116 = vadd.xlane.f32.xlu0 %v1003
    %v1117 = vpop.xlane.xlu0 %1116
    %1118 = vadd.xlane.f32.xlu0 %v1010
    %v1119 = vpop.xlane.xlu0 %1118
    %1120 = vadd.xlane.f32.xlu0 %v1017
    %v1121 = vpop.xlane.xlu0 %1120
    %1122 = vadd.xlane.f32.xlu0 %v1024
    %v1123 = vpop.xlane.xlu0 %1122
    %1124 = vadd.xlane.f32.xlu0 %v1031
    %v1125 = vpop.xlane.xlu0 %1124
    %1126 = vadd.xlane.f32.xlu0 %v1038
    %v1127 = vpop.xlane.xlu0 %1126
    %1128 = vadd.xlane.f32.xlu0 %v1045
    %v1129 = vpop.xlane.xlu0 %1128
    %1130 = vadd.xlane.f32.xlu0 %v1052
    %v1131 = vpop.xlane.xlu0 %1130
    %1132 = vadd.xlane.f32.xlu0 %v1059
    %v1133 = vpop.xlane.xlu0 %1132
    %1134 = vadd.xlane.f32.xlu0 %v1066
    %v1135 = vpop.xlane.xlu0 %1134
    %1136 = vadd.xlane.f32.xlu0 %v1073
    %v1137 = vpop.xlane.xlu0 %1136
    %1138 = vadd.xlane.f32.xlu0 %v1080
    %v1139 = vpop.xlane.xlu0 %1138
    %1140 = vadd.xlane.f32.xlu0 %v1087
    %v1141 = vpop.xlane.xlu0 %1140
    %v1142 = vmax.f32 %v1111, 1.0
    %v1143 = vmax.f32 %v1113, 1.0
    %v1144 = vmax.f32 %v1115, 1.0
    %v1145 = vmax.f32 %v1117, 1.0
    %v1146 = vmax.f32 %v1119, 1.0
    %v1147 = vmax.f32 %v1121, 1.0
    %v1148 = vmax.f32 %v1123, 1.0
    %v1149 = vmax.f32 %v1125, 1.0
    %v1150 = vmax.f32 %v1127, 1.0
    %v1151 = vmax.f32 %v1129, 1.0
    %v1152 = vmax.f32 %v1131, 1.0
    %v1153 = vmax.f32 %v1133, 1.0
    %v1154 = vmax.f32 %v1135, 1.0
    %v1155 = vmax.f32 %v1137, 1.0
    %v1156 = vmax.f32 %v1139, 1.0
    %v1157 = vmax.f32 %v1141, 1.0
    %v1158 = vrsqrt.pop %v1094
    %v1159 = vrsqrt.pop %v1095
    %v1160 = vrsqrt.pop %v1096
    %v1161 = vrsqrt.pop %v1097
    %v1162 = vrsqrt.pop %v1098
    %v1163 = vrsqrt.pop %v1099
    %v1164 = vrsqrt.pop %v1100
    %v1165 = vrsqrt.pop %v1101
    %v1166 = vrsqrt.pop %v1102
    %v1167 = vrsqrt.pop %v1103
    %v1168 = vrsqrt.pop %v1104
    %v1169 = vrsqrt.pop %v1105
    %v1170 = vrsqrt.pop %v1106
    %v1171 = vrsqrt.pop %v1107
    %v1172 = vrsqrt.pop %v1108
    %v1173 = vrsqrt.pop %v1109
    %1175 = vbcast.lane.b32.xlu0 %v1158, 256
    %v1176 = vpop.permute.xlu0 %1175
    %1178 = vbcast.lane.b32.xlu0 %v1159, 256
    %v1179 = vpop.permute.xlu0 %1178
    %1181 = vbcast.lane.b32.xlu0 %v1160, 256
    %v1182 = vpop.permute.xlu0 %1181
    %1184 = vbcast.lane.b32.xlu0 %v1161, 256
    %v1185 = vpop.permute.xlu0 %1184
    %1187 = vbcast.lane.b32.xlu0 %v1162, 256
    %v1188 = vpop.permute.xlu0 %1187
    %1190 = vbcast.lane.b32.xlu0 %v1163, 256
    %v1191 = vpop.permute.xlu0 %1190
    %1193 = vbcast.lane.b32.xlu0 %v1164, 256
    %v1194 = vpop.permute.xlu0 %1193
    %1196 = vbcast.lane.b32.xlu0 %v1165, 256
    %v1197 = vpop.permute.xlu0 %1196
    %1199 = vbcast.lane.b32.xlu0 %v1166, 256
    %v1200 = vpop.permute.xlu0 %1199
    %1202 = vbcast.lane.b32.xlu0 %v1167, 256
    %v1203 = vpop.permute.xlu0 %1202
    %1205 = vbcast.lane.b32.xlu0 %v1168, 256
    %v1206 = vpop.permute.xlu0 %1205
    %1208 = vbcast.lane.b32.xlu0 %v1169, 256
    %v1209 = vpop.permute.xlu0 %1208
    %1211 = vbcast.lane.b32.xlu0 %v1170, 256
    %v1212 = vpop.permute.xlu0 %1211
    %1214 = vbcast.lane.b32.xlu0 %v1171, 256
    %v1215 = vpop.permute.xlu0 %1214
    %1217 = vbcast.lane.b32.xlu0 %v1172, 256
    %v1218 = vpop.permute.xlu0 %1217
    %1220 = vbcast.lane.b32.xlu0 %v1173, 256
    %v1221 = vpop.permute.xlu0 %1220
    %v1222 = vmul.f32 %v965, %v1176
    %v1223 = vmul.f32 %v966, %v1179
    %v1224 = vmul.f32 %v967, %v1182
    %v1225 = vmul.f32 %v968, %v1185
    %v1226 = vmul.f32 %v969, %v1188
    %v1227 = vmul.f32 %v970, %v1191
    %v1228 = vmul.f32 %v971, %v1194
    %v1229 = vmul.f32 %v972, %v1197
    %v1230 = vmul.f32 %v973, %v1200
    %v1231 = vmul.f32 %v974, %v1203
    %v1232 = vmul.f32 %v975, %v1206
    %v1233 = vmul.f32 %v976, %v1209
    %v1234 = vmul.f32 %v977, %v1212
    %v1235 = vmul.f32 %v978, %v1215
    %v1236 = vmul.f32 %v979, %v1218
    %v1237 = vmul.f32 %v980, %v1221
    %v1238 = vrsqrt.pop %v1142
    %v1239 = vrsqrt.pop %v1143
    %v1240 = vrsqrt.pop %v1144
    %v1241 = vrsqrt.pop %v1145
    %v1242 = vrsqrt.pop %v1146
    %v1243 = vrsqrt.pop %v1147
    %v1244 = vrsqrt.pop %v1148
    %v1245 = vrsqrt.pop %v1149
    %v1246 = vrsqrt.pop %v1150
    %v1247 = vrsqrt.pop %v1151
    %v1248 = vrsqrt.pop %v1152
    %v1249 = vrsqrt.pop %v1153
    %v1250 = vrsqrt.pop %v1154
    %v1251 = vrsqrt.pop %v1155
    %v1252 = vrsqrt.pop %v1156
    %v1253 = vrsqrt.pop %v1157
    %v1254 = vmul.f32 %v949, %v1238
    %v1255 = vmul.f32 %v950, %v1239
    %v1256 = vmul.f32 %v951, %v1240
    %v1257 = vmul.f32 %v952, %v1241
    %v1258 = vmul.f32 %v953, %v1242
    %v1259 = vmul.f32 %v954, %v1243
    %v1260 = vmul.f32 %v955, %v1244
    %v1261 = vmul.f32 %v956, %v1245
    %v1262 = vmul.f32 %v957, %v1246
    %v1263 = vmul.f32 %v958, %v1247
    %v1264 = vmul.f32 %v959, %v1248
    %v1265 = vmul.f32 %v960, %v1249
    %v1266 = vmul.f32 %v961, %v1250
    %v1267 = vmul.f32 %v962, %v1251
    %v1268 = vmul.f32 %v963, %v1252
    %v1269 = vmul.f32 %v964, %v1253
    %v1270 = vsel %vm981, %v1254, 0.0
    %v1271 = vrot.slane %v1270, 4
    %v1272 = vadd.f32 %v1270, %v1271
    %v1273 = vrot.slane %v1272, 2
    %v1274 = vadd.f32 %v1272, %v1273
    %v1275 = vrot.slane %v1274, 1
    %v1276 = vadd.f32 %v1274, %v1275
    %v1277 = vsel %vm981, %v1255, 0.0
    %v1278 = vrot.slane %v1277, 4
    %v1279 = vadd.f32 %v1277, %v1278
    %v1280 = vrot.slane %v1279, 2
    %v1281 = vadd.f32 %v1279, %v1280
    %v1282 = vrot.slane %v1281, 1
    %v1283 = vadd.f32 %v1281, %v1282
    %v1284 = vsel %vm981, %v1256, 0.0
    %v1285 = vrot.slane %v1284, 4
    %v1286 = vadd.f32 %v1284, %v1285
    %v1287 = vrot.slane %v1286, 2
    %v1288 = vadd.f32 %v1286, %v1287
    %v1289 = vrot.slane %v1288, 1
    %v1290 = vadd.f32 %v1288, %v1289
    %v1291 = vsel %vm981, %v1257, 0.0
    %v1292 = vrot.slane %v1291, 4
    %v1293 = vadd.f32 %v1291, %v1292
    %v1294 = vrot.slane %v1293, 2
    %v1295 = vadd.f32 %v1293, %v1294
    %v1296 = vrot.slane %v1295, 1
    %v1297 = vadd.f32 %v1295, %v1296
    %v1298 = vsel %vm981, %v1258, 0.0
    %v1299 = vrot.slane %v1298, 4
    %v1300 = vadd.f32 %v1298, %v1299
    %v1301 = vrot.slane %v1300, 2
    %v1302 = vadd.f32 %v1300, %v1301
    %v1303 = vrot.slane %v1302, 1
    %v1304 = vadd.f32 %v1302, %v1303
    %v1305 = vsel %vm981, %v1259, 0.0
    %v1306 = vrot.slane %v1305, 4
    %v1307 = vadd.f32 %v1305, %v1306
    %v1308 = vrot.slane %v1307, 2
    %v1309 = vadd.f32 %v1307, %v1308
    %v1310 = vrot.slane %v1309, 1
    %v1311 = vadd.f32 %v1309, %v1310
    %v1312 = vsel %vm981, %v1260, 0.0
    %v1313 = vrot.slane %v1312, 4
    %v1314 = vadd.f32 %v1312, %v1313
    %v1315 = vrot.slane %v1314, 2
    %v1316 = vadd.f32 %v1314, %v1315
    %v1317 = vrot.slane %v1316, 1
    %v1318 = vadd.f32 %v1316, %v1317
    %v1319 = vsel %vm981, %v1261, 0.0
    %v1320 = vrot.slane %v1319, 4
    %v1321 = vadd.f32 %v1319, %v1320
    %v1322 = vrot.slane %v1321, 2
    %v1323 = vadd.f32 %v1321, %v1322
    %v1324 = vrot.slane %v1323, 1
    %v1325 = vadd.f32 %v1323, %v1324
    %v1326 = vsel %vm981, %v1262, 0.0
    %v1327 = vrot.slane %v1326, 4
    %v1328 = vadd.f32 %v1326, %v1327
    %v1329 = vrot.slane %v1328, 2
    %v1330 = vadd.f32 %v1328, %v1329
    %v1331 = vrot.slane %v1330, 1
    %v1332 = vadd.f32 %v1330, %v1331
    %v1333 = vsel %vm981, %v1263, 0.0
    %v1334 = vrot.slane %v1333, 4
    %v1335 = vadd.f32 %v1333, %v1334
    %v1336 = vrot.slane %v1335, 2
    %v1337 = vadd.f32 %v1335, %v1336
    %v1338 = vrot.slane %v1337, 1
    %v1339 = vadd.f32 %v1337, %v1338
    %v1340 = vsel %vm981, %v1264, 0.0
    %v1341 = vrot.slane %v1340, 4
    %v1342 = vadd.f32 %v1340, %v1341
    %v1343 = vrot.slane %v1342, 2
    %v1344 = vadd.f32 %v1342, %v1343
    %v1345 = vrot.slane %v1344, 1
    %v1346 = vadd.f32 %v1344, %v1345
    %v1347 = vsel %vm981, %v1265, 0.0
    %v1348 = vrot.slane %v1347, 4
    %v1349 = vadd.f32 %v1347, %v1348
    %v1350 = vrot.slane %v1349, 2
    %v1351 = vadd.f32 %v1349, %v1350
    %v1352 = vrot.slane %v1351, 1
    %v1353 = vadd.f32 %v1351, %v1352
    %v1354 = vsel %vm981, %v1266, 0.0
    %v1355 = vrot.slane %v1354, 4
    %v1356 = vadd.f32 %v1354, %v1355
    %v1357 = vrot.slane %v1356, 2
    %v1358 = vadd.f32 %v1356, %v1357
    %v1359 = vrot.slane %v1358, 1
    %v1360 = vadd.f32 %v1358, %v1359
    %v1361 = vsel %vm981, %v1267, 0.0
    %v1362 = vrot.slane %v1361, 4
    %v1363 = vadd.f32 %v1361, %v1362
    %v1364 = vrot.slane %v1363, 2
    %v1365 = vadd.f32 %v1363, %v1364
    %v1366 = vrot.slane %v1365, 1
    %v1367 = vadd.f32 %v1365, %v1366
    %v1368 = vsel %vm981, %v1268, 0.0
    %v1369 = vrot.slane %v1368, 4
    %v1370 = vadd.f32 %v1368, %v1369
    %v1371 = vrot.slane %v1370, 2
    %v1372 = vadd.f32 %v1370, %v1371
    %v1373 = vrot.slane %v1372, 1
    %v1374 = vadd.f32 %v1372, %v1373
    %v1375 = vsel %vm981, %v1269, 0.0
    %v1376 = vrot.slane %v1375, 4
    %v1377 = vadd.f32 %v1375, %v1376
    %v1378 = vrot.slane %v1377, 2
    %v1379 = vadd.f32 %v1377, %v1378
    %v1380 = vrot.slane %v1379, 1
    %v1381 = vadd.f32 %v1379, %v1380
    %v1382 = vmul.f32 %v1276, 0.125
    %v1383 = vmul.f32 %v1283, 0.125
    %v1384 = vmul.f32 %v1290, 0.125
    %v1385 = vmul.f32 %v1297, 0.125
    %v1386 = vmul.f32 %v1304, 0.125
    %v1387 = vmul.f32 %v1311, 0.125
    %v1388 = vmul.f32 %v1318, 0.125
    %v1389 = vmul.f32 %v1325, 0.125
    %v1390 = vmul.f32 %v1332, 0.125
    %v1391 = vmul.f32 %v1339, 0.125
    %v1392 = vmul.f32 %v1346, 0.125
    %v1393 = vmul.f32 %v1353, 0.125
    %v1394 = vmul.f32 %v1360, 0.125
    %v1395 = vmul.f32 %v1367, 0.125
    %v1396 = vmul.f32 %v1374, 0.125
    %v1397 = vmul.f32 %v1381, 0.125
    %1399 = vbcast.lane.b32.xlu0 %v1382, 256
    %v1400 = vpop.permute.xlu0 %1399
    %1402 = vbcast.lane.b32.xlu0 %v1383, 256
    %v1403 = vpop.permute.xlu0 %1402
    %1405 = vbcast.lane.b32.xlu0 %v1384, 256
    %v1406 = vpop.permute.xlu0 %1405
    %1408 = vbcast.lane.b32.xlu0 %v1385, 256
    %v1409 = vpop.permute.xlu0 %1408
    %1411 = vbcast.lane.b32.xlu0 %v1386, 256
    %v1412 = vpop.permute.xlu0 %1411
    %1414 = vbcast.lane.b32.xlu0 %v1387, 256
    %v1415 = vpop.permute.xlu0 %1414
    %1417 = vbcast.lane.b32.xlu0 %v1388, 256
    %v1418 = vpop.permute.xlu0 %1417
    %1420 = vbcast.lane.b32.xlu0 %v1389, 256
    %v1421 = vpop.permute.xlu0 %1420
    %1423 = vbcast.lane.b32.xlu0 %v1390, 256
    %v1424 = vpop.permute.xlu0 %1423
    %1426 = vbcast.lane.b32.xlu0 %v1391, 256
    %v1427 = vpop.permute.xlu0 %1426
    %1429 = vbcast.lane.b32.xlu0 %v1392, 256
    %v1430 = vpop.permute.xlu0 %1429
    %1432 = vbcast.lane.b32.xlu0 %v1393, 256
    %v1433 = vpop.permute.xlu0 %1432
    %1435 = vbcast.lane.b32.xlu0 %v1394, 256
    %v1436 = vpop.permute.xlu0 %1435
    %1438 = vbcast.lane.b32.xlu0 %v1395, 256
    %v1439 = vpop.permute.xlu0 %1438
    %1441 = vbcast.lane.b32.xlu0 %v1396, 256
    %v1442 = vpop.permute.xlu0 %1441
    %1444 = vbcast.lane.b32.xlu0 %v1397, 256
    %v1445 = vpop.permute.xlu0 %1444
    %v1446 = vmul.f32 %v1400, %v1222
    %v1447 = vmul.f32 %v1403, %v1223
    %v1448 = vmul.f32 %v1406, %v1224
    %v1449 = vmul.f32 %v1409, %v1225
    %v1450 = vmul.f32 %v1412, %v1226
    %v1451 = vmul.f32 %v1415, %v1227
    %v1452 = vmul.f32 %v1418, %v1228
    %v1453 = vmul.f32 %v1421, %v1229
    %v1454 = vmul.f32 %v1424, %v1230
    %v1455 = vmul.f32 %v1427, %v1231
    %v1456 = vmul.f32 %v1430, %v1232
    %v1457 = vmul.f32 %v1433, %v1233
    %v1458 = vmul.f32 %v1436, %v1234
    %v1459 = vmul.f32 %v1439, %v1235
    %v1460 = vmul.f32 %v1442, %v1236
    %v1461 = vmul.f32 %v1445, %v1237
    %v1462 = vsel %vm164, %v1446, 0.0
    %v1463 = vrot.slane %v1462, 4
    %v1464 = vadd.f32 %v1462, %v1463
    %v1465 = vrot.slane %v1464, 2
    %v1466 = vadd.f32 %v1464, %v1465
    %v1467 = vrot.slane %v1466, 1
    %v1468 = vadd.f32 %v1466, %v1467
    %v1469 = vsel %vm164, %v1447, 0.0
    %v1470 = vrot.slane %v1469, 4
    %v1471 = vadd.f32 %v1469, %v1470
    %v1472 = vrot.slane %v1471, 2
    %v1473 = vadd.f32 %v1471, %v1472
    %v1474 = vrot.slane %v1473, 1
    %v1475 = vadd.f32 %v1473, %v1474
    %v1476 = vsel %vm164, %v1448, 0.0
    %v1477 = vrot.slane %v1476, 4
    %v1478 = vadd.f32 %v1476, %v1477
    %v1479 = vrot.slane %v1478, 2
    %v1480 = vadd.f32 %v1478, %v1479
    %v1481 = vrot.slane %v1480, 1
    %v1482 = vadd.f32 %v1480, %v1481
    %v1483 = vsel %vm164, %v1449, 0.0
    %v1484 = vrot.slane %v1483, 4
    %v1485 = vadd.f32 %v1483, %v1484
    %v1486 = vrot.slane %v1485, 2
    %v1487 = vadd.f32 %v1485, %v1486
    %v1488 = vrot.slane %v1487, 1
    %v1489 = vadd.f32 %v1487, %v1488
    %v1490 = vsel %vm164, %v1450, 0.0
    %v1491 = vrot.slane %v1490, 4
    %v1492 = vadd.f32 %v1490, %v1491
    %v1493 = vrot.slane %v1492, 2
    %v1494 = vadd.f32 %v1492, %v1493
    %v1495 = vrot.slane %v1494, 1
    %v1496 = vadd.f32 %v1494, %v1495
    %v1497 = vsel %vm164, %v1451, 0.0
    %v1498 = vrot.slane %v1497, 4
    %v1499 = vadd.f32 %v1497, %v1498
    %v1500 = vrot.slane %v1499, 2
    %v1501 = vadd.f32 %v1499, %v1500
    %v1502 = vrot.slane %v1501, 1
    %v1503 = vadd.f32 %v1501, %v1502
    %v1504 = vsel %vm164, %v1452, 0.0
    %v1505 = vrot.slane %v1504, 4
    %v1506 = vadd.f32 %v1504, %v1505
    %v1507 = vrot.slane %v1506, 2
    %v1508 = vadd.f32 %v1506, %v1507
    %v1509 = vrot.slane %v1508, 1
    %v1510 = vadd.f32 %v1508, %v1509
    %v1511 = vsel %vm164, %v1453, 0.0
    %v1512 = vrot.slane %v1511, 4
    %v1513 = vadd.f32 %v1511, %v1512
    %v1514 = vrot.slane %v1513, 2
    %v1515 = vadd.f32 %v1513, %v1514
    %v1516 = vrot.slane %v1515, 1
    %v1517 = vadd.f32 %v1515, %v1516
    %v1518 = vsel %vm164, %v1454, 0.0
    %v1519 = vrot.slane %v1518, 4
    %v1520 = vadd.f32 %v1518, %v1519
    %v1521 = vrot.slane %v1520, 2
    %v1522 = vadd.f32 %v1520, %v1521
    %v1523 = vrot.slane %v1522, 1
    %v1524 = vadd.f32 %v1522, %v1523
    %v1525 = vsel %vm164, %v1455, 0.0
    %v1526 = vrot.slane %v1525, 4
    %v1527 = vadd.f32 %v1525, %v1526
    %v1528 = vrot.slane %v1527, 2
    %v1529 = vadd.f32 %v1527, %v1528
    %v1530 = vrot.slane %v1529, 1
    %v1531 = vadd.f32 %v1529, %v1530
    %v1532 = vsel %vm164, %v1456, 0.0
    %v1533 = vrot.slane %v1532, 4
    %v1534 = vadd.f32 %v1532, %v1533
    %v1535 = vrot.slane %v1534, 2
    %v1536 = vadd.f32 %v1534, %v1535
    %v1537 = vrot.slane %v1536, 1
    %v1538 = vadd.f32 %v1536, %v1537
    %v1539 = vsel %vm164, %v1457, 0.0
    %v1540 = vrot.slane %v1539, 4
    %v1541 = vadd.f32 %v1539, %v1540
    %v1542 = vrot.slane %v1541, 2
    %v1543 = vadd.f32 %v1541, %v1542
    %v1544 = vrot.slane %v1543, 1
    %v1545 = vadd.f32 %v1543, %v1544
    %v1546 = vsel %vm164, %v1458, 0.0
    %v1547 = vrot.slane %v1546, 4
    %v1548 = vadd.f32 %v1546, %v1547
    %v1549 = vrot.slane %v1548, 2
    %v1550 = vadd.f32 %v1548, %v1549
    %v1551 = vrot.slane %v1550, 1
    %v1552 = vadd.f32 %v1550, %v1551
    %v1553 = vsel %vm164, %v1459, 0.0
    %v1554 = vrot.slane %v1553, 4
    %v1555 = vadd.f32 %v1553, %v1554
    %v1556 = vrot.slane %v1555, 2
    %v1557 = vadd.f32 %v1555, %v1556
    %v1558 = vrot.slane %v1557, 1
    %v1559 = vadd.f32 %v1557, %v1558
    %v1560 = vsel %vm164, %v1460, 0.0
    %v1561 = vrot.slane %v1560, 4
    %v1562 = vadd.f32 %v1560, %v1561
    %v1563 = vrot.slane %v1562, 2
    %v1564 = vadd.f32 %v1562, %v1563
    %v1565 = vrot.slane %v1564, 1
    %v1566 = vadd.f32 %v1564, %v1565
    %v1567 = vsel %vm164, %v1461, 0.0
    %v1568 = vrot.slane %v1567, 4
    %v1569 = vadd.f32 %v1567, %v1568
    %v1570 = vrot.slane %v1569, 2
    %v1571 = vadd.f32 %v1569, %v1570
    %v1572 = vrot.slane %v1571, 1
    %v1573 = vadd.f32 %v1571, %v1572
    %v1574 = vld [vmem:[#allocation8] sm:$0xff]
    %v1575 = vld [vmem:[#allocation8 + $0x8] sm:$0xff]
    %v1576 = vld [vmem:[#allocation10] sm:$0xff]
    %v1577 = vld [vmem:[#allocation10 + $0x8] sm:$0xff]
    %vm1580 = vcmask 1041409
    %v1581 = vsel %vm1580, %v1475, %v1468
    %v1582 = vsel %vm164, %v1581, 0
    %1584 = vmatprep.subr.mxu0 0.0
    %1585 = vmatpush1.msra.mxu0 0.0
    %1586 = vmatprep.subr.mxu0 0.0
    %1587 = vmatpush1.msra.mxu0 0.0
    %1588 = vmatprep.subr.mxu0 0.0
    %1589 = vmatpush1.msra.mxu0 0.0
    %1590 = vmatprep.subr.mxu0 0.0
    %1591 = vmatpush1.msra.mxu0 0.0
    %1592 = vmatprep.subr.mxu0 0.0
    %1593 = vmatpush1.msra.mxu0 0.0
    %1594 = vmatprep.subr.mxu0 0.0
    %1595 = vmatpush1.msra.mxu0 0.0
    %1596 = vmatprep.subr.mxu0 0.0
    %1597 = vmatpush1.msra.mxu0 0.0
    %1598 = vmatprep.subr.mxu0 0.0
    %1599 = vmatpush1.msra.mxu0 0.0
    %1600 = vmatprep.subr.mxu0 0.0
    %1601 = vmatpush1.msra.mxu0 0.0
    %1602 = vmatprep.subr.mxu0 0.0
    %1603 = vmatpush1.msra.mxu0 0.0
    %1604 = vmatprep.subr.mxu0 0.0
    %1605 = vmatpush1.msra.mxu0 0.0
    %1606 = vmatprep.subr.mxu0 0.0
    %1607 = vmatpush1.msra.mxu0 0.0
    %1608 = vmatprep.subr.mxu0 0.0
    %1609 = vmatpush1.msra.mxu0 0.0
    %1610 = vmatprep.subr.mxu0 0.0
    %1611 = vmatpush1.msra.mxu0 0.0
    %1612 = vmatprep.subr.mxu0 0.0
    %1613 = vmatpush1.msra.mxu0 %v1577
    %1614 = vmatprep.subr.mxu0 0.0
    %1615 = vmatpush1.msra.mxu0 %v1576
    %1616 = vmatprep.subr.mxu0 0.0
    %1617 = vmatpush2.msra.mxu0 0.0
    %1618 = vmatprep.subr.mxu0 0.0
    %1619 = vmatpush2.msra.mxu0 0.0
    %1620 = vmatprep.subr.mxu0 0.0
    %1621 = vmatpush2.msra.mxu0 0.0
    %1622 = vmatprep.subr.mxu0 0.0
    %1623 = vmatpush2.msra.mxu0 0.0
    %1624 = vmatprep.subr.mxu0 0.0
    %1625 = vmatpush2.msra.mxu0 0.0
    %1626 = vmatprep.subr.mxu0 0.0
    %1627 = vmatpush2.msra.mxu0 0.0
    %1628 = vmatprep.subr.mxu0 0.0
    %1629 = vmatpush2.msra.mxu0 0.0
    %1630 = vmatprep.subr.mxu0 0.0
    %1631 = vmatpush2.msra.mxu0 0.0
    %1632 = vmatprep.subr.mxu0 0.0
    %1633 = vmatpush2.msra.mxu0 0.0
    %1634 = vmatprep.subr.mxu0 0.0
    %1635 = vmatpush2.msra.mxu0 0.0
    %1636 = vmatprep.subr.mxu0 0.0
    %1637 = vmatpush2.msra.mxu0 0.0
    %1638 = vmatprep.subr.mxu0 0.0
    %1639 = vmatpush2.msra.mxu0 0.0
    %1640 = vmatprep.subr.mxu0 0.0
    %1641 = vmatpush2.msra.mxu0 0.0
    %1642 = vmatprep.subr.mxu0 0.0
    %1643 = vmatpush2.msra.mxu0 0.0
    %1644 = vmatprep.subr.mxu0 0.0
    %1645 = vmatpush2.msra.mxu0 0.0
    %1646 = vmatprep.subr.mxu0 0.0
    %1647 = vmatpush2.msra.mxu0 0.0
    %1648 = vmatprep.mubr.f32.mxu0 0.0
    %1649 = vmatmul.mubr.f32.gmra.mxu0 %v1582
    %v1650 = vpop.f32.mrf.mxu0
    %v1651 = vadd.f32 0.0, %v1650
    %v1652 = vpop.f32.mrf.mxu0
    %1653 = vdwg.mxu0
    %v1656 = vsel %vm1580, %v822, %v813
    %v1657 = vsel %vm164, %v1656, 0
    %1659 = vmatprep.subr.mxu0 0.0
    %1660 = vmatpush1.msra.mxu0 0.0
    %1661 = vmatprep.subr.mxu0 0.0
    %1662 = vmatpush1.msra.mxu0 0.0
    %1663 = vmatprep.subr.mxu0 0.0
    %1664 = vmatpush1.msra.mxu0 0.0
    %1665 = vmatprep.subr.mxu0 0.0
    %1666 = vmatpush1.msra.mxu0 0.0
    %1667 = vmatprep.subr.mxu0 0.0
    %1668 = vmatpush1.msra.mxu0 0.0
    %1669 = vmatprep.subr.mxu0 0.0
    %1670 = vmatpush1.msra.mxu0 0.0
    %1671 = vmatprep.subr.mxu0 0.0
    %1672 = vmatpush1.msra.mxu0 0.0
    %1673 = vmatprep.subr.mxu0 0.0
    %1674 = vmatpush1.msra.mxu0 0.0
    %1675 = vmatprep.subr.mxu0 0.0
    %1676 = vmatpush1.msra.mxu0 0.0
    %1677 = vmatprep.subr.mxu0 0.0
    %1678 = vmatpush1.msra.mxu0 0.0
    %1679 = vmatprep.subr.mxu0 0.0
    %1680 = vmatpush1.msra.mxu0 0.0
    %1681 = vmatprep.subr.mxu0 0.0
    %1682 = vmatpush1.msra.mxu0 0.0
    %1683 = vmatprep.subr.mxu0 0.0
    %1684 = vmatpush1.msra.mxu0 0.0
    %1685 = vmatprep.subr.mxu0 0.0
    %1686 = vmatpush1.msra.mxu0 0.0
    %1687 = vmatprep.subr.mxu0 0.0
    %1688 = vmatpush1.msra.mxu0 %v1575
    %1689 = vmatprep.subr.mxu0 0.0
    %1690 = vmatpush1.msra.mxu0 %v1574
    %1691 = vmatprep.subr.mxu0 0.0
    %1692 = vmatpush2.msra.mxu0 0.0
    %1693 = vmatprep.subr.mxu0 0.0
    %1694 = vmatpush2.msra.mxu0 0.0
    %1695 = vmatprep.subr.mxu0 0.0
    %1696 = vmatpush2.msra.mxu0 0.0
    %1697 = vmatprep.subr.mxu0 0.0
    %1698 = vmatpush2.msra.mxu0 0.0
    %1699 = vmatprep.subr.mxu0 0.0
    %1700 = vmatpush2.msra.mxu0 0.0
    %1701 = vmatprep.subr.mxu0 0.0
    %1702 = vmatpush2.msra.mxu0 0.0
    %1703 = vmatprep.subr.mxu0 0.0
    %1704 = vmatpush2.msra.mxu0 0.0
    %1705 = vmatprep.subr.mxu0 0.0
    %1706 = vmatpush2.msra.mxu0 0.0
    %1707 = vmatprep.subr.mxu0 0.0
    %1708 = vmatpush2.msra.mxu0 0.0
    %1709 = vmatprep.subr.mxu0 0.0
    %1710 = vmatpush2.msra.mxu0 0.0
    %1711 = vmatprep.subr.mxu0 0.0
    %1712 = vmatpush2.msra.mxu0 0.0
    %1713 = vmatprep.subr.mxu0 0.0
    %1714 = vmatpush2.msra.mxu0 0.0
    %1715 = vmatprep.subr.mxu0 0.0
    %1716 = vmatpush2.msra.mxu0 0.0
    %1717 = vmatprep.subr.mxu0 0.0
    %1718 = vmatpush2.msra.mxu0 0.0
    %1719 = vmatprep.subr.mxu0 0.0
    %1720 = vmatpush2.msra.mxu0 0.0
    %1721 = vmatprep.subr.mxu0 0.0
    %1722 = vmatpush2.msra.mxu0 0.0
    %1723 = vmatprep.mubr.f32.mxu0 0.0
    %1724 = vmatmul.mubr.f32.gmra.mxu0 %v1657
    %v1725 = vpop.f32.mrf.mxu0
    %v1726 = vadd.f32 %v1651, %v1725
    %v1727 = vpop.f32.mrf.mxu0
    %1728 = vdwg.mxu0
    %v1729 = vld [vmem:[%s6] sm:$0x1]
    %v1731 = vlaneseq
    %v1732 = vshrl.u32 %v1731, 7
    %v1733 = vsub.s32 0, %v1732
    %v1734 = vrot.slane %v1729, %v1733
    %v1736 = vadd.f32 %v1726, %v1734
    %v1737 = vld [vmem:[%s7] sm:$0x1]
    %v1739 = vlaneseq
    %v1740 = vshrl.u32 %v1739, 7
    %v1741 = vsub.s32 0, %v1740
    %v1742 = vrot.slane %v1737, %v1741
    %v1744 = vadd.f32 %v1736, %v1742
    %v1745 = vld [vmem:[%s8] sm:$0xff]
    %v1746 = vld [vmem:[%s8 + $0x8] sm:$0xff]
    %v1747 = vld [vmem:[%s8 + $0x10] sm:$0xff]
    %v1748 = vld [vmem:[%s8 + $0x18] sm:$0xff]
    %s1749 = scalar_lea.vmem [#allocation8], 16
    %v1750 = vld [vmem:[%s1749] sm:$0xff]
    %v1751 = vld [vmem:[%s1749 + $0x8] sm:$0xff]
    %s1752 = scalar_lea.vmem [#allocation10], 16
    %v1753 = vld [vmem:[%s1752] sm:$0xff]
    %v1754 = vld [vmem:[%s1752 + $0x8] sm:$0xff]
    %v1757 = vsel %vm1580, %v1489, %v1482
    %v1758 = vsel %vm164, %v1757, 0
    %1760 = vmatprep.subr.mxu0 0.0
    %1761 = vmatpush1.msra.mxu0 0.0
    %1762 = vmatprep.subr.mxu0 0.0
    %1763 = vmatpush1.msra.mxu0 0.0
    %1764 = vmatprep.subr.mxu0 0.0
    %1765 = vmatpush1.msra.mxu0 0.0
    %1766 = vmatprep.subr.mxu0 0.0
    %1767 = vmatpush1.msra.mxu0 0.0
    %1768 = vmatprep.subr.mxu0 0.0
    %1769 = vmatpush1.msra.mxu0 0.0
    %1770 = vmatprep.subr.mxu0 0.0
    %1771 = vmatpush1.msra.mxu0 0.0
    %1772 = vmatprep.subr.mxu0 0.0
    %1773 = vmatpush1.msra.mxu0 0.0
    %1774 = vmatprep.subr.mxu0 0.0
    %1775 = vmatpush1.msra.mxu0 0.0
    %1776 = vmatprep.subr.mxu0 0.0
    %1777 = vmatpush1.msra.mxu0 0.0
    %1778 = vmatprep.subr.mxu0 0.0
    %1779 = vmatpush1.msra.mxu0 0.0
    %1780 = vmatprep.subr.mxu0 0.0
    %1781 = vmatpush1.msra.mxu0 0.0
    %1782 = vmatprep.subr.mxu0 0.0
    %1783 = vmatpush1.msra.mxu0 0.0
    %1784 = vmatprep.subr.mxu0 0.0
    %1785 = vmatpush1.msra.mxu0 0.0
    %1786 = vmatprep.subr.mxu0 0.0
    %1787 = vmatpush1.msra.mxu0 0.0
    %1788 = vmatprep.subr.mxu0 0.0
    %1789 = vmatpush1.msra.mxu0 %v1754
    %1790 = vmatprep.subr.mxu0 0.0
    %1791 = vmatpush1.msra.mxu0 %v1753
    %1792 = vmatprep.subr.mxu0 0.0
    %1793 = vmatpush2.msra.mxu0 0.0
    %1794 = vmatprep.subr.mxu0 0.0
    %1795 = vmatpush2.msra.mxu0 0.0
    %1796 = vmatprep.subr.mxu0 0.0
    %1797 = vmatpush2.msra.mxu0 0.0
    %1798 = vmatprep.subr.mxu0 0.0
    %1799 = vmatpush2.msra.mxu0 0.0
    %1800 = vmatprep.subr.mxu0 0.0
    %1801 = vmatpush2.msra.mxu0 0.0
    %1802 = vmatprep.subr.mxu0 0.0
    %1803 = vmatpush2.msra.mxu0 0.0
    %1804 = vmatprep.subr.mxu0 0.0
    %1805 = vmatpush2.msra.mxu0 0.0
    %1806 = vmatprep.subr.mxu0 0.0
    %1807 = vmatpush2.msra.mxu0 0.0
    %1808 = vmatprep.subr.mxu0 0.0
    %1809 = vmatpush2.msra.mxu0 0.0
    %1810 = vmatprep.subr.mxu0 0.0
    %1811 = vmatpush2.msra.mxu0 0.0
    %1812 = vmatprep.subr.mxu0 0.0
    %1813 = vmatpush2.msra.mxu0 0.0
    %1814 = vmatprep.subr.mxu0 0.0
    %1815 = vmatpush2.msra.mxu0 0.0
    %1816 = vmatprep.subr.mxu0 0.0
    %1817 = vmatpush2.msra.mxu0 0.0
    %1818 = vmatprep.subr.mxu0 0.0
    %1819 = vmatpush2.msra.mxu0 0.0
    %1820 = vmatprep.subr.mxu0 0.0
    %1821 = vmatpush2.msra.mxu0 0.0
    %1822 = vmatprep.subr.mxu0 0.0
    %1823 = vmatpush2.msra.mxu0 0.0
    %1824 = vmatprep.mubr.f32.mxu0 0.0
    %1825 = vmatmul.mubr.f32.gmra.mxu0 %v1758
    %v1826 = vpop.f32.mrf.mxu0
    %v1827 = vadd.f32 0.0, %v1826
    %v1828 = vpop.f32.mrf.mxu0
    %1829 = vdwg.mxu0
    %v1832 = vsel %vm1580, %v840, %v831
    %v1833 = vsel %vm164, %v1832, 0
    %1835 = vmatprep.subr.mxu0 0.0
    %1836 = vmatpush1.msra.mxu0 0.0
    %1837 = vmatprep.subr.mxu0 0.0
    %1838 = vmatpush1.msra.mxu0 0.0
    %1839 = vmatprep.subr.mxu0 0.0
    %1840 = vmatpush1.msra.mxu0 0.0
    %1841 = vmatprep.subr.mxu0 0.0
    %1842 = vmatpush1.msra.mxu0 0.0
    %1843 = vmatprep.subr.mxu0 0.0
    %1844 = vmatpush1.msra.mxu0 0.0
    %1845 = vmatprep.subr.mxu0 0.0
    %1846 = vmatpush1.msra.mxu0 0.0
    %1847 = vmatprep.subr.mxu0 0.0
    %1848 = vmatpush1.msra.mxu0 0.0
    %1849 = vmatprep.subr.mxu0 0.0
    %1850 = vmatpush1.msra.mxu0 0.0
    %1851 = vmatprep.subr.mxu0 0.0
    %1852 = vmatpush1.msra.mxu0 0.0
    %1853 = vmatprep.subr.mxu0 0.0
    %1854 = vmatpush1.msra.mxu0 0.0
    %1855 = vmatprep.subr.mxu0 0.0
    %1856 = vmatpush1.msra.mxu0 0.0
    %1857 = vmatprep.subr.mxu0 0.0
    %1858 = vmatpush1.msra.mxu0 0.0
    %1859 = vmatprep.subr.mxu0 0.0
    %1860 = vmatpush1.msra.mxu0 0.0
    %1861 = vmatprep.subr.mxu0 0.0
    %1862 = vmatpush1.msra.mxu0 0.0
    %1863 = vmatprep.subr.mxu0 0.0
    %1864 = vmatpush1.msra.mxu0 %v1751
    %1865 = vmatprep.subr.mxu0 0.0
    %1866 = vmatpush1.msra.mxu0 %v1750
    %1867 = vmatprep.subr.mxu0 0.0
    %1868 = vmatpush2.msra.mxu0 0.0
    %1869 = vmatprep.subr.mxu0 0.0
    %1870 = vmatpush2.msra.mxu0 0.0
    %1871 = vmatprep.subr.mxu0 0.0
    %1872 = vmatpush2.msra.mxu0 0.0
    %1873 = vmatprep.subr.mxu0 0.0
    %1874 = vmatpush2.msra.mxu0 0.0
    %1875 = vmatprep.subr.mxu0 0.0
    %1876 = vmatpush2.msra.mxu0 0.0
    %1877 = vmatprep.subr.mxu0 0.0
    %1878 = vmatpush2.msra.mxu0 0.0
    %1879 = vmatprep.subr.mxu0 0.0
    %1880 = vmatpush2.msra.mxu0 0.0
    %1881 = vmatprep.subr.mxu0 0.0
    %1882 = vmatpush2.msra.mxu0 0.0
    %1883 = vmatprep.subr.mxu0 0.0
    %1884 = vmatpush2.msra.mxu0 0.0
    %1885 = vmatprep.subr.mxu0 0.0
    %1886 = vmatpush2.msra.mxu0 0.0
    %1887 = vmatprep.subr.mxu0 0.0
    %1888 = vmatpush2.msra.mxu0 0.0
    %1889 = vmatprep.subr.mxu0 0.0
    %1890 = vmatpush2.msra.mxu0 0.0
    %1891 = vmatprep.subr.mxu0 0.0
    %1892 = vmatpush2.msra.mxu0 0.0
    %1893 = vmatprep.subr.mxu0 0.0
    %1894 = vmatpush2.msra.mxu0 0.0
    %1895 = vmatprep.subr.mxu0 0.0
    %1896 = vmatpush2.msra.mxu0 0.0
    %1897 = vmatprep.subr.mxu0 0.0
    %1898 = vmatpush2.msra.mxu0 0.0
    %1899 = vmatprep.mubr.f32.mxu0 0.0
    %1900 = vmatmul.mubr.f32.gmra.mxu0 %v1833
    %v1901 = vpop.f32.mrf.mxu0
    %v1902 = vadd.f32 %v1827, %v1901
    %v1903 = vpop.f32.mrf.mxu0
    %1904 = vdwg.mxu0
    %s1905 = scalar_lea.vmem %s6, 1
    %v1906 = vld [vmem:[%s1905] sm:$0x1]
    %v1908 = vlaneseq
    %v1909 = vshrl.u32 %v1908, 7
    %v1910 = vsub.s32 0, %v1909
    %v1911 = vrot.slane %v1906, %v1910
    %v1913 = vadd.f32 %v1902, %v1911
    %s1914 = scalar_lea.vmem %s7, 1
    %v1915 = vld [vmem:[%s1914] sm:$0x1]
    %v1917 = vlaneseq
    %v1918 = vshrl.u32 %v1917, 7
    %v1919 = vsub.s32 0, %v1918
    %v1920 = vrot.slane %v1915, %v1919
    %v1922 = vadd.f32 %v1913, %v1920
    %s1923 = scalar_lea.vmem %s8, 32
    %v1924 = vld [vmem:[%s1923] sm:$0xff]
    %v1925 = vld [vmem:[%s1923 + $0x8] sm:$0xff]
    %v1926 = vld [vmem:[%s1923 + $0x10] sm:$0xff]
    %v1927 = vld [vmem:[%s1923 + $0x18] sm:$0xff]
    %vm1928 = vcmask 261120
    %v1930 = vsel %vm1928, %v1922, 0
    %1932 = vmatprep.subr.mxu0 0.0
    %1933 = vmatpush1.msra.mxu0 0.0
    %1934 = vmatprep.subr.mxu0 0.0
    %1935 = vmatpush1.msra.mxu0 0.0
    %1936 = vmatprep.subr.mxu0 0.0
    %1937 = vmatpush1.msra.mxu0 0.0
    %1938 = vmatprep.subr.mxu0 0.0
    %1939 = vmatpush1.msra.mxu0 0.0
    %1940 = vmatprep.subr.mxu0 0.0
    %1941 = vmatpush1.msra.mxu0 0.0
    %1942 = vmatprep.subr.mxu0 0.0
    %1943 = vmatpush1.msra.mxu0 0.0
    %1944 = vmatprep.subr.mxu0 0.0
    %1945 = vmatpush1.msra.mxu0 0.0
    %1946 = vmatprep.subr.mxu0 0.0
    %1947 = vmatpush1.msra.mxu0 0.0
    %1948 = vmatprep.subr.mxu0 0.0
    %1949 = vmatpush1.msra.mxu0 0.0
    %1950 = vmatprep.subr.mxu0 0.0
    %1951 = vmatpush1.msra.mxu0 0.0
    %1952 = vmatprep.subr.mxu0 0.0
    %1953 = vmatpush1.msra.mxu0 0.0
    %1954 = vmatprep.subr.mxu0 0.0
    %1955 = vmatpush1.msra.mxu0 0.0
    %1956 = vmatprep.subr.mxu0 0.0
    %1957 = vmatpush1.msra.mxu0 %v1927
    %1958 = vmatprep.subr.mxu0 0.0
    %1959 = vmatpush1.msra.mxu0 %v1926
    %1960 = vmatprep.subr.mxu0 0.0
    %1961 = vmatpush1.msra.mxu0 %v1925
    %1962 = vmatprep.subr.mxu0 0.0
    %1963 = vmatpush1.msra.mxu0 %v1924
    %1964 = vmatprep.subr.mxu0 0.0
    %1965 = vmatpush2.msra.mxu0 0.0
    %1966 = vmatprep.subr.mxu0 0.0
    %1967 = vmatpush2.msra.mxu0 0.0
    %1968 = vmatprep.subr.mxu0 0.0
    %1969 = vmatpush2.msra.mxu0 0.0
    %1970 = vmatprep.subr.mxu0 0.0
    %1971 = vmatpush2.msra.mxu0 0.0
    %1972 = vmatprep.subr.mxu0 0.0
    %1973 = vmatpush2.msra.mxu0 0.0
    %1974 = vmatprep.subr.mxu0 0.0
    %1975 = vmatpush2.msra.mxu0 0.0
    %1976 = vmatprep.subr.mxu0 0.0
    %1977 = vmatpush2.msra.mxu0 0.0
    %1978 = vmatprep.subr.mxu0 0.0
    %1979 = vmatpush2.msra.mxu0 0.0
    %1980 = vmatprep.subr.mxu0 0.0
    %1981 = vmatpush2.msra.mxu0 0.0
    %1982 = vmatprep.subr.mxu0 0.0
    %1983 = vmatpush2.msra.mxu0 0.0
    %1984 = vmatprep.subr.mxu0 0.0
    %1985 = vmatpush2.msra.mxu0 0.0
    %1986 = vmatprep.subr.mxu0 0.0
    %1987 = vmatpush2.msra.mxu0 0.0
    %1988 = vmatprep.subr.mxu0 0.0
    %1989 = vmatpush2.msra.mxu0 0.0
    %1990 = vmatprep.subr.mxu0 0.0
    %1991 = vmatpush2.msra.mxu0 0.0
    %1992 = vmatprep.subr.mxu0 0.0
    %1993 = vmatpush2.msra.mxu0 0.0
    %1994 = vmatprep.subr.mxu0 0.0
    %1995 = vmatpush2.msra.mxu0 0.0
    %1996 = vmatprep.mubr.f32.mxu0 0.0
    %1997 = vmatmul.mubr.f32.gmra.mxu0 %v1930
    %v1998 = vpop.f32.mrf.mxu0
    %v1999 = vadd.f32 0.0, %v1998
    %v2000 = vpop.f32.mrf.mxu0
    %2001 = vdwg.mxu0
    %v2003 = vsel %vm1928, %v1744, 0
    %2005 = vmatprep.subr.mxu0 0.0
    %2006 = vmatpush1.msra.mxu0 0.0
    %2007 = vmatprep.subr.mxu0 0.0
    %2008 = vmatpush1.msra.mxu0 0.0
    %2009 = vmatprep.subr.mxu0 0.0
    %2010 = vmatpush1.msra.mxu0 0.0
    %2011 = vmatprep.subr.mxu0 0.0
    %2012 = vmatpush1.msra.mxu0 0.0
    %2013 = vmatprep.subr.mxu0 0.0
    %2014 = vmatpush1.msra.mxu0 0.0
    %2015 = vmatprep.subr.mxu0 0.0
    %2016 = vmatpush1.msra.mxu0 0.0
    %2017 = vmatprep.subr.mxu0 0.0
    %2018 = vmatpush1.msra.mxu0 0.0
    %2019 = vmatprep.subr.mxu0 0.0
    %2020 = vmatpush1.msra.mxu0 0.0
    %2021 = vmatprep.subr.mxu0 0.0
    %2022 = vmatpush1.msra.mxu0 0.0
    %2023 = vmatprep.subr.mxu0 0.0
    %2024 = vmatpush1.msra.mxu0 0.0
    %2025 = vmatprep.subr.mxu0 0.0
    %2026 = vmatpush1.msra.mxu0 0.0
    %2027 = vmatprep.subr.mxu0 0.0
    %2028 = vmatpush1.msra.mxu0 0.0
    %2029 = vmatprep.subr.mxu0 0.0
    %2030 = vmatpush1.msra.mxu0 %v1748
    %2031 = vmatprep.subr.mxu0 0.0
    %2032 = vmatpush1.msra.mxu0 %v1747
    %2033 = vmatprep.subr.mxu0 0.0
    %2034 = vmatpush1.msra.mxu0 %v1746
    %2035 = vmatprep.subr.mxu0 0.0
    %2036 = vmatpush1.msra.mxu0 %v1745
    %2037 = vmatprep.subr.mxu0 0.0
    %2038 = vmatpush2.msra.mxu0 0.0
    %2039 = vmatprep.subr.mxu0 0.0
    %2040 = vmatpush2.msra.mxu0 0.0
    %2041 = vmatprep.subr.mxu0 0.0
    %2042 = vmatpush2.msra.mxu0 0.0
    %2043 = vmatprep.subr.mxu0 0.0
    %2044 = vmatpush2.msra.mxu0 0.0
    %2045 = vmatprep.subr.mxu0 0.0
    %2046 = vmatpush2.msra.mxu0 0.0
    %2047 = vmatprep.subr.mxu0 0.0
    %2048 = vmatpush2.msra.mxu0 0.0
    %2049 = vmatprep.subr.mxu0 0.0
    %2050 = vmatpush2.msra.mxu0 0.0
    %2051 = vmatprep.subr.mxu0 0.0
    %2052 = vmatpush2.msra.mxu0 0.0
    %2053 = vmatprep.subr.mxu0 0.0
    %2054 = vmatpush2.msra.mxu0 0.0
    %2055 = vmatprep.subr.mxu0 0.0
    %2056 = vmatpush2.msra.mxu0 0.0
    %2057 = vmatprep.subr.mxu0 0.0
    %2058 = vmatpush2.msra.mxu0 0.0
    %2059 = vmatprep.subr.mxu0 0.0
    %2060 = vmatpush2.msra.mxu0 0.0
    %2061 = vmatprep.subr.mxu0 0.0
    %2062 = vmatpush2.msra.mxu0 0.0
    %2063 = vmatprep.subr.mxu0 0.0
    %2064 = vmatpush2.msra.mxu0 0.0
    %2065 = vmatprep.subr.mxu0 0.0
    %2066 = vmatpush2.msra.mxu0 0.0
    %2067 = vmatprep.subr.mxu0 0.0
    %2068 = vmatpush2.msra.mxu0 0.0
    %2069 = vmatprep.mubr.f32.mxu0 0.0
    %2070 = vmatmul.mubr.f32.gmra.mxu0 %v2003
    %v2071 = vpop.f32.mrf.mxu0
    %v2072 = vadd.f32 %v1999, %v2071
    %v2073 = vpop.f32.mrf.mxu0
    %2074 = vdwg.mxu0
    %s2075 = scalar_lea.vmem [#allocation8], 32
    %v2076 = vld [vmem:[%s2075] sm:$0xff]
    %v2077 = vld [vmem:[%s2075 + $0x8] sm:$0xff]
    %s2078 = scalar_lea.vmem [#allocation10], 32
    %v2079 = vld [vmem:[%s2078] sm:$0xff]
    %v2080 = vld [vmem:[%s2078 + $0x8] sm:$0xff]
    %v2083 = vsel %vm1580, %v1503, %v1496
    %v2084 = vsel %vm164, %v2083, 0
    %2086 = vmatprep.subr.mxu0 0.0
    %2087 = vmatpush1.msra.mxu0 0.0
    %2088 = vmatprep.subr.mxu0 0.0
    %2089 = vmatpush1.msra.mxu0 0.0
    %2090 = vmatprep.subr.mxu0 0.0
    %2091 = vmatpush1.msra.mxu0 0.0
    %2092 = vmatprep.subr.mxu0 0.0
    %2093 = vmatpush1.msra.mxu0 0.0
    %2094 = vmatprep.subr.mxu0 0.0
    %2095 = vmatpush1.msra.mxu0 0.0
    %2096 = vmatprep.subr.mxu0 0.0
    %2097 = vmatpush1.msra.mxu0 0.0
    %2098 = vmatprep.subr.mxu0 0.0
    %2099 = vmatpush1.msra.mxu0 0.0
    %2100 = vmatprep.subr.mxu0 0.0
    %2101 = vmatpush1.msra.mxu0 0.0
    %2102 = vmatprep.subr.mxu0 0.0
    %2103 = vmatpush1.msra.mxu0 0.0
    %2104 = vmatprep.subr.mxu0 0.0
    %2105 = vmatpush1.msra.mxu0 0.0
    %2106 = vmatprep.subr.mxu0 0.0
    %2107 = vmatpush1.msra.mxu0 0.0
    %2108 = vmatprep.subr.mxu0 0.0
    %2109 = vmatpush1.msra.mxu0 0.0
    %2110 = vmatprep.subr.mxu0 0.0
    %2111 = vmatpush1.msra.mxu0 0.0
    %2112 = vmatprep.subr.mxu0 0.0
    %2113 = vmatpush1.msra.mxu0 0.0
    %2114 = vmatprep.subr.mxu0 0.0
    %2115 = vmatpush1.msra.mxu0 %v2080
    %2116 = vmatprep.subr.mxu0 0.0
    %2117 = vmatpush1.msra.mxu0 %v2079
    %2118 = vmatprep.subr.mxu0 0.0
    %2119 = vmatpush2.msra.mxu0 0.0
    %2120 = vmatprep.subr.mxu0 0.0
    %2121 = vmatpush2.msra.mxu0 0.0
    %2122 = vmatprep.subr.mxu0 0.0
    %2123 = vmatpush2.msra.mxu0 0.0
    %2124 = vmatprep.subr.mxu0 0.0
    %2125 = vmatpush2.msra.mxu0 0.0
    %2126 = vmatprep.subr.mxu0 0.0
    %2127 = vmatpush2.msra.mxu0 0.0
    %2128 = vmatprep.subr.mxu0 0.0
    %2129 = vmatpush2.msra.mxu0 0.0
    %2130 = vmatprep.subr.mxu0 0.0
    %2131 = vmatpush2.msra.mxu0 0.0
    %2132 = vmatprep.subr.mxu0 0.0
    %2133 = vmatpush2.msra.mxu0 0.0
    %2134 = vmatprep.subr.mxu0 0.0
    %2135 = vmatpush2.msra.mxu0 0.0
    %2136 = vmatprep.subr.mxu0 0.0
    %2137 = vmatpush2.msra.mxu0 0.0
    %2138 = vmatprep.subr.mxu0 0.0
    %2139 = vmatpush2.msra.mxu0 0.0
    %2140 = vmatprep.subr.mxu0 0.0
    %2141 = vmatpush2.msra.mxu0 0.0
    %2142 = vmatprep.subr.mxu0 0.0
    %2143 = vmatpush2.msra.mxu0 0.0
    %2144 = vmatprep.subr.mxu0 0.0
    %2145 = vmatpush2.msra.mxu0 0.0
    %2146 = vmatprep.subr.mxu0 0.0
    %2147 = vmatpush2.msra.mxu0 0.0
    %2148 = vmatprep.subr.mxu0 0.0
    %2149 = vmatpush2.msra.mxu0 0.0
    %2150 = vmatprep.mubr.f32.mxu0 0.0
    %2151 = vmatmul.mubr.f32.gmra.mxu0 %v2084
    %v2152 = vpop.f32.mrf.mxu0
    %v2153 = vadd.f32 0.0, %v2152
    %v2154 = vpop.f32.mrf.mxu0
    %2155 = vdwg.mxu0
    %v2158 = vsel %vm1580, %v858, %v849
    %v2159 = vsel %vm164, %v2158, 0
    %2161 = vmatprep.subr.mxu0 0.0
    %2162 = vmatpush1.msra.mxu0 0.0
    %2163 = vmatprep.subr.mxu0 0.0
    %2164 = vmatpush1.msra.mxu0 0.0
    %2165 = vmatprep.subr.mxu0 0.0
    %2166 = vmatpush1.msra.mxu0 0.0
    %2167 = vmatprep.subr.mxu0 0.0
    %2168 = vmatpush1.msra.mxu0 0.0
    %2169 = vmatprep.subr.mxu0 0.0
    %2170 = vmatpush1.msra.mxu0 0.0
    %2171 = vmatprep.subr.mxu0 0.0
    %2172 = vmatpush1.msra.mxu0 0.0
    %2173 = vmatprep.subr.mxu0 0.0
    %2174 = vmatpush1.msra.mxu0 0.0
    %2175 = vmatprep.subr.mxu0 0.0
    %2176 = vmatpush1.msra.mxu0 0.0
    %2177 = vmatprep.subr.mxu0 0.0
    %2178 = vmatpush1.msra.mxu0 0.0
    %2179 = vmatprep.subr.mxu0 0.0
    %2180 = vmatpush1.msra.mxu0 0.0
    %2181 = vmatprep.subr.mxu0 0.0
    %2182 = vmatpush1.msra.mxu0 0.0
    %2183 = vmatprep.subr.mxu0 0.0
    %2184 = vmatpush1.msra.mxu0 0.0
    %2185 = vmatprep.subr.mxu0 0.0
    %2186 = vmatpush1.msra.mxu0 0.0
    %2187 = vmatprep.subr.mxu0 0.0
    %2188 = vmatpush1.msra.mxu0 0.0
    %2189 = vmatprep.subr.mxu0 0.0
    %2190 = vmatpush1.msra.mxu0 %v2077
    %2191 = vmatprep.subr.mxu0 0.0
    %2192 = vmatpush1.msra.mxu0 %v2076
    %2193 = vmatprep.subr.mxu0 0.0
    %2194 = vmatpush2.msra.mxu0 0.0
    %2195 = vmatprep.subr.mxu0 0.0
    %2196 = vmatpush2.msra.mxu0 0.0
    %2197 = vmatprep.subr.mxu0 0.0
    %2198 = vmatpush2.msra.mxu0 0.0
    %2199 = vmatprep.subr.mxu0 0.0
    %2200 = vmatpush2.msra.mxu0 0.0
    %2201 = vmatprep.subr.mxu0 0.0
    %2202 = vmatpush2.msra.mxu0 0.0
    %2203 = vmatprep.subr.mxu0 0.0
    %2204 = vmatpush2.msra.mxu0 0.0
    %2205 = vmatprep.subr.mxu0 0.0
    %2206 = vmatpush2.msra.mxu0 0.0
    %2207 = vmatprep.subr.mxu0 0.0
    %2208 = vmatpush2.msra.mxu0 0.0
    %2209 = vmatprep.subr.mxu0 0.0
    %2210 = vmatpush2.msra.mxu0 0.0
    %2211 = vmatprep.subr.mxu0 0.0
    %2212 = vmatpush2.msra.mxu0 0.0
    %2213 = vmatprep.subr.mxu0 0.0
    %2214 = vmatpush2.msra.mxu0 0.0
    %2215 = vmatprep.subr.mxu0 0.0
    %2216 = vmatpush2.msra.mxu0 0.0
    %2217 = vmatprep.subr.mxu0 0.0
    %2218 = vmatpush2.msra.mxu0 0.0
    %2219 = vmatprep.subr.mxu0 0.0
    %2220 = vmatpush2.msra.mxu0 0.0
    %2221 = vmatprep.subr.mxu0 0.0
    %2222 = vmatpush2.msra.mxu0 0.0
    %2223 = vmatprep.subr.mxu0 0.0
    %2224 = vmatpush2.msra.mxu0 0.0
    %2225 = vmatprep.mubr.f32.mxu0 0.0
    %2226 = vmatmul.mubr.f32.gmra.mxu0 %v2159
    %v2227 = vpop.f32.mrf.mxu0
    %v2228 = vadd.f32 %v2153, %v2227
    %v2229 = vpop.f32.mrf.mxu0
    %2230 = vdwg.mxu0
    %s2231 = scalar_lea.vmem %s6, 2
    %v2232 = vld [vmem:[%s2231] sm:$0x1]
    %v2234 = vlaneseq
    %v2235 = vshrl.u32 %v2234, 7
    %v2236 = vsub.s32 0, %v2235
    %v2237 = vrot.slane %v2232, %v2236
    %v2239 = vadd.f32 %v2228, %v2237
    %s2240 = scalar_lea.vmem %s7, 2
    %v2241 = vld [vmem:[%s2240] sm:$0x1]
    %v2243 = vlaneseq
    %v2244 = vshrl.u32 %v2243, 7
    %v2245 = vsub.s32 0, %v2244
    %v2246 = vrot.slane %v2241, %v2245
    %v2248 = vadd.f32 %v2239, %v2246
    %s2249 = scalar_lea.vmem %s8, 64
    %v2250 = vld [vmem:[%s2249] sm:$0xff]
    %v2251 = vld [vmem:[%s2249 + $0x8] sm:$0xff]
    %v2252 = vld [vmem:[%s2249 + $0x10] sm:$0xff]
    %v2253 = vld [vmem:[%s2249 + $0x18] sm:$0xff]
    %v2255 = vsel %vm1928, %v2248, 0
    %2257 = vmatprep.subr.mxu0 0.0
    %2258 = vmatpush1.msra.mxu0 0.0
    %2259 = vmatprep.subr.mxu0 0.0
    %2260 = vmatpush1.msra.mxu0 0.0
    %2261 = vmatprep.subr.mxu0 0.0
    %2262 = vmatpush1.msra.mxu0 0.0
    %2263 = vmatprep.subr.mxu0 0.0
    %2264 = vmatpush1.msra.mxu0 0.0
    %2265 = vmatprep.subr.mxu0 0.0
    %2266 = vmatpush1.msra.mxu0 0.0
    %2267 = vmatprep.subr.mxu0 0.0
    %2268 = vmatpush1.msra.mxu0 0.0
    %2269 = vmatprep.subr.mxu0 0.0
    %2270 = vmatpush1.msra.mxu0 0.0
    %2271 = vmatprep.subr.mxu0 0.0
    %2272 = vmatpush1.msra.mxu0 0.0
    %2273 = vmatprep.subr.mxu0 0.0
    %2274 = vmatpush1.msra.mxu0 0.0
    %2275 = vmatprep.subr.mxu0 0.0
    %2276 = vmatpush1.msra.mxu0 0.0
    %2277 = vmatprep.subr.mxu0 0.0
    %2278 = vmatpush1.msra.mxu0 0.0
    %2279 = vmatprep.subr.mxu0 0.0
    %2280 = vmatpush1.msra.mxu0 0.0
    %2281 = vmatprep.subr.mxu0 0.0
    %2282 = vmatpush1.msra.mxu0 %v2253
    %2283 = vmatprep.subr.mxu0 0.0
    %2284 = vmatpush1.msra.mxu0 %v2252
    %2285 = vmatprep.subr.mxu0 0.0
    %2286 = vmatpush1.msra.mxu0 %v2251
    %2287 = vmatprep.subr.mxu0 0.0
    %2288 = vmatpush1.msra.mxu0 %v2250
    %2289 = vmatprep.subr.mxu0 0.0
    %2290 = vmatpush2.msra.mxu0 0.0
    %2291 = vmatprep.subr.mxu0 0.0
    %2292 = vmatpush2.msra.mxu0 0.0
    %2293 = vmatprep.subr.mxu0 0.0
    %2294 = vmatpush2.msra.mxu0 0.0
    %2295 = vmatprep.subr.mxu0 0.0
    %2296 = vmatpush2.msra.mxu0 0.0
    %2297 = vmatprep.subr.mxu0 0.0
    %2298 = vmatpush2.msra.mxu0 0.0
    %2299 = vmatprep.subr.mxu0 0.0
    %2300 = vmatpush2.msra.mxu0 0.0
    %2301 = vmatprep.subr.mxu0 0.0
    %2302 = vmatpush2.msra.mxu0 0.0
    %2303 = vmatprep.subr.mxu0 0.0
    %2304 = vmatpush2.msra.mxu0 0.0
    %2305 = vmatprep.subr.mxu0 0.0
    %2306 = vmatpush2.msra.mxu0 0.0
    %2307 = vmatprep.subr.mxu0 0.0
    %2308 = vmatpush2.msra.mxu0 0.0
    %2309 = vmatprep.subr.mxu0 0.0
    %2310 = vmatpush2.msra.mxu0 0.0
    %2311 = vmatprep.subr.mxu0 0.0
    %2312 = vmatpush2.msra.mxu0 0.0
    %2313 = vmatprep.subr.mxu0 0.0
    %2314 = vmatpush2.msra.mxu0 0.0
    %2315 = vmatprep.subr.mxu0 0.0
    %2316 = vmatpush2.msra.mxu0 0.0
    %2317 = vmatprep.subr.mxu0 0.0
    %2318 = vmatpush2.msra.mxu0 0.0
    %2319 = vmatprep.subr.mxu0 0.0
    %2320 = vmatpush2.msra.mxu0 0.0
    %2321 = vmatprep.mubr.f32.mxu0 0.0
    %2322 = vmatmul.mubr.f32.gmra.mxu0 %v2255
    %v2323 = vpop.f32.mrf.mxu0
    %v2324 = vadd.f32 0.0, %v2323
    %v2325 = vpop.f32.mrf.mxu0
    %2326 = vdwg.mxu0
    %v2327 = vadd.f32 %v2072, %v2324
    %s2328 = scalar_lea.vmem [#allocation8], 48
    %v2329 = vld [vmem:[%s2328] sm:$0xff]
    %v2330 = vld [vmem:[%s2328 + $0x8] sm:$0xff]
    %s2331 = scalar_lea.vmem [#allocation10], 48
    %v2332 = vld [vmem:[%s2331] sm:$0xff]
    %v2333 = vld [vmem:[%s2331 + $0x8] sm:$0xff]
    %v2336 = vsel %vm1580, %v1517, %v1510
    %v2337 = vsel %vm164, %v2336, 0
    %2339 = vmatprep.subr.mxu0 0.0
    %2340 = vmatpush1.msra.mxu0 0.0
    %2341 = vmatprep.subr.mxu0 0.0
    %2342 = vmatpush1.msra.mxu0 0.0
    %2343 = vmatprep.subr.mxu0 0.0
    %2344 = vmatpush1.msra.mxu0 0.0
    %2345 = vmatprep.subr.mxu0 0.0
    %2346 = vmatpush1.msra.mxu0 0.0
    %2347 = vmatprep.subr.mxu0 0.0
    %2348 = vmatpush1.msra.mxu0 0.0
    %2349 = vmatprep.subr.mxu0 0.0
    %2350 = vmatpush1.msra.mxu0 0.0
    %2351 = vmatprep.subr.mxu0 0.0
    %2352 = vmatpush1.msra.mxu0 0.0
    %2353 = vmatprep.subr.mxu0 0.0
    %2354 = vmatpush1.msra.mxu0 0.0
    %2355 = vmatprep.subr.mxu0 0.0
    %2356 = vmatpush1.msra.mxu0 0.0
    %2357 = vmatprep.subr.mxu0 0.0
    %2358 = vmatpush1.msra.mxu0 0.0
    %2359 = vmatprep.subr.mxu0 0.0
    %2360 = vmatpush1.msra.mxu0 0.0
    %2361 = vmatprep.subr.mxu0 0.0
    %2362 = vmatpush1.msra.mxu0 0.0
    %2363 = vmatprep.subr.mxu0 0.0
    %2364 = vmatpush1.msra.mxu0 0.0
    %2365 = vmatprep.subr.mxu0 0.0
    %2366 = vmatpush1.msra.mxu0 0.0
    %2367 = vmatprep.subr.mxu0 0.0
    %2368 = vmatpush1.msra.mxu0 %v2333
    %2369 = vmatprep.subr.mxu0 0.0
    %2370 = vmatpush1.msra.mxu0 %v2332
    %2371 = vmatprep.subr.mxu0 0.0
    %2372 = vmatpush2.msra.mxu0 0.0
    %2373 = vmatprep.subr.mxu0 0.0
    %2374 = vmatpush2.msra.mxu0 0.0
    %2375 = vmatprep.subr.mxu0 0.0
    %2376 = vmatpush2.msra.mxu0 0.0
    %2377 = vmatprep.subr.mxu0 0.0
    %2378 = vmatpush2.msra.mxu0 0.0
    %2379 = vmatprep.subr.mxu0 0.0
    %2380 = vmatpush2.msra.mxu0 0.0
    %2381 = vmatprep.subr.mxu0 0.0
    %2382 = vmatpush2.msra.mxu0 0.0
    %2383 = vmatprep.subr.mxu0 0.0
    %2384 = vmatpush2.msra.mxu0 0.0
    %2385 = vmatprep.subr.mxu0 0.0
    %2386 = vmatpush2.msra.mxu0 0.0
    %2387 = vmatprep.subr.mxu0 0.0
    %2388 = vmatpush2.msra.mxu0 0.0
    %2389 = vmatprep.subr.mxu0 0.0
    %2390 = vmatpush2.msra.mxu0 0.0
    %2391 = vmatprep.subr.mxu0 0.0
    %2392 = vmatpush2.msra.mxu0 0.0
    %2393 = vmatprep.subr.mxu0 0.0
    %2394 = vmatpush2.msra.mxu0 0.0
    %2395 = vmatprep.subr.mxu0 0.0
    %2396 = vmatpush2.msra.mxu0 0.0
    %2397 = vmatprep.subr.mxu0 0.0
    %2398 = vmatpush2.msra.mxu0 0.0
    %2399 = vmatprep.subr.mxu0 0.0
    %2400 = vmatpush2.msra.mxu0 0.0
    %2401 = vmatprep.subr.mxu0 0.0
    %2402 = vmatpush2.msra.mxu0 0.0
    %2403 = vmatprep.mubr.f32.mxu0 0.0
    %2404 = vmatmul.mubr.f32.gmra.mxu0 %v2337
    %v2405 = vpop.f32.mrf.mxu0
    %v2406 = vadd.f32 0.0, %v2405
    %v2407 = vpop.f32.mrf.mxu0
    %2408 = vdwg.mxu0
    %v2411 = vsel %vm1580, %v876, %v867
    %v2412 = vsel %vm164, %v2411, 0
    %2414 = vmatprep.subr.mxu0 0.0
    %2415 = vmatpush1.msra.mxu0 0.0
    %2416 = vmatprep.subr.mxu0 0.0
    %2417 = vmatpush1.msra.mxu0 0.0
    %2418 = vmatprep.subr.mxu0 0.0
    %2419 = vmatpush1.msra.mxu0 0.0
    %2420 = vmatprep.subr.mxu0 0.0
    %2421 = vmatpush1.msra.mxu0 0.0
    %2422 = vmatprep.subr.mxu0 0.0
    %2423 = vmatpush1.msra.mxu0 0.0
    %2424 = vmatprep.subr.mxu0 0.0
    %2425 = vmatpush1.msra.mxu0 0.0
    %2426 = vmatprep.subr.mxu0 0.0
    %2427 = vmatpush1.msra.mxu0 0.0
    %2428 = vmatprep.subr.mxu0 0.0
    %2429 = vmatpush1.msra.mxu0 0.0
    %2430 = vmatprep.subr.mxu0 0.0
    %2431 = vmatpush1.msra.mxu0 0.0
    %2432 = vmatprep.subr.mxu0 0.0
    %2433 = vmatpush1.msra.mxu0 0.0
    %2434 = vmatprep.subr.mxu0 0.0
    %2435 = vmatpush1.msra.mxu0 0.0
    %2436 = vmatprep.subr.mxu0 0.0
    %2437 = vmatpush1.msra.mxu0 0.0
    %2438 = vmatprep.subr.mxu0 0.0
    %2439 = vmatpush1.msra.mxu0 0.0
    %2440 = vmatprep.subr.mxu0 0.0
    %2441 = vmatpush1.msra.mxu0 0.0
    %2442 = vmatprep.subr.mxu0 0.0
    %2443 = vmatpush1.msra.mxu0 %v2330
    %2444 = vmatprep.subr.mxu0 0.0
    %2445 = vmatpush1.msra.mxu0 %v2329
    %2446 = vmatprep.subr.mxu0 0.0
    %2447 = vmatpush2.msra.mxu0 0.0
    %2448 = vmatprep.subr.mxu0 0.0
    %2449 = vmatpush2.msra.mxu0 0.0
    %2450 = vmatprep.subr.mxu0 0.0
    %2451 = vmatpush2.msra.mxu0 0.0
    %2452 = vmatprep.subr.mxu0 0.0
    %2453 = vmatpush2.msra.mxu0 0.0
    %2454 = vmatprep.subr.mxu0 0.0
    %2455 = vmatpush2.msra.mxu0 0.0
    %2456 = vmatprep.subr.mxu0 0.0
    %2457 = vmatpush2.msra.mxu0 0.0
    %2458 = vmatprep.subr.mxu0 0.0
    %2459 = vmatpush2.msra.mxu0 0.0
    %2460 = vmatprep.subr.mxu0 0.0
    %2461 = vmatpush2.msra.mxu0 0.0
    %2462 = vmatprep.subr.mxu0 0.0
    %2463 = vmatpush2.msra.mxu0 0.0
    %2464 = vmatprep.subr.mxu0 0.0
    %2465 = vmatpush2.msra.mxu0 0.0
    %2466 = vmatprep.subr.mxu0 0.0
    %2467 = vmatpush2.msra.mxu0 0.0
    %2468 = vmatprep.subr.mxu0 0.0
    %2469 = vmatpush2.msra.mxu0 0.0
    %2470 = vmatprep.subr.mxu0 0.0
    %2471 = vmatpush2.msra.mxu0 0.0
    %2472 = vmatprep.subr.mxu0 0.0
    %2473 = vmatpush2.msra.mxu0 0.0
    %2474 = vmatprep.subr.mxu0 0.0
    %2475 = vmatpush2.msra.mxu0 0.0
    %2476 = vmatprep.subr.mxu0 0.0
    %2477 = vmatpush2.msra.mxu0 0.0
    %2478 = vmatprep.mubr.f32.mxu0 0.0
    %2479 = vmatmul.mubr.f32.gmra.mxu0 %v2412
    %v2480 = vpop.f32.mrf.mxu0
    %v2481 = vadd.f32 %v2406, %v2480
    %v2482 = vpop.f32.mrf.mxu0
    %2483 = vdwg.mxu0
    %s2484 = scalar_lea.vmem %s6, 3
    %v2485 = vld [vmem:[%s2484] sm:$0x1]
    %v2487 = vlaneseq
    %v2488 = vshrl.u32 %v2487, 7
    %v2489 = vsub.s32 0, %v2488
    %v2490 = vrot.slane %v2485, %v2489
    %v2492 = vadd.f32 %v2481, %v2490
    %s2493 = scalar_lea.vmem %s7, 3
    %v2494 = vld [vmem:[%s2493] sm:$0x1]
    %v2496 = vlaneseq
    %v2497 = vshrl.u32 %v2496, 7
    %v2498 = vsub.s32 0, %v2497
    %v2499 = vrot.slane %v2494, %v2498
    %v2501 = vadd.f32 %v2492, %v2499
    %s2502 = scalar_lea.vmem %s8, 96
    %v2503 = vld [vmem:[%s2502] sm:$0xff]
    %v2504 = vld [vmem:[%s2502 + $0x8] sm:$0xff]
    %v2505 = vld [vmem:[%s2502 + $0x10] sm:$0xff]
    %v2506 = vld [vmem:[%s2502 + $0x18] sm:$0xff]
    %v2508 = vsel %vm1928, %v2501, 0
    %2510 = vmatprep.subr.mxu0 0.0
    %2511 = vmatpush1.msra.mxu0 0.0
    %2512 = vmatprep.subr.mxu0 0.0
    %2513 = vmatpush1.msra.mxu0 0.0
    %2514 = vmatprep.subr.mxu0 0.0
    %2515 = vmatpush1.msra.mxu0 0.0
    %2516 = vmatprep.subr.mxu0 0.0
    %2517 = vmatpush1.msra.mxu0 0.0
    %2518 = vmatprep.subr.mxu0 0.0
    %2519 = vmatpush1.msra.mxu0 0.0
    %2520 = vmatprep.subr.mxu0 0.0
    %2521 = vmatpush1.msra.mxu0 0.0
    %2522 = vmatprep.subr.mxu0 0.0
    %2523 = vmatpush1.msra.mxu0 0.0
    %2524 = vmatprep.subr.mxu0 0.0
    %2525 = vmatpush1.msra.mxu0 0.0
    %2526 = vmatprep.subr.mxu0 0.0
    %2527 = vmatpush1.msra.mxu0 0.0
    %2528 = vmatprep.subr.mxu0 0.0
    %2529 = vmatpush1.msra.mxu0 0.0
    %2530 = vmatprep.subr.mxu0 0.0
    %2531 = vmatpush1.msra.mxu0 0.0
    %2532 = vmatprep.subr.mxu0 0.0
    %2533 = vmatpush1.msra.mxu0 0.0
    %2534 = vmatprep.subr.mxu0 0.0
    %2535 = vmatpush1.msra.mxu0 %v2506
    %2536 = vmatprep.subr.mxu0 0.0
    %2537 = vmatpush1.msra.mxu0 %v2505
    %2538 = vmatprep.subr.mxu0 0.0
    %2539 = vmatpush1.msra.mxu0 %v2504
    %2540 = vmatprep.subr.mxu0 0.0
    %2541 = vmatpush1.msra.mxu0 %v2503
    %2542 = vmatprep.subr.mxu0 0.0
    %2543 = vmatpush2.msra.mxu0 0.0
    %2544 = vmatprep.subr.mxu0 0.0
    %2545 = vmatpush2.msra.mxu0 0.0
    %2546 = vmatprep.subr.mxu0 0.0
    %2547 = vmatpush2.msra.mxu0 0.0
    %2548 = vmatprep.subr.mxu0 0.0
    %2549 = vmatpush2.msra.mxu0 0.0
    %2550 = vmatprep.subr.mxu0 0.0
    %2551 = vmatpush2.msra.mxu0 0.0
    %2552 = vmatprep.subr.mxu0 0.0
    %2553 = vmatpush2.msra.mxu0 0.0
    %2554 = vmatprep.subr.mxu0 0.0
    %2555 = vmatpush2.msra.mxu0 0.0
    %2556 = vmatprep.subr.mxu0 0.0
    %2557 = vmatpush2.msra.mxu0 0.0
    %2558 = vmatprep.subr.mxu0 0.0
    %2559 = vmatpush2.msra.mxu0 0.0
    %2560 = vmatprep.subr.mxu0 0.0
    %2561 = vmatpush2.msra.mxu0 0.0
    %2562 = vmatprep.subr.mxu0 0.0
    %2563 = vmatpush2.msra.mxu0 0.0
    %2564 = vmatprep.subr.mxu0 0.0
    %2565 = vmatpush2.msra.mxu0 0.0
    %2566 = vmatprep.subr.mxu0 0.0
    %2567 = vmatpush2.msra.mxu0 0.0
    %2568 = vmatprep.subr.mxu0 0.0
    %2569 = vmatpush2.msra.mxu0 0.0
    %2570 = vmatprep.subr.mxu0 0.0
    %2571 = vmatpush2.msra.mxu0 0.0
    %2572 = vmatprep.subr.mxu0 0.0
    %2573 = vmatpush2.msra.mxu0 0.0
    %2574 = vmatprep.mubr.f32.mxu0 0.0
    %2575 = vmatmul.mubr.f32.gmra.mxu0 %v2508
    %v2576 = vpop.f32.mrf.mxu0
    %v2577 = vadd.f32 0.0, %v2576
    %v2578 = vpop.f32.mrf.mxu0
    %2579 = vdwg.mxu0
    %v2580 = vadd.f32 %v2327, %v2577
    %s2581 = scalar_lea.vmem [#allocation8], 64
    %v2582 = vld [vmem:[%s2581] sm:$0xff]
    %v2583 = vld [vmem:[%s2581 + $0x8] sm:$0xff]
    %s2584 = scalar_lea.vmem [#allocation10], 64
    %v2585 = vld [vmem:[%s2584] sm:$0xff]
    %v2586 = vld [vmem:[%s2584 + $0x8] sm:$0xff]
    %v2589 = vsel %vm1580, %v1531, %v1524
    %v2590 = vsel %vm164, %v2589, 0
    %2592 = vmatprep.subr.mxu0 0.0
    %2593 = vmatpush1.msra.mxu0 0.0
    %2594 = vmatprep.subr.mxu0 0.0
    %2595 = vmatpush1.msra.mxu0 0.0
    %2596 = vmatprep.subr.mxu0 0.0
    %2597 = vmatpush1.msra.mxu0 0.0
    %2598 = vmatprep.subr.mxu0 0.0
    %2599 = vmatpush1.msra.mxu0 0.0
    %2600 = vmatprep.subr.mxu0 0.0
    %2601 = vmatpush1.msra.mxu0 0.0
    %2602 = vmatprep.subr.mxu0 0.0
    %2603 = vmatpush1.msra.mxu0 0.0
    %2604 = vmatprep.subr.mxu0 0.0
    %2605 = vmatpush1.msra.mxu0 0.0
    %2606 = vmatprep.subr.mxu0 0.0
    %2607 = vmatpush1.msra.mxu0 0.0
    %2608 = vmatprep.subr.mxu0 0.0
    %2609 = vmatpush1.msra.mxu0 0.0
    %2610 = vmatprep.subr.mxu0 0.0
    %2611 = vmatpush1.msra.mxu0 0.0
    %2612 = vmatprep.subr.mxu0 0.0
    %2613 = vmatpush1.msra.mxu0 0.0
    %2614 = vmatprep.subr.mxu0 0.0
    %2615 = vmatpush1.msra.mxu0 0.0
    %2616 = vmatprep.subr.mxu0 0.0
    %2617 = vmatpush1.msra.mxu0 0.0
    %2618 = vmatprep.subr.mxu0 0.0
    %2619 = vmatpush1.msra.mxu0 0.0
    %2620 = vmatprep.subr.mxu0 0.0
    %2621 = vmatpush1.msra.mxu0 %v2586
    %2622 = vmatprep.subr.mxu0 0.0
    %2623 = vmatpush1.msra.mxu0 %v2585
    %2624 = vmatprep.subr.mxu0 0.0
    %2625 = vmatpush2.msra.mxu0 0.0
    %2626 = vmatprep.subr.mxu0 0.0
    %2627 = vmatpush2.msra.mxu0 0.0
    %2628 = vmatprep.subr.mxu0 0.0
    %2629 = vmatpush2.msra.mxu0 0.0
    %2630 = vmatprep.subr.mxu0 0.0
    %2631 = vmatpush2.msra.mxu0 0.0
    %2632 = vmatprep.subr.mxu0 0.0
    %2633 = vmatpush2.msra.mxu0 0.0
    %2634 = vmatprep.subr.mxu0 0.0
    %2635 = vmatpush2.msra.mxu0 0.0
    %2636 = vmatprep.subr.mxu0 0.0
    %2637 = vmatpush2.msra.mxu0 0.0
    %2638 = vmatprep.subr.mxu0 0.0
    %2639 = vmatpush2.msra.mxu0 0.0
    %2640 = vmatprep.subr.mxu0 0.0
    %2641 = vmatpush2.msra.mxu0 0.0
    %2642 = vmatprep.subr.mxu0 0.0
    %2643 = vmatpush2.msra.mxu0 0.0
    %2644 = vmatprep.subr.mxu0 0.0
    %2645 = vmatpush2.msra.mxu0 0.0
    %2646 = vmatprep.subr.mxu0 0.0
    %2647 = vmatpush2.msra.mxu0 0.0
    %2648 = vmatprep.subr.mxu0 0.0
    %2649 = vmatpush2.msra.mxu0 0.0
    %2650 = vmatprep.subr.mxu0 0.0
    %2651 = vmatpush2.msra.mxu0 0.0
    %2652 = vmatprep.subr.mxu0 0.0
    %2653 = vmatpush2.msra.mxu0 0.0
    %2654 = vmatprep.subr.mxu0 0.0
    %2655 = vmatpush2.msra.mxu0 0.0
    %2656 = vmatprep.mubr.f32.mxu0 0.0
    %2657 = vmatmul.mubr.f32.gmra.mxu0 %v2590
    %v2658 = vpop.f32.mrf.mxu0
    %v2659 = vadd.f32 0.0, %v2658
    %v2660 = vpop.f32.mrf.mxu0
    %2661 = vdwg.mxu0
    %v2664 = vsel %vm1580, %v894, %v885
    %v2665 = vsel %vm164, %v2664, 0
    %2667 = vmatprep.subr.mxu0 0.0
    %2668 = vmatpush1.msra.mxu0 0.0
    %2669 = vmatprep.subr.mxu0 0.0
    %2670 = vmatpush1.msra.mxu0 0.0
    %2671 = vmatprep.subr.mxu0 0.0
    %2672 = vmatpush1.msra.mxu0 0.0
    %2673 = vmatprep.subr.mxu0 0.0
    %2674 = vmatpush1.msra.mxu0 0.0
    %2675 = vmatprep.subr.mxu0 0.0
    %2676 = vmatpush1.msra.mxu0 0.0
    %2677 = vmatprep.subr.mxu0 0.0
    %2678 = vmatpush1.msra.mxu0 0.0
    %2679 = vmatprep.subr.mxu0 0.0
    %2680 = vmatpush1.msra.mxu0 0.0
    %2681 = vmatprep.subr.mxu0 0.0
    %2682 = vmatpush1.msra.mxu0 0.0
    %2683 = vmatprep.subr.mxu0 0.0
    %2684 = vmatpush1.msra.mxu0 0.0
    %2685 = vmatprep.subr.mxu0 0.0
    %2686 = vmatpush1.msra.mxu0 0.0
    %2687 = vmatprep.subr.mxu0 0.0
    %2688 = vmatpush1.msra.mxu0 0.0
    %2689 = vmatprep.subr.mxu0 0.0
    %2690 = vmatpush1.msra.mxu0 0.0
    %2691 = vmatprep.subr.mxu0 0.0
    %2692 = vmatpush1.msra.mxu0 0.0
    %2693 = vmatprep.subr.mxu0 0.0
    %2694 = vmatpush1.msra.mxu0 0.0
    %2695 = vmatprep.subr.mxu0 0.0
    %2696 = vmatpush1.msra.mxu0 %v2583
    %2697 = vmatprep.subr.mxu0 0.0
    %2698 = vmatpush1.msra.mxu0 %v2582
    %2699 = vmatprep.subr.mxu0 0.0
    %2700 = vmatpush2.msra.mxu0 0.0
    %2701 = vmatprep.subr.mxu0 0.0
    %2702 = vmatpush2.msra.mxu0 0.0
    %2703 = vmatprep.subr.mxu0 0.0
    %2704 = vmatpush2.msra.mxu0 0.0
    %2705 = vmatprep.subr.mxu0 0.0
    %2706 = vmatpush2.msra.mxu0 0.0
    %2707 = vmatprep.subr.mxu0 0.0
    %2708 = vmatpush2.msra.mxu0 0.0
    %2709 = vmatprep.subr.mxu0 0.0
    %2710 = vmatpush2.msra.mxu0 0.0
    %2711 = vmatprep.subr.mxu0 0.0
    %2712 = vmatpush2.msra.mxu0 0.0
    %2713 = vmatprep.subr.mxu0 0.0
    %2714 = vmatpush2.msra.mxu0 0.0
    %2715 = vmatprep.subr.mxu0 0.0
    %2716 = vmatpush2.msra.mxu0 0.0
    %2717 = vmatprep.subr.mxu0 0.0
    %2718 = vmatpush2.msra.mxu0 0.0
    %2719 = vmatprep.subr.mxu0 0.0
    %2720 = vmatpush2.msra.mxu0 0.0
    %2721 = vmatprep.subr.mxu0 0.0
    %2722 = vmatpush2.msra.mxu0 0.0
    %2723 = vmatprep.subr.mxu0 0.0
    %2724 = vmatpush2.msra.mxu0 0.0
    %2725 = vmatprep.subr.mxu0 0.0
    %2726 = vmatpush2.msra.mxu0 0.0
    %2727 = vmatprep.subr.mxu0 0.0
    %2728 = vmatpush2.msra.mxu0 0.0
    %2729 = vmatprep.subr.mxu0 0.0
    %2730 = vmatpush2.msra.mxu0 0.0
    %2731 = vmatprep.mubr.f32.mxu0 0.0
    %2732 = vmatmul.mubr.f32.gmra.mxu0 %v2665
    %v2733 = vpop.f32.mrf.mxu0
    %v2734 = vadd.f32 %v2659, %v2733
    %v2735 = vpop.f32.mrf.mxu0
    %2736 = vdwg.mxu0
    %s2737 = scalar_lea.vmem %s6, 4
    %v2738 = vld [vmem:[%s2737] sm:$0x1]
    %v2740 = vlaneseq
    %v2741 = vshrl.u32 %v2740, 7
    %v2742 = vsub.s32 0, %v2741
    %v2743 = vrot.slane %v2738, %v2742
    %v2745 = vadd.f32 %v2734, %v2743
    %s2746 = scalar_lea.vmem %s7, 4
    %v2747 = vld [vmem:[%s2746] sm:$0x1]
    %v2749 = vlaneseq
    %v2750 = vshrl.u32 %v2749, 7
    %v2751 = vsub.s32 0, %v2750
    %v2752 = vrot.slane %v2747, %v2751
    %v2754 = vadd.f32 %v2745, %v2752
    %s2755 = scalar_lea.vmem %s8, 128
    %v2756 = vld [vmem:[%s2755] sm:$0xff]
    %v2757 = vld [vmem:[%s2755 + $0x8] sm:$0xff]
    %v2758 = vld [vmem:[%s2755 + $0x10] sm:$0xff]
    %v2759 = vld [vmem:[%s2755 + $0x18] sm:$0xff]
    %v2761 = vsel %vm1928, %v2754, 0
    %2763 = vmatprep.subr.mxu0 0.0
    %2764 = vmatpush1.msra.mxu0 0.0
    %2765 = vmatprep.subr.mxu0 0.0
    %2766 = vmatpush1.msra.mxu0 0.0
    %2767 = vmatprep.subr.mxu0 0.0
    %2768 = vmatpush1.msra.mxu0 0.0
    %2769 = vmatprep.subr.mxu0 0.0
    %2770 = vmatpush1.msra.mxu0 0.0
    %2771 = vmatprep.subr.mxu0 0.0
    %2772 = vmatpush1.msra.mxu0 0.0
    %2773 = vmatprep.subr.mxu0 0.0
    %2774 = vmatpush1.msra.mxu0 0.0
    %2775 = vmatprep.subr.mxu0 0.0
    %2776 = vmatpush1.msra.mxu0 0.0
    %2777 = vmatprep.subr.mxu0 0.0
    %2778 = vmatpush1.msra.mxu0 0.0
    %2779 = vmatprep.subr.mxu0 0.0
    %2780 = vmatpush1.msra.mxu0 0.0
    %2781 = vmatprep.subr.mxu0 0.0
    %2782 = vmatpush1.msra.mxu0 0.0
    %2783 = vmatprep.subr.mxu0 0.0
    %2784 = vmatpush1.msra.mxu0 0.0
    %2785 = vmatprep.subr.mxu0 0.0
    %2786 = vmatpush1.msra.mxu0 0.0
    %2787 = vmatprep.subr.mxu0 0.0
    %2788 = vmatpush1.msra.mxu0 %v2759
    %2789 = vmatprep.subr.mxu0 0.0
    %2790 = vmatpush1.msra.mxu0 %v2758
    %2791 = vmatprep.subr.mxu0 0.0
    %2792 = vmatpush1.msra.mxu0 %v2757
    %2793 = vmatprep.subr.mxu0 0.0
    %2794 = vmatpush1.msra.mxu0 %v2756
    %2795 = vmatprep.subr.mxu0 0.0
    %2796 = vmatpush2.msra.mxu0 0.0
    %2797 = vmatprep.subr.mxu0 0.0
    %2798 = vmatpush2.msra.mxu0 0.0
    %2799 = vmatprep.subr.mxu0 0.0
    %2800 = vmatpush2.msra.mxu0 0.0
    %2801 = vmatprep.subr.mxu0 0.0
    %2802 = vmatpush2.msra.mxu0 0.0
    %2803 = vmatprep.subr.mxu0 0.0
    %2804 = vmatpush2.msra.mxu0 0.0
    %2805 = vmatprep.subr.mxu0 0.0
    %2806 = vmatpush2.msra.mxu0 0.0
    %2807 = vmatprep.subr.mxu0 0.0
    %2808 = vmatpush2.msra.mxu0 0.0
    %2809 = vmatprep.subr.mxu0 0.0
    %2810 = vmatpush2.msra.mxu0 0.0
    %2811 = vmatprep.subr.mxu0 0.0
    %2812 = vmatpush2.msra.mxu0 0.0
    %2813 = vmatprep.subr.mxu0 0.0
    %2814 = vmatpush2.msra.mxu0 0.0
    %2815 = vmatprep.subr.mxu0 0.0
    %2816 = vmatpush2.msra.mxu0 0.0
    %2817 = vmatprep.subr.mxu0 0.0
    %2818 = vmatpush2.msra.mxu0 0.0
    %2819 = vmatprep.subr.mxu0 0.0
    %2820 = vmatpush2.msra.mxu0 0.0
    %2821 = vmatprep.subr.mxu0 0.0
    %2822 = vmatpush2.msra.mxu0 0.0
    %2823 = vmatprep.subr.mxu0 0.0
    %2824 = vmatpush2.msra.mxu0 0.0
    %2825 = vmatprep.subr.mxu0 0.0
    %2826 = vmatpush2.msra.mxu0 0.0
    %2827 = vmatprep.mubr.f32.mxu0 0.0
    %2828 = vmatmul.mubr.f32.gmra.mxu0 %v2761
    %v2829 = vpop.f32.mrf.mxu0
    %v2830 = vadd.f32 0.0, %v2829
    %v2831 = vpop.f32.mrf.mxu0
    %2832 = vdwg.mxu0
    %v2833 = vadd.f32 %v2580, %v2830
    %s2834 = scalar_lea.vmem [#allocation8], 80
    %v2835 = vld [vmem:[%s2834] sm:$0xff]
    %v2836 = vld [vmem:[%s2834 + $0x8] sm:$0xff]
    %s2837 = scalar_lea.vmem [#allocation10], 80
    %v2838 = vld [vmem:[%s2837] sm:$0xff]
    %v2839 = vld [vmem:[%s2837 + $0x8] sm:$0xff]
    %v2842 = vsel %vm1580, %v1545, %v1538
    %v2843 = vsel %vm164, %v2842, 0
    %2845 = vmatprep.subr.mxu0 0.0
    %2846 = vmatpush1.msra.mxu0 0.0
    %2847 = vmatprep.subr.mxu0 0.0
    %2848 = vmatpush1.msra.mxu0 0.0
    %2849 = vmatprep.subr.mxu0 0.0
    %2850 = vmatpush1.msra.mxu0 0.0
    %2851 = vmatprep.subr.mxu0 0.0
    %2852 = vmatpush1.msra.mxu0 0.0
    %2853 = vmatprep.subr.mxu0 0.0
    %2854 = vmatpush1.msra.mxu0 0.0
    %2855 = vmatprep.subr.mxu0 0.0
    %2856 = vmatpush1.msra.mxu0 0.0
    %2857 = vmatprep.subr.mxu0 0.0
    %2858 = vmatpush1.msra.mxu0 0.0
    %2859 = vmatprep.subr.mxu0 0.0
    %2860 = vmatpush1.msra.mxu0 0.0
    %2861 = vmatprep.subr.mxu0 0.0
    %2862 = vmatpush1.msra.mxu0 0.0
    %2863 = vmatprep.subr.mxu0 0.0
    %2864 = vmatpush1.msra.mxu0 0.0
    %2865 = vmatprep.subr.mxu0 0.0
    %2866 = vmatpush1.msra.mxu0 0.0
    %2867 = vmatprep.subr.mxu0 0.0
    %2868 = vmatpush1.msra.mxu0 0.0
    %2869 = vmatprep.subr.mxu0 0.0
    %2870 = vmatpush1.msra.mxu0 0.0
    %2871 = vmatprep.subr.mxu0 0.0
    %2872 = vmatpush1.msra.mxu0 0.0
    %2873 = vmatprep.subr.mxu0 0.0
    %2874 = vmatpush1.msra.mxu0 %v2839
    %2875 = vmatprep.subr.mxu0 0.0
    %2876 = vmatpush1.msra.mxu0 %v2838
    %2877 = vmatprep.subr.mxu0 0.0
    %2878 = vmatpush2.msra.mxu0 0.0
    %2879 = vmatprep.subr.mxu0 0.0
    %2880 = vmatpush2.msra.mxu0 0.0
    %2881 = vmatprep.subr.mxu0 0.0
    %2882 = vmatpush2.msra.mxu0 0.0
    %2883 = vmatprep.subr.mxu0 0.0
    %2884 = vmatpush2.msra.mxu0 0.0
    %2885 = vmatprep.subr.mxu0 0.0
    %2886 = vmatpush2.msra.mxu0 0.0
    %2887 = vmatprep.subr.mxu0 0.0
    %2888 = vmatpush2.msra.mxu0 0.0
    %2889 = vmatprep.subr.mxu0 0.0
    %2890 = vmatpush2.msra.mxu0 0.0
    %2891 = vmatprep.subr.mxu0 0.0
    %2892 = vmatpush2.msra.mxu0 0.0
    %2893 = vmatprep.subr.mxu0 0.0
    %2894 = vmatpush2.msra.mxu0 0.0
    %2895 = vmatprep.subr.mxu0 0.0
    %2896 = vmatpush2.msra.mxu0 0.0
    %2897 = vmatprep.subr.mxu0 0.0
    %2898 = vmatpush2.msra.mxu0 0.0
    %2899 = vmatprep.subr.mxu0 0.0
    %2900 = vmatpush2.msra.mxu0 0.0
    %2901 = vmatprep.subr.mxu0 0.0
    %2902 = vmatpush2.msra.mxu0 0.0
    %2903 = vmatprep.subr.mxu0 0.0
    %2904 = vmatpush2.msra.mxu0 0.0
    %2905 = vmatprep.subr.mxu0 0.0
    %2906 = vmatpush2.msra.mxu0 0.0
    %2907 = vmatprep.subr.mxu0 0.0
    %2908 = vmatpush2.msra.mxu0 0.0
    %2909 = vmatprep.mubr.f32.mxu0 0.0
    %2910 = vmatmul.mubr.f32.gmra.mxu0 %v2843
    %v2911 = vpop.f32.mrf.mxu0
    %v2912 = vadd.f32 0.0, %v2911
    %v2913 = vpop.f32.mrf.mxu0
    %2914 = vdwg.mxu0
    %v2917 = vsel %vm1580, %v912, %v903
    %v2918 = vsel %vm164, %v2917, 0
    %2920 = vmatprep.subr.mxu0 0.0
    %2921 = vmatpush1.msra.mxu0 0.0
    %2922 = vmatprep.subr.mxu0 0.0
    %2923 = vmatpush1.msra.mxu0 0.0
    %2924 = vmatprep.subr.mxu0 0.0
    %2925 = vmatpush1.msra.mxu0 0.0
    %2926 = vmatprep.subr.mxu0 0.0
    %2927 = vmatpush1.msra.mxu0 0.0
    %2928 = vmatprep.subr.mxu0 0.0
    %2929 = vmatpush1.msra.mxu0 0.0
    %2930 = vmatprep.subr.mxu0 0.0
    %2931 = vmatpush1.msra.mxu0 0.0
    %2932 = vmatprep.subr.mxu0 0.0
    %2933 = vmatpush1.msra.mxu0 0.0
    %2934 = vmatprep.subr.mxu0 0.0
    %2935 = vmatpush1.msra.mxu0 0.0
    %2936 = vmatprep.subr.mxu0 0.0
    %2937 = vmatpush1.msra.mxu0 0.0
    %2938 = vmatprep.subr.mxu0 0.0
    %2939 = vmatpush1.msra.mxu0 0.0
    %2940 = vmatprep.subr.mxu0 0.0
    %2941 = vmatpush1.msra.mxu0 0.0
    %2942 = vmatprep.subr.mxu0 0.0
    %2943 = vmatpush1.msra.mxu0 0.0
    %2944 = vmatprep.subr.mxu0 0.0
    %2945 = vmatpush1.msra.mxu0 0.0
    %2946 = vmatprep.subr.mxu0 0.0
    %2947 = vmatpush1.msra.mxu0 0.0
    %2948 = vmatprep.subr.mxu0 0.0
    %2949 = vmatpush1.msra.mxu0 %v2836
    %2950 = vmatprep.subr.mxu0 0.0
    %2951 = vmatpush1.msra.mxu0 %v2835
    %2952 = vmatprep.subr.mxu0 0.0
    %2953 = vmatpush2.msra.mxu0 0.0
    %2954 = vmatprep.subr.mxu0 0.0
    %2955 = vmatpush2.msra.mxu0 0.0
    %2956 = vmatprep.subr.mxu0 0.0
    %2957 = vmatpush2.msra.mxu0 0.0
    %2958 = vmatprep.subr.mxu0 0.0
    %2959 = vmatpush2.msra.mxu0 0.0
    %2960 = vmatprep.subr.mxu0 0.0
    %2961 = vmatpush2.msra.mxu0 0.0
    %2962 = vmatprep.subr.mxu0 0.0
    %2963 = vmatpush2.msra.mxu0 0.0
    %2964 = vmatprep.subr.mxu0 0.0
    %2965 = vmatpush2.msra.mxu0 0.0
    %2966 = vmatprep.subr.mxu0 0.0
    %2967 = vmatpush2.msra.mxu0 0.0
    %2968 = vmatprep.subr.mxu0 0.0
    %2969 = vmatpush2.msra.mxu0 0.0
    %2970 = vmatprep.subr.mxu0 0.0
    %2971 = vmatpush2.msra.mxu0 0.0
    %2972 = vmatprep.subr.mxu0 0.0
    %2973 = vmatpush2.msra.mxu0 0.0
    %2974 = vmatprep.subr.mxu0 0.0
    %2975 = vmatpush2.msra.mxu0 0.0
    %2976 = vmatprep.subr.mxu0 0.0
    %2977 = vmatpush2.msra.mxu0 0.0
    %2978 = vmatprep.subr.mxu0 0.0
    %2979 = vmatpush2.msra.mxu0 0.0
    %2980 = vmatprep.subr.mxu0 0.0
    %2981 = vmatpush2.msra.mxu0 0.0
    %2982 = vmatprep.subr.mxu0 0.0
    %2983 = vmatpush2.msra.mxu0 0.0
    %2984 = vmatprep.mubr.f32.mxu0 0.0
    %2985 = vmatmul.mubr.f32.gmra.mxu0 %v2918
    %v2986 = vpop.f32.mrf.mxu0
    %v2987 = vadd.f32 %v2912, %v2986
    %v2988 = vpop.f32.mrf.mxu0
    %2989 = vdwg.mxu0
    %s2990 = scalar_lea.vmem %s6, 5
    %v2991 = vld [vmem:[%s2990] sm:$0x1]
    %v2993 = vlaneseq
    %v2994 = vshrl.u32 %v2993, 7
    %v2995 = vsub.s32 0, %v2994
    %v2996 = vrot.slane %v2991, %v2995
    %v2998 = vadd.f32 %v2987, %v2996
    %s2999 = scalar_lea.vmem %s7, 5
    %v3000 = vld [vmem:[%s2999] sm:$0x1]
    %v3002 = vlaneseq
    %v3003 = vshrl.u32 %v3002, 7
    %v3004 = vsub.s32 0, %v3003
    %v3005 = vrot.slane %v3000, %v3004
    %v3007 = vadd.f32 %v2998, %v3005
    %s3008 = scalar_lea.vmem %s8, 160
    %v3009 = vld [vmem:[%s3008] sm:$0xff]
    %v3010 = vld [vmem:[%s3008 + $0x8] sm:$0xff]
    %v3011 = vld [vmem:[%s3008 + $0x10] sm:$0xff]
    %v3012 = vld [vmem:[%s3008 + $0x18] sm:$0xff]
    %v3014 = vsel %vm1928, %v3007, 0
    %3016 = vmatprep.subr.mxu0 0.0
    %3017 = vmatpush1.msra.mxu0 0.0
    %3018 = vmatprep.subr.mxu0 0.0
    %3019 = vmatpush1.msra.mxu0 0.0
    %3020 = vmatprep.subr.mxu0 0.0
    %3021 = vmatpush1.msra.mxu0 0.0
    %3022 = vmatprep.subr.mxu0 0.0
    %3023 = vmatpush1.msra.mxu0 0.0
    %3024 = vmatprep.subr.mxu0 0.0
    %3025 = vmatpush1.msra.mxu0 0.0
    %3026 = vmatprep.subr.mxu0 0.0
    %3027 = vmatpush1.msra.mxu0 0.0
    %3028 = vmatprep.subr.mxu0 0.0
    %3029 = vmatpush1.msra.mxu0 0.0
    %3030 = vmatprep.subr.mxu0 0.0
    %3031 = vmatpush1.msra.mxu0 0.0
    %3032 = vmatprep.subr.mxu0 0.0
    %3033 = vmatpush1.msra.mxu0 0.0
    %3034 = vmatprep.subr.mxu0 0.0
    %3035 = vmatpush1.msra.mxu0 0.0
    %3036 = vmatprep.subr.mxu0 0.0
    %3037 = vmatpush1.msra.mxu0 0.0
    %3038 = vmatprep.subr.mxu0 0.0
    %3039 = vmatpush1.msra.mxu0 0.0
    %3040 = vmatprep.subr.mxu0 0.0
    %3041 = vmatpush1.msra.mxu0 %v3012
    %3042 = vmatprep.subr.mxu0 0.0
    %3043 = vmatpush1.msra.mxu0 %v3011
    %3044 = vmatprep.subr.mxu0 0.0
    %3045 = vmatpush1.msra.mxu0 %v3010
    %3046 = vmatprep.subr.mxu0 0.0
    %3047 = vmatpush1.msra.mxu0 %v3009
    %3048 = vmatprep.subr.mxu0 0.0
    %3049 = vmatpush2.msra.mxu0 0.0
    %3050 = vmatprep.subr.mxu0 0.0
    %3051 = vmatpush2.msra.mxu0 0.0
    %3052 = vmatprep.subr.mxu0 0.0
    %3053 = vmatpush2.msra.mxu0 0.0
    %3054 = vmatprep.subr.mxu0 0.0
    %3055 = vmatpush2.msra.mxu0 0.0
    %3056 = vmatprep.subr.mxu0 0.0
    %3057 = vmatpush2.msra.mxu0 0.0
    %3058 = vmatprep.subr.mxu0 0.0
    %3059 = vmatpush2.msra.mxu0 0.0
    %3060 = vmatprep.subr.mxu0 0.0
    %3061 = vmatpush2.msra.mxu0 0.0
    %3062 = vmatprep.subr.mxu0 0.0
    %3063 = vmatpush2.msra.mxu0 0.0
    %3064 = vmatprep.subr.mxu0 0.0
    %3065 = vmatpush2.msra.mxu0 0.0
    %3066 = vmatprep.subr.mxu0 0.0
    %3067 = vmatpush2.msra.mxu0 0.0
    %3068 = vmatprep.subr.mxu0 0.0
    %3069 = vmatpush2.msra.mxu0 0.0
    %3070 = vmatprep.subr.mxu0 0.0
    %3071 = vmatpush2.msra.mxu0 0.0
    %3072 = vmatprep.subr.mxu0 0.0
    %3073 = vmatpush2.msra.mxu0 0.0
    %3074 = vmatprep.subr.mxu0 0.0
    %3075 = vmatpush2.msra.mxu0 0.0
    %3076 = vmatprep.subr.mxu0 0.0
    %3077 = vmatpush2.msra.mxu0 0.0
    %3078 = vmatprep.subr.mxu0 0.0
    %3079 = vmatpush2.msra.mxu0 0.0
    %3080 = vmatprep.mubr.f32.mxu0 0.0
    %3081 = vmatmul.mubr.f32.gmra.mxu0 %v3014
    %v3082 = vpop.f32.mrf.mxu0
    %v3083 = vadd.f32 0.0, %v3082
    %v3084 = vpop.f32.mrf.mxu0
    %3085 = vdwg.mxu0
    %v3086 = vadd.f32 %v2833, %v3083
    %s3087 = scalar_lea.vmem [#allocation8], 96
    %v3088 = vld [vmem:[%s3087] sm:$0xff]
    %v3089 = vld [vmem:[%s3087 + $0x8] sm:$0xff]
    %s3090 = scalar_lea.vmem [#allocation10], 96
    %v3091 = vld [vmem:[%s3090] sm:$0xff]
    %v3092 = vld [vmem:[%s3090 + $0x8] sm:$0xff]
    %v3095 = vsel %vm1580, %v1559, %v1552
    %v3096 = vsel %vm164, %v3095, 0
    %3098 = vmatprep.subr.mxu0 0.0
    %3099 = vmatpush1.msra.mxu0 0.0
    %3100 = vmatprep.subr.mxu0 0.0
    %3101 = vmatpush1.msra.mxu0 0.0
    %3102 = vmatprep.subr.mxu0 0.0
    %3103 = vmatpush1.msra.mxu0 0.0
    %3104 = vmatprep.subr.mxu0 0.0
    %3105 = vmatpush1.msra.mxu0 0.0
    %3106 = vmatprep.subr.mxu0 0.0
    %3107 = vmatpush1.msra.mxu0 0.0
    %3108 = vmatprep.subr.mxu0 0.0
    %3109 = vmatpush1.msra.mxu0 0.0
    %3110 = vmatprep.subr.mxu0 0.0
    %3111 = vmatpush1.msra.mxu0 0.0
    %3112 = vmatprep.subr.mxu0 0.0
    %3113 = vmatpush1.msra.mxu0 0.0
    %3114 = vmatprep.subr.mxu0 0.0
    %3115 = vmatpush1.msra.mxu0 0.0
    %3116 = vmatprep.subr.mxu0 0.0
    %3117 = vmatpush1.msra.mxu0 0.0
    %3118 = vmatprep.subr.mxu0 0.0
    %3119 = vmatpush1.msra.mxu0 0.0
    %3120 = vmatprep.subr.mxu0 0.0
    %3121 = vmatpush1.msra.mxu0 0.0
    %3122 = vmatprep.subr.mxu0 0.0
    %3123 = vmatpush1.msra.mxu0 0.0
    %3124 = vmatprep.subr.mxu0 0.0
    %3125 = vmatpush1.msra.mxu0 0.0
    %3126 = vmatprep.subr.mxu0 0.0
    %3127 = vmatpush1.msra.mxu0 %v3092
    %3128 = vmatprep.subr.mxu0 0.0
    %3129 = vmatpush1.msra.mxu0 %v3091
    %3130 = vmatprep.subr.mxu0 0.0
    %3131 = vmatpush2.msra.mxu0 0.0
    %3132 = vmatprep.subr.mxu0 0.0
    %3133 = vmatpush2.msra.mxu0 0.0
    %3134 = vmatprep.subr.mxu0 0.0
    %3135 = vmatpush2.msra.mxu0 0.0
    %3136 = vmatprep.subr.mxu0 0.0
    %3137 = vmatpush2.msra.mxu0 0.0
    %3138 = vmatprep.subr.mxu0 0.0
    %3139 = vmatpush2.msra.mxu0 0.0
    %3140 = vmatprep.subr.mxu0 0.0
    %3141 = vmatpush2.msra.mxu0 0.0
    %3142 = vmatprep.subr.mxu0 0.0
    %3143 = vmatpush2.msra.mxu0 0.0
    %3144 = vmatprep.subr.mxu0 0.0
    %3145 = vmatpush2.msra.mxu0 0.0
    %3146 = vmatprep.subr.mxu0 0.0
    %3147 = vmatpush2.msra.mxu0 0.0
    %3148 = vmatprep.subr.mxu0 0.0
    %3149 = vmatpush2.msra.mxu0 0.0
    %3150 = vmatprep.subr.mxu0 0.0
    %3151 = vmatpush2.msra.mxu0 0.0
    %3152 = vmatprep.subr.mxu0 0.0
    %3153 = vmatpush2.msra.mxu0 0.0
    %3154 = vmatprep.subr.mxu0 0.0
    %3155 = vmatpush2.msra.mxu0 0.0
    %3156 = vmatprep.subr.mxu0 0.0
    %3157 = vmatpush2.msra.mxu0 0.0
    %3158 = vmatprep.subr.mxu0 0.0
    %3159 = vmatpush2.msra.mxu0 0.0
    %3160 = vmatprep.subr.mxu0 0.0
    %3161 = vmatpush2.msra.mxu0 0.0
    %3162 = vmatprep.mubr.f32.mxu0 0.0
    %3163 = vmatmul.mubr.f32.gmra.mxu0 %v3096
    %v3164 = vpop.f32.mrf.mxu0
    %v3165 = vadd.f32 0.0, %v3164
    %v3166 = vpop.f32.mrf.mxu0
    %3167 = vdwg.mxu0
    %v3170 = vsel %vm1580, %v930, %v921
    %v3171 = vsel %vm164, %v3170, 0
    %3173 = vmatprep.subr.mxu0 0.0
    %3174 = vmatpush1.msra.mxu0 0.0
    %3175 = vmatprep.subr.mxu0 0.0
    %3176 = vmatpush1.msra.mxu0 0.0
    %3177 = vmatprep.subr.mxu0 0.0
    %3178 = vmatpush1.msra.mxu0 0.0
    %3179 = vmatprep.subr.mxu0 0.0
    %3180 = vmatpush1.msra.mxu0 0.0
    %3181 = vmatprep.subr.mxu0 0.0
    %3182 = vmatpush1.msra.mxu0 0.0
    %3183 = vmatprep.subr.mxu0 0.0
    %3184 = vmatpush1.msra.mxu0 0.0
    %3185 = vmatprep.subr.mxu0 0.0
    %3186 = vmatpush1.msra.mxu0 0.0
    %3187 = vmatprep.subr.mxu0 0.0
    %3188 = vmatpush1.msra.mxu0 0.0
    %3189 = vmatprep.subr.mxu0 0.0
    %3190 = vmatpush1.msra.mxu0 0.0
    %3191 = vmatprep.subr.mxu0 0.0
    %3192 = vmatpush1.msra.mxu0 0.0
    %3193 = vmatprep.subr.mxu0 0.0
    %3194 = vmatpush1.msra.mxu0 0.0
    %3195 = vmatprep.subr.mxu0 0.0
    %3196 = vmatpush1.msra.mxu0 0.0
    %3197 = vmatprep.subr.mxu0 0.0
    %3198 = vmatpush1.msra.mxu0 0.0
    %3199 = vmatprep.subr.mxu0 0.0
    %3200 = vmatpush1.msra.mxu0 0.0
    %3201 = vmatprep.subr.mxu0 0.0
    %3202 = vmatpush1.msra.mxu0 %v3089
    %3203 = vmatprep.subr.mxu0 0.0
    %3204 = vmatpush1.msra.mxu0 %v3088
    %3205 = vmatprep.subr.mxu0 0.0
    %3206 = vmatpush2.msra.mxu0 0.0
    %3207 = vmatprep.subr.mxu0 0.0
    %3208 = vmatpush2.msra.mxu0 0.0
    %3209 = vmatprep.subr.mxu0 0.0
    %3210 = vmatpush2.msra.mxu0 0.0
    %3211 = vmatprep.subr.mxu0 0.0
    %3212 = vmatpush2.msra.mxu0 0.0
    %3213 = vmatprep.subr.mxu0 0.0
    %3214 = vmatpush2.msra.mxu0 0.0
    %3215 = vmatprep.subr.mxu0 0.0
    %3216 = vmatpush2.msra.mxu0 0.0
    %3217 = vmatprep.subr.mxu0 0.0
    %3218 = vmatpush2.msra.mxu0 0.0
    %3219 = vmatprep.subr.mxu0 0.0
    %3220 = vmatpush2.msra.mxu0 0.0
    %3221 = vmatprep.subr.mxu0 0.0
    %3222 = vmatpush2.msra.mxu0 0.0
    %3223 = vmatprep.subr.mxu0 0.0
    %3224 = vmatpush2.msra.mxu0 0.0
    %3225 = vmatprep.subr.mxu0 0.0
    %3226 = vmatpush2.msra.mxu0 0.0
    %3227 = vmatprep.subr.mxu0 0.0
    %3228 = vmatpush2.msra.mxu0 0.0
    %3229 = vmatprep.subr.mxu0 0.0
    %3230 = vmatpush2.msra.mxu0 0.0
    %3231 = vmatprep.subr.mxu0 0.0
    %3232 = vmatpush2.msra.mxu0 0.0
    %3233 = vmatprep.subr.mxu0 0.0
    %3234 = vmatpush2.msra.mxu0 0.0
    %3235 = vmatprep.subr.mxu0 0.0
    %3236 = vmatpush2.msra.mxu0 0.0
    %3237 = vmatprep.mubr.f32.mxu0 0.0
    %3238 = vmatmul.mubr.f32.gmra.mxu0 %v3171
    %v3239 = vpop.f32.mrf.mxu0
    %v3240 = vadd.f32 %v3165, %v3239
    %v3241 = vpop.f32.mrf.mxu0
    %3242 = vdwg.mxu0
    %s3243 = scalar_lea.vmem %s6, 6
    %v3244 = vld [vmem:[%s3243] sm:$0x1]
    %v3246 = vlaneseq
    %v3247 = vshrl.u32 %v3246, 7
    %v3248 = vsub.s32 0, %v3247
    %v3249 = vrot.slane %v3244, %v3248
    %v3251 = vadd.f32 %v3240, %v3249
    %s3252 = scalar_lea.vmem %s7, 6
    %v3253 = vld [vmem:[%s3252] sm:$0x1]
    %v3255 = vlaneseq
    %v3256 = vshrl.u32 %v3255, 7
    %v3257 = vsub.s32 0, %v3256
    %v3258 = vrot.slane %v3253, %v3257
    %v3260 = vadd.f32 %v3251, %v3258
    %s3261 = scalar_lea.vmem %s8, 192
    %v3262 = vld [vmem:[%s3261] sm:$0xff]
    %v3263 = vld [vmem:[%s3261 + $0x8] sm:$0xff]
    %v3264 = vld [vmem:[%s3261 + $0x10] sm:$0xff]
    %v3265 = vld [vmem:[%s3261 + $0x18] sm:$0xff]
    %v3267 = vsel %vm1928, %v3260, 0
    %3269 = vmatprep.subr.mxu0 0.0
    %3270 = vmatpush1.msra.mxu0 0.0
    %3271 = vmatprep.subr.mxu0 0.0
    %3272 = vmatpush1.msra.mxu0 0.0
    %3273 = vmatprep.subr.mxu0 0.0
    %3274 = vmatpush1.msra.mxu0 0.0
    %3275 = vmatprep.subr.mxu0 0.0
    %3276 = vmatpush1.msra.mxu0 0.0
    %3277 = vmatprep.subr.mxu0 0.0
    %3278 = vmatpush1.msra.mxu0 0.0
    %3279 = vmatprep.subr.mxu0 0.0
    %3280 = vmatpush1.msra.mxu0 0.0
    %3281 = vmatprep.subr.mxu0 0.0
    %3282 = vmatpush1.msra.mxu0 0.0
    %3283 = vmatprep.subr.mxu0 0.0
    %3284 = vmatpush1.msra.mxu0 0.0
    %3285 = vmatprep.subr.mxu0 0.0
    %3286 = vmatpush1.msra.mxu0 0.0
    %3287 = vmatprep.subr.mxu0 0.0
    %3288 = vmatpush1.msra.mxu0 0.0
    %3289 = vmatprep.subr.mxu0 0.0
    %3290 = vmatpush1.msra.mxu0 0.0
    %3291 = vmatprep.subr.mxu0 0.0
    %3292 = vmatpush1.msra.mxu0 0.0
    %3293 = vmatprep.subr.mxu0 0.0
    %3294 = vmatpush1.msra.mxu0 %v3265
    %3295 = vmatprep.subr.mxu0 0.0
    %3296 = vmatpush1.msra.mxu0 %v3264
    %3297 = vmatprep.subr.mxu0 0.0
    %3298 = vmatpush1.msra.mxu0 %v3263
    %3299 = vmatprep.subr.mxu0 0.0
    %3300 = vmatpush1.msra.mxu0 %v3262
    %3301 = vmatprep.subr.mxu0 0.0
    %3302 = vmatpush2.msra.mxu0 0.0
    %3303 = vmatprep.subr.mxu0 0.0
    %3304 = vmatpush2.msra.mxu0 0.0
    %3305 = vmatprep.subr.mxu0 0.0
    %3306 = vmatpush2.msra.mxu0 0.0
    %3307 = vmatprep.subr.mxu0 0.0
    %3308 = vmatpush2.msra.mxu0 0.0
    %3309 = vmatprep.subr.mxu0 0.0
    %3310 = vmatpush2.msra.mxu0 0.0
    %3311 = vmatprep.subr.mxu0 0.0
    %3312 = vmatpush2.msra.mxu0 0.0
    %3313 = vmatprep.subr.mxu0 0.0
    %3314 = vmatpush2.msra.mxu0 0.0
    %3315 = vmatprep.subr.mxu0 0.0
    %3316 = vmatpush2.msra.mxu0 0.0
    %3317 = vmatprep.subr.mxu0 0.0
    %3318 = vmatpush2.msra.mxu0 0.0
    %3319 = vmatprep.subr.mxu0 0.0
    %3320 = vmatpush2.msra.mxu0 0.0
    %3321 = vmatprep.subr.mxu0 0.0
    %3322 = vmatpush2.msra.mxu0 0.0
    %3323 = vmatprep.subr.mxu0 0.0
    %3324 = vmatpush2.msra.mxu0 0.0
    %3325 = vmatprep.subr.mxu0 0.0
    %3326 = vmatpush2.msra.mxu0 0.0
    %3327 = vmatprep.subr.mxu0 0.0
    %3328 = vmatpush2.msra.mxu0 0.0
    %3329 = vmatprep.subr.mxu0 0.0
    %3330 = vmatpush2.msra.mxu0 0.0
    %3331 = vmatprep.subr.mxu0 0.0
    %3332 = vmatpush2.msra.mxu0 0.0
    %3333 = vmatprep.mubr.f32.mxu0 0.0
    %3334 = vmatmul.mubr.f32.gmra.mxu0 %v3267
    %v3335 = vpop.f32.mrf.mxu0
    %v3336 = vadd.f32 0.0, %v3335
    %v3337 = vpop.f32.mrf.mxu0
    %3338 = vdwg.mxu0
    %v3339 = vadd.f32 %v3086, %v3336
    %s3340 = scalar_lea.vmem [#allocation8], 112
    %v3341 = vld [vmem:[%s3340] sm:$0xff]
    %v3342 = vld [vmem:[%s3340 + $0x8] sm:$0xff]
    %s3343 = scalar_lea.vmem [#allocation10], 112
    %v3344 = vld [vmem:[%s3343] sm:$0xff]
    %v3345 = vld [vmem:[%s3343 + $0x8] sm:$0xff]
    %v3348 = vsel %vm1580, %v1573, %v1566
    %v3349 = vsel %vm164, %v3348, 0
    %3351 = vmatprep.subr.mxu0 0.0
    %3352 = vmatpush1.msra.mxu0 0.0
    %3353 = vmatprep.subr.mxu0 0.0
    %3354 = vmatpush1.msra.mxu0 0.0
    %3355 = vmatprep.subr.mxu0 0.0
    %3356 = vmatpush1.msra.mxu0 0.0
    %3357 = vmatprep.subr.mxu0 0.0
    %3358 = vmatpush1.msra.mxu0 0.0
    %3359 = vmatprep.subr.mxu0 0.0
    %3360 = vmatpush1.msra.mxu0 0.0
    %3361 = vmatprep.subr.mxu0 0.0
    %3362 = vmatpush1.msra.mxu0 0.0
    %3363 = vmatprep.subr.mxu0 0.0
    %3364 = vmatpush1.msra.mxu0 0.0
    %3365 = vmatprep.subr.mxu0 0.0
    %3366 = vmatpush1.msra.mxu0 0.0
    %3367 = vmatprep.subr.mxu0 0.0
    %3368 = vmatpush1.msra.mxu0 0.0
    %3369 = vmatprep.subr.mxu0 0.0
    %3370 = vmatpush1.msra.mxu0 0.0
    %3371 = vmatprep.subr.mxu0 0.0
    %3372 = vmatpush1.msra.mxu0 0.0
    %3373 = vmatprep.subr.mxu0 0.0
    %3374 = vmatpush1.msra.mxu0 0.0
    %3375 = vmatprep.subr.mxu0 0.0
    %3376 = vmatpush1.msra.mxu0 0.0
    %3377 = vmatprep.subr.mxu0 0.0
    %3378 = vmatpush1.msra.mxu0 0.0
    %3379 = vmatprep.subr.mxu0 0.0
    %3380 = vmatpush1.msra.mxu0 %v3345
    %3381 = vmatprep.subr.mxu0 0.0
    %3382 = vmatpush1.msra.mxu0 %v3344
    %3383 = vmatprep.subr.mxu0 0.0
    %3384 = vmatpush2.msra.mxu0 0.0
    %3385 = vmatprep.subr.mxu0 0.0
    %3386 = vmatpush2.msra.mxu0 0.0
    %3387 = vmatprep.subr.mxu0 0.0
    %3388 = vmatpush2.msra.mxu0 0.0
    %3389 = vmatprep.subr.mxu0 0.0
    %3390 = vmatpush2.msra.mxu0 0.0
    %3391 = vmatprep.subr.mxu0 0.0
    %3392 = vmatpush2.msra.mxu0 0.0
    %3393 = vmatprep.subr.mxu0 0.0
    %3394 = vmatpush2.msra.mxu0 0.0
    %3395 = vmatprep.subr.mxu0 0.0
    %3396 = vmatpush2.msra.mxu0 0.0
    %3397 = vmatprep.subr.mxu0 0.0
    %3398 = vmatpush2.msra.mxu0 0.0
    %3399 = vmatprep.subr.mxu0 0.0
    %3400 = vmatpush2.msra.mxu0 0.0
    %3401 = vmatprep.subr.mxu0 0.0
    %3402 = vmatpush2.msra.mxu0 0.0
    %3403 = vmatprep.subr.mxu0 0.0
    %3404 = vmatpush2.msra.mxu0 0.0
    %3405 = vmatprep.subr.mxu0 0.0
    %3406 = vmatpush2.msra.mxu0 0.0
    %3407 = vmatprep.subr.mxu0 0.0
    %3408 = vmatpush2.msra.mxu0 0.0
    %3409 = vmatprep.subr.mxu0 0.0
    %3410 = vmatpush2.msra.mxu0 0.0
    %3411 = vmatprep.subr.mxu0 0.0
    %3412 = vmatpush2.msra.mxu0 0.0
    %3413 = vmatprep.subr.mxu0 0.0
    %3414 = vmatpush2.msra.mxu0 0.0
    %3415 = vmatprep.mubr.f32.mxu0 0.0
    %3416 = vmatmul.mubr.f32.gmra.mxu0 %v3349
    %v3417 = vpop.f32.mrf.mxu0
    %v3418 = vadd.f32 0.0, %v3417
    %v3419 = vpop.f32.mrf.mxu0
    %3420 = vdwg.mxu0
    %v3423 = vsel %vm1580, %v948, %v939
    %v3424 = vsel %vm164, %v3423, 0
    %3426 = vmatprep.subr.mxu0 0.0
    %3427 = vmatpush1.msra.mxu0 0.0
    %3428 = vmatprep.subr.mxu0 0.0
    %3429 = vmatpush1.msra.mxu0 0.0
    %3430 = vmatprep.subr.mxu0 0.0
    %3431 = vmatpush1.msra.mxu0 0.0
    %3432 = vmatprep.subr.mxu0 0.0
    %3433 = vmatpush1.msra.mxu0 0.0
    %3434 = vmatprep.subr.mxu0 0.0
    %3435 = vmatpush1.msra.mxu0 0.0
    %3436 = vmatprep.subr.mxu0 0.0
    %3437 = vmatpush1.msra.mxu0 0.0
    %3438 = vmatprep.subr.mxu0 0.0
    %3439 = vmatpush1.msra.mxu0 0.0
    %3440 = vmatprep.subr.mxu0 0.0
    %3441 = vmatpush1.msra.mxu0 0.0
    %3442 = vmatprep.subr.mxu0 0.0
    %3443 = vmatpush1.msra.mxu0 0.0
    %3444 = vmatprep.subr.mxu0 0.0
    %3445 = vmatpush1.msra.mxu0 0.0
    %3446 = vmatprep.subr.mxu0 0.0
    %3447 = vmatpush1.msra.mxu0 0.0
    %3448 = vmatprep.subr.mxu0 0.0
    %3449 = vmatpush1.msra.mxu0 0.0
    %3450 = vmatprep.subr.mxu0 0.0
    %3451 = vmatpush1.msra.mxu0 0.0
    %3452 = vmatprep.subr.mxu0 0.0
    %3453 = vmatpush1.msra.mxu0 0.0
    %3454 = vmatprep.subr.mxu0 0.0
    %3455 = vmatpush1.msra.mxu0 %v3342
    %3456 = vmatprep.subr.mxu0 0.0
    %3457 = vmatpush1.msra.mxu0 %v3341
    %3458 = vmatprep.subr.mxu0 0.0
    %3459 = vmatpush2.msra.mxu0 0.0
    %3460 = vmatprep.subr.mxu0 0.0
    %3461 = vmatpush2.msra.mxu0 0.0
    %3462 = vmatprep.subr.mxu0 0.0
    %3463 = vmatpush2.msra.mxu0 0.0
    %3464 = vmatprep.subr.mxu0 0.0
    %3465 = vmatpush2.msra.mxu0 0.0
    %3466 = vmatprep.subr.mxu0 0.0
    %3467 = vmatpush2.msra.mxu0 0.0
    %3468 = vmatprep.subr.mxu0 0.0
    %3469 = vmatpush2.msra.mxu0 0.0
    %3470 = vmatprep.subr.mxu0 0.0
    %3471 = vmatpush2.msra.mxu0 0.0
    %3472 = vmatprep.subr.mxu0 0.0
    %3473 = vmatpush2.msra.mxu0 0.0
    %3474 = vmatprep.subr.mxu0 0.0
    %3475 = vmatpush2.msra.mxu0 0.0
    %3476 = vmatprep.subr.mxu0 0.0
    %3477 = vmatpush2.msra.mxu0 0.0
    %3478 = vmatprep.subr.mxu0 0.0
    %3479 = vmatpush2.msra.mxu0 0.0
    %3480 = vmatprep.subr.mxu0 0.0
    %3481 = vmatpush2.msra.mxu0 0.0
    %3482 = vmatprep.subr.mxu0 0.0
    %3483 = vmatpush2.msra.mxu0 0.0
    %3484 = vmatprep.subr.mxu0 0.0
    %3485 = vmatpush2.msra.mxu0 0.0
    %3486 = vmatprep.subr.mxu0 0.0
    %3487 = vmatpush2.msra.mxu0 0.0
    %3488 = vmatprep.subr.mxu0 0.0
    %3489 = vmatpush2.msra.mxu0 0.0
    %3490 = vmatprep.mubr.f32.mxu0 0.0
    %3491 = vmatmul.mubr.f32.gmra.mxu0 %v3424
    %v3492 = vpop.f32.mrf.mxu0
    %v3493 = vadd.f32 %v3418, %v3492
    %v3494 = vpop.f32.mrf.mxu0
    %3495 = vdwg.mxu0
    %s3496 = scalar_lea.vmem %s6, 7
    %v3497 = vld [vmem:[%s3496] sm:$0x1]
    %v3499 = vlaneseq
    %v3500 = vshrl.u32 %v3499, 7
    %v3501 = vsub.s32 0, %v3500
    %v3502 = vrot.slane %v3497, %v3501
    %v3504 = vadd.f32 %v3493, %v3502
    %s3505 = scalar_lea.vmem %s7, 7
    %v3506 = vld [vmem:[%s3505] sm:$0x1]
    %v3508 = vlaneseq
    %v3509 = vshrl.u32 %v3508, 7
    %v3510 = vsub.s32 0, %v3509
    %v3511 = vrot.slane %v3506, %v3510
    %v3513 = vadd.f32 %v3504, %v3511
    %s3514 = scalar_lea.vmem %s8, 224
    %v3515 = vld [vmem:[%s3514] sm:$0xff]
    %v3516 = vld [vmem:[%s3514 + $0x8] sm:$0xff]
    %v3517 = vld [vmem:[%s3514 + $0x10] sm:$0xff]
    %v3518 = vld [vmem:[%s3514 + $0x18] sm:$0xff]
    %v3520 = vsel %vm1928, %v3513, 0
    %3522 = vmatprep.subr.mxu0 0.0
    %3523 = vmatpush1.msra.mxu0 0.0
    %3524 = vmatprep.subr.mxu0 0.0
    %3525 = vmatpush1.msra.mxu0 0.0
    %3526 = vmatprep.subr.mxu0 0.0
    %3527 = vmatpush1.msra.mxu0 0.0
    %3528 = vmatprep.subr.mxu0 0.0
    %3529 = vmatpush1.msra.mxu0 0.0
    %3530 = vmatprep.subr.mxu0 0.0
    %3531 = vmatpush1.msra.mxu0 0.0
    %3532 = vmatprep.subr.mxu0 0.0
    %3533 = vmatpush1.msra.mxu0 0.0
    %3534 = vmatprep.subr.mxu0 0.0
    %3535 = vmatpush1.msra.mxu0 0.0
    %3536 = vmatprep.subr.mxu0 0.0
    %3537 = vmatpush1.msra.mxu0 0.0
    %3538 = vmatprep.subr.mxu0 0.0
    %3539 = vmatpush1.msra.mxu0 0.0
    %3540 = vmatprep.subr.mxu0 0.0
    %3541 = vmatpush1.msra.mxu0 0.0
    %3542 = vmatprep.subr.mxu0 0.0
    %3543 = vmatpush1.msra.mxu0 0.0
    %3544 = vmatprep.subr.mxu0 0.0
    %3545 = vmatpush1.msra.mxu0 0.0
    %3546 = vmatprep.subr.mxu0 0.0
    %3547 = vmatpush1.msra.mxu0 %v3518
    %3548 = vmatprep.subr.mxu0 0.0
    %3549 = vmatpush1.msra.mxu0 %v3517
    %3550 = vmatprep.subr.mxu0 0.0
    %3551 = vmatpush1.msra.mxu0 %v3516
    %3552 = vmatprep.subr.mxu0 0.0
    %3553 = vmatpush1.msra.mxu0 %v3515
    %3554 = vmatprep.subr.mxu0 0.0
    %3555 = vmatpush2.msra.mxu0 0.0
    %3556 = vmatprep.subr.mxu0 0.0
    %3557 = vmatpush2.msra.mxu0 0.0
    %3558 = vmatprep.subr.mxu0 0.0
    %3559 = vmatpush2.msra.mxu0 0.0
    %3560 = vmatprep.subr.mxu0 0.0
    %3561 = vmatpush2.msra.mxu0 0.0
    %3562 = vmatprep.subr.mxu0 0.0
    %3563 = vmatpush2.msra.mxu0 0.0
    %3564 = vmatprep.subr.mxu0 0.0
    %3565 = vmatpush2.msra.mxu0 0.0
    %3566 = vmatprep.subr.mxu0 0.0
    %3567 = vmatpush2.msra.mxu0 0.0
    %3568 = vmatprep.subr.mxu0 0.0
    %3569 = vmatpush2.msra.mxu0 0.0
    %3570 = vmatprep.subr.mxu0 0.0
    %3571 = vmatpush2.msra.mxu0 0.0
    %3572 = vmatprep.subr.mxu0 0.0
    %3573 = vmatpush2.msra.mxu0 0.0
    %3574 = vmatprep.subr.mxu0 0.0
    %3575 = vmatpush2.msra.mxu0 0.0
    %3576 = vmatprep.subr.mxu0 0.0
    %3577 = vmatpush2.msra.mxu0 0.0
    %3578 = vmatprep.subr.mxu0 0.0
    %3579 = vmatpush2.msra.mxu0 0.0
    %3580 = vmatprep.subr.mxu0 0.0
    %3581 = vmatpush2.msra.mxu0 0.0
    %3582 = vmatprep.subr.mxu0 0.0
    %3583 = vmatpush2.msra.mxu0 0.0
    %3584 = vmatprep.subr.mxu0 0.0
    %3585 = vmatpush2.msra.mxu0 0.0
    %3586 = vmatprep.mubr.f32.mxu0 0.0
    %3587 = vmatmul.mubr.f32.gmra.mxu0 %v3520
    %v3588 = vpop.f32.mrf.mxu0
    %v3589 = vadd.f32 0.0, %v3588
    %v3590 = vpop.f32.mrf.mxu0
    %3591 = vdwg.mxu0
    %v3592 = vadd.f32 %v3339, %v3589
    %v3593 = vld [vmem:[#allocation11] sm:$0x1]
    %v3595 = vlaneseq
    %v3596 = vshrl.u32 %v3595, 7
    %v3597 = vsub.s32 0, %v3596
    %v3598 = vrot.slane %v3593, %v3597
    %v3600 = vadd.f32 %v3592, %v3598
    %v3601 = vsub.f32 0.0, %v3600
    %v3602 = vmul.f32 %v3601, 1.442695
    %v3603 = vpow.pop %v3602
    %v3604 = vadd.f32 %v3603, 1.0
    %v3605 = vrcp.pop %v3604
    %vm3606 = vcmask 9216
    %3607 = vst.msk [vmem:[#allocation13] sm:$0x3] %vm3606, %v3605
    // Predicated region
    $region66: #{hetero_graph_classifier.1} parent=1 // pred_check
      _
    $region67: #{hetero_graph_classifier.1} parent=1 // pred_check_branch
      %3609 = sbr.rel (0) target = $region69
    $region68: #{hetero_graph_classifier.1} parent=1 // pred_region
      %s3611 = ssub.s32 32, 32
      %3612 = vsyncadd [#allocation4], %s3611
      %s3614 = sshll.u32 [#allocation13], 4
      %s3615 = int_to_ptr.vmem [resolvable:$true] %s3614
      %3617 = dma.vmem_to_hbm [thread:$0]  %s3615, 32, %s10, [#allocation4]
    $region69: #{hetero_graph_classifier.1} parent=1 // pred_fallthru
      _
    // Predicated region
    $region70: #{hetero_graph_classifier.1} parent=1 // pred_check
      _
    $region71: #{hetero_graph_classifier.1} parent=1 // pred_check_branch
      %3619 = sbr.rel (0) target = $region73
    $region72: #{hetero_graph_classifier.1} parent=1 // pred_region
      %3620 = dma.done [#allocation4], 32
    $region73: #{hetero_graph_classifier.1} parent=1 // pred_fallthru
      _
    %3621 = vsyncpa [#allocation3], 1
    %3622 = vsyncpa [#allocation6], 1
    %3623 = vsyncpa [#allocation9], 1
    %3624 = vsyncpa [#allocation12], 1
    %3625 = vsyncpa [#allocation4], 1

</llo_original>
